<compile_context>
chip_gen: v6e
topology: v6e:2x2x1
jax: 0.10.0
libtpu: 0.0.40
codegen_flags: <defaults>
</compile_context>

<pallas_src>
import math

import jax
import jax.numpy as jnp
from jax.experimental import pallas as pl
from jax.experimental.pallas import tpu as pltpu


def make_bottle2neck_kernel(*, N, L, inplanes, planes, width, scale,
                            kernel_size, dilation, out_lanes, eps=1e-5):
    nums = scale - 1
    NL = N * L
    half = kernel_size // 2

    def kernel(x_ref, w1_ref, b1_ref, g1_ref, be1_ref,
               wc_ref, bc_ref, gc_ref, bec_ref,
               w3_ref, b3_ref, g3_ref, be3_ref,
               wse1_ref, bse1_ref, wse2_ref, bse2_ref, o_ref):
        x = x_ref[...]                                    # (N*L, inplanes) f32

        def bn_train(v, gamma, beta):
            # BatchNorm1d training-mode forward: batch stats per channel.
            mean = jnp.mean(v, axis=0, keepdims=True)
            var = jnp.mean((v - mean) ** 2, axis=0, keepdims=True)
            return (v - mean) * jax.lax.rsqrt(var + eps) * gamma + beta

        def shift_rows(v, off):
            # result[r] = v[r + off], zero where r + off falls outside
            # [0, NL).  Cross-sequence leakage (r + off lands in another
            # sequence) is removed by the caller via the boundary mask.
            c = v.shape[1]
            if off == 0:
                return v
            if abs(off) >= NL:
                return jnp.zeros_like(v)
            if off > 0:
                return jnp.concatenate(
                    [v[off:, :], jnp.zeros((off, c), v.dtype)], axis=0)
            return jnp.concatenate(
                [jnp.zeros((-off, c), v.dtype), v[:NL + off, :]], axis=0)

        # Per-offset validity masks (Conv1d zero padding within a sequence).
        t_idx = jax.lax.broadcasted_iota(jnp.int32, (NL, 1), 0) % L
        masks = {}
        for j in range(kernel_size):
            off = (j - half) * dilation
            if off != 0 and off not in masks:
                valid = jnp.logical_and(t_idx + off >= 0, t_idx + off < L)
                masks[off] = valid.astype(jnp.float32)

        # conv1 (1x1) -> relu -> bn1 as one lane-dense matmul + one BN pass.
        h = jnp.dot(x, w1_ref[...], preferred_element_type=jnp.float32)
        h = jnp.maximum(h + b1_ref[...], 0.0)
        h = bn_train(h, g1_ref[...], be1_ref[...])        # (NL, width*scale)
        chunks = [h[:, i * width:(i + 1) * width] for i in range(scale)]

        # Res2Net hierarchical dilated convs: gather the k shifted taps,
        # concat along lanes, one matmul per stage against (k*width, width).
        outs = []
        sp = None
        for i in range(nums):
            sp = chunks[i] if i == 0 else sp + chunks[i]
            taps = []
            for j in range(kernel_size):
                off = (j - half) * dilation
                if off == 0:
                    taps.append(sp)
                else:
                    taps.append(shift_rows(sp, off) * masks[off])
            cat = jnp.concatenate(taps, axis=1)           # (NL, k*width)
            conv = jnp.dot(cat, wc_ref[i],
                           preferred_element_type=jnp.float32)
            conv = jnp.maximum(conv + bc_ref[pl.ds(i, 1), :], 0.0)
            sp = bn_train(conv, gc_ref[pl.ds(i, 1), :],
                          bec_ref[pl.ds(i, 1), :])
            outs.append(sp)
        outs.append(chunks[nums])        # last chunk passes through unchanged

        # conv3 (1x1) -> relu -> bn3: single matmul over the lane concat.
        out_cat = jnp.concatenate(outs, axis=1)           # (NL, width*scale)
        acc = jnp.dot(out_cat, w3_ref[...],
                      preferred_element_type=jnp.float32)
        acc = jnp.maximum(acc + b3_ref[...], 0.0)
        out3 = bn_train(acc, g3_ref[...], be3_ref[...])   # (NL, planes)

        # SE module: per-sequence temporal mean -> 1x1 -> relu -> 1x1 ->
        # sigmoid -> channel-wise rescale.
        pooled = jnp.concatenate(
            [jnp.mean(out3[n * L:(n + 1) * L, :], axis=0, keepdims=True)
             for n in range(N)], axis=0)                  # (N, planes)
        z = jnp.dot(pooled, wse1_ref[...],
                    preferred_element_type=jnp.float32)
        z = jnp.maximum(z + bse1_ref[...], 0.0)
        s = jnp.dot(z, wse2_ref[...],
                    preferred_element_type=jnp.float32)
        s = jax.nn.sigmoid(s + bse2_ref[...])             # (N, planes)
        s_rows = jnp.concatenate(
            [jnp.broadcast_to(s[n:n + 1, :], (L, planes)) for n in range(N)],
            axis=0)                                       # (NL, planes)

        # SE rescale + residual connection (requires inplanes == planes).
        out = out3 * s_rows + x

        # Lane-dense store: pad channels up to a multiple of 128 lanes so the
        # writeback is an unmasked full-lane vst; wrapper slices the pad off.
        if out_lanes > planes:
            out = jnp.concatenate(
                [out, jnp.zeros((NL, out_lanes - planes), jnp.float32)],
                axis=1)
        o_ref[...] = out.astype(o_ref.dtype)

    return kernel


def init_params(key, *, inplanes, planes, width, scale, kernel_size,
                se_bottleneck):
    nums = scale - 1
    ks = jax.random.split(key, 16)

    def nrm(k, shape, s=0.1):
        return s * jax.random.normal(k, shape, jnp.float32)

    return dict(
        # conv1: 1x1, channels-last, fused over all scale chunks
        w1=nrm(ks[0], (inplanes, width * scale)),
        b1=nrm(ks[1], (1, width * scale)),
        g1=1.0 + nrm(ks[2], (1, width * scale)),      # bn1 gamma
        be1=nrm(ks[3], (1, width * scale)),           # bn1 beta
        # dilated convs: (nums, kernel_size, Cin=width, Cout=width)
        wc=nrm(ks[4], (nums, kernel_size, width, width)),
        bc=nrm(ks[5], (nums, width)),
        gc=1.0 + nrm(ks[6], (nums, width)),
        bec=nrm(ks[7], (nums, width)),
        # conv3: 1x1, fused (width*scale, planes)
        w3=nrm(ks[8], (width * scale, planes)),
        b3=nrm(ks[9], (1, planes)),
        g3=1.0 + nrm(ks[10], (1, planes)),
        be3=nrm(ks[11], (1, planes)),
        # SE module
        wse1=nrm(ks[12], (planes, se_bottleneck)),
        bse1=nrm(ks[13], (1, se_bottleneck)),
        wse2=nrm(ks[14], (se_bottleneck, planes)),
        bse2=nrm(ks[15], (1, planes)),
    )


def bottle2neck_forward(x_ncl, params, *, planes, width, scale, kernel_size,
                        dilation, se_bottleneck):
    N, inplanes, L = x_ncl.shape
    assert inplanes == planes, "residual add requires inplanes == planes"
    NL = N * L

    # NCL -> (N*L, C) rows, channels-last.
    x_rows = jnp.transpose(x_ncl, (0, 2, 1)).reshape(NL, inplanes)
    x_rows = x_rows.astype(jnp.float32)

    # Output channel count padded to a multiple of 128 lanes (lane-dense vst).
    out_lanes = max(128, ((planes + 127) // 128) * 128)

    # Flatten per-tap conv weights to (nums, k*width, width) matmul slabs.
    wc_flat = params["wc"].reshape(scale - 1, kernel_size * width, width)

    kernel = make_bottle2neck_kernel(
        N=N, L=L, inplanes=inplanes, planes=planes, width=width, scale=scale,
        kernel_size=kernel_size, dilation=dilation, out_lanes=out_lanes)

    args = (x_rows,
            params["w1"], params["b1"], params["g1"], params["be1"],
            wc_flat, params["bc"], params["gc"], params["bec"],
            params["w3"], params["b3"], params["g3"], params["be3"],
            params["wse1"], params["bse1"], params["wse2"], params["bse2"])

    vmem_spec = pl.BlockSpec(memory_space=pltpu.MemorySpace.VMEM)
    out_padded = pl.pallas_call(
        kernel,
        out_shape=jax.ShapeDtypeStruct((NL, out_lanes), jnp.float32),
        in_specs=[vmem_spec] * len(args),
        out_specs=vmem_spec,
        compiler_params=pltpu.CompilerParams(
            vmem_limit_bytes=32 * 1024 * 1024),
    )(*args)

    # (N*L, out_lanes) -> slice channel pad -> NCL
    out_rows = out_padded[:, :planes]
    return out_rows.reshape(N, L, planes).transpose(0, 2, 1)


def bottle2neck_reference(x_ncl, params, *, planes, width, scale,
                          kernel_size, dilation, eps=1e-5):
    """Pure-JAX reference (mirrors the PyTorch module, training-mode BN)."""
    N, C, L = x_ncl.shape
    hp = jax.lax.Precision.HIGHEST
    x = jnp.transpose(x_ncl, (0, 2, 1)).astype(jnp.float32)   # (N, L, C)

    def bn(v, g, b):
        m = jnp.mean(v, axis=(0, 1), keepdims=True)
        var = jnp.mean((v - m) ** 2, axis=(0, 1), keepdims=True)
        return (v - m) * jax.lax.rsqrt(var + eps) * g + b

    h = jnp.einsum("nlc,co->nlo", x, params["w1"], precision=hp) + params["b1"]
    h = jnp.maximum(h, 0.0)
    h = bn(h, params["g1"], params["be1"])
    chunks = [h[..., i * width:(i + 1) * width] for i in range(scale)]

    half = kernel_size // 2
    pad = half * dilation
    outs = []
    sp = None
    for i in range(scale - 1):
        sp = chunks[i] if i == 0 else sp + chunks[i]
        spp = jnp.pad(sp, ((0, 0), (pad, pad), (0, 0)))
        conv = sum(
            jnp.einsum("nlc,co->nlo",
                       spp[:, j * dilation:j * dilation + L, :],
                       params["wc"][i, j], precision=hp)
            for j in range(kernel_size)) + params["bc"][i]
        conv = jnp.maximum(conv, 0.0)
        sp = bn(conv, params["gc"][i], params["bec"][i])
        outs.append(sp)
    outs.append(chunks[-1])

    cat = jnp.concatenate(outs, axis=-1)
    o3 = jnp.einsum("nlc,co->nlo", cat, params["w3"], precision=hp) \
        + params["b3"]
    o3 = jnp.maximum(o3, 0.0)
    o3 = bn(o3, params["g3"], params["be3"])

    pooled = jnp.mean(o3, axis=1)                               # (N, planes)
    z = jnp.maximum(jnp.dot(pooled, params["wse1"], precision=hp)
                    + params["bse1"], 0.0)
    s = jax.nn.sigmoid(jnp.dot(z, params["wse2"], precision=hp)
                       + params["bse2"])
    out = o3 * s[:, None, :] + x
    return jnp.transpose(out, (0, 2, 1))                        # (N, planes, L)


if __name__ == "__main__":
    # Small shapes consistent with Bottle2neck(inplanes=32, planes=32,
    # kernel_size=3, dilation=2, scale=8).
    N, L = 2, 16
    inplanes = planes = 32
    scale = 8
    width = int(math.floor(planes / scale))        # 4
    kernel_size, dilation = 3, 2
    se_bottleneck = 128                            # SEModule default

    key = jax.random.PRNGKey(0)
    kx, kp = jax.random.split(key)
    x = jax.random.normal(kx, (N, inplanes, L), jnp.float32)   # PyTorch NCL

    params = init_params(kp, inplanes=inplanes, planes=planes, width=width,
                         scale=scale, kernel_size=kernel_size,
                         se_bottleneck=se_bottleneck)

    out = bottle2neck_forward(x, params, planes=planes, width=width,
                              scale=scale, kernel_size=kernel_size,
                              dilation=dilation, se_bottleneck=se_bottleneck)
    out = jax.block_until_ready(out)

    assert out.shape == (N, planes, L), out.shape
    assert bool(jnp.all(jnp.isfinite(out)))

    # Pure-JAX reference check (loose tolerance: MXU f32 matmul vs HIGHEST
    # precision einsum differ slightly; structural errors would be O(1)).
    ref = bottle2neck_reference(x, params, planes=planes, width=width,
                                scale=scale, kernel_size=kernel_size,
                                dilation=dilation)
    ref = jax.block_until_ready(ref)
    assert jnp.allclose(out, ref, atol=2e-2, rtol=2e-2), (
        float(jnp.max(jnp.abs(out - ref))))

    print("KERNEL_OK")
</pallas_src>

<mosaic_0001>
module attributes {stable_mosaic.version = 11 : i64} {
  func.func @kernel(%arg0: memref<32x32xf32, #tpu.memory_space<vmem>>, %arg1: memref<32x32xf32, #tpu.memory_space<vmem>>, %arg2: memref<1x32xf32, #tpu.memory_space<vmem>>, %arg3: memref<1x32xf32, #tpu.memory_space<vmem>>, %arg4: memref<1x32xf32, #tpu.memory_space<vmem>>, %arg5: memref<7x12x4xf32, #tpu.memory_space<vmem>>, %arg6: memref<7x4xf32, #tpu.memory_space<vmem>>, %arg7: memref<7x4xf32, #tpu.memory_space<vmem>>, %arg8: memref<7x4xf32, #tpu.memory_space<vmem>>, %arg9: memref<32x32xf32, #tpu.memory_space<vmem>>, %arg10: memref<1x32xf32, #tpu.memory_space<vmem>>, %arg11: memref<1x32xf32, #tpu.memory_space<vmem>>, %arg12: memref<1x32xf32, #tpu.memory_space<vmem>>, %arg13: memref<32x128xf32, #tpu.memory_space<vmem>>, %arg14: memref<1x128xf32, #tpu.memory_space<vmem>>, %arg15: memref<128x32xf32, #tpu.memory_space<vmem>>, %arg16: memref<1x32xf32, #tpu.memory_space<vmem>>, %arg17: memref<32x128xf32, #tpu.memory_space<vmem>>) attributes {dimension_semantics = [], scalar_prefetch = 0 : i64, scratch_operands = 0 : i64, tpu.core_type = #tpu.core_type<tc>} {
    %c0 = arith.constant 0 : index
    %c0_0 = arith.constant 0 : index
    %0 = vector.load %arg0[%c0, %c0_0] : memref<32x32xf32, #tpu.memory_space<vmem>>, vector<32x32xf32>
    %1 = tpu.iota {dimensions = array<i32: 0>} : vector<32x1xi32>
    %c16_i32 = arith.constant 16 : i32
    %c0_i32 = arith.constant 0 : i32
    %2 = arith.cmpi eq, %c16_i32, %c0_i32 : i32
    %c1_i32 = arith.constant 1 : i32
    %3 = arith.select %2, %c1_i32, %c16_i32 : i32
    %4 = vector.broadcast %3 : i32 to vector<32x1xi32>
    %5 = arith.remsi %1, %4 : vector<32x1xi32>
    %c0_i32_1 = arith.constant 0 : i32
    %6 = vector.broadcast %c0_i32_1 : i32 to vector<32x1xi32>
    %7 = arith.cmpi ne, %5, %6 : vector<32x1xi32>
    %c0_i32_2 = arith.constant 0 : i32
    %8 = vector.broadcast %c0_i32_2 : i32 to vector<32x1xi32>
    %9 = arith.cmpi slt, %5, %8 : vector<32x1xi32>
    %c0_i32_3 = arith.constant 0 : i32
    %10 = arith.cmpi slt, %3, %c0_i32_3 : i32
    %11 = vector.broadcast %10 : i1 to vector<32x1xi1>
    %12 = vector.broadcast %11 : vector<32x1xi1> to vector<32x1xi1>
    %13 = arith.xori %9, %12 : vector<32x1xi1>
    %14 = arith.andi %13, %7 : vector<32x1xi1>
    %15 = vector.broadcast %3 : i32 to vector<32x1xi32>
    %16 = arith.addi %5, %15 : vector<32x1xi32>
    %17 = arith.select %14, %16, %5 : vector<32x1xi1>, vector<32x1xi32>
    %c-2_i32 = arith.constant -2 : i32
    %18 = vector.broadcast %c-2_i32 : i32 to vector<32x1xi32>
    %19 = arith.addi %17, %18 : vector<32x1xi32>
    %c0_i32_4 = arith.constant 0 : i32
    %20 = vector.broadcast %c0_i32_4 : i32 to vector<32x1xi32>
    %21 = arith.cmpi sge, %19, %20 : vector<32x1xi32>
    %c-2_i32_5 = arith.constant -2 : i32
    %22 = vector.broadcast %c-2_i32_5 : i32 to vector<32x1xi32>
    %23 = arith.addi %17, %22 : vector<32x1xi32>
    %c16_i32_6 = arith.constant 16 : i32
    %24 = vector.broadcast %c16_i32_6 : i32 to vector<32x1xi32>
    %25 = arith.cmpi slt, %23, %24 : vector<32x1xi32>
    %26 = arith.andi %21, %25 : vector<32x1xi1>
    %27 = arith.extui %26 : vector<32x1xi1> to vector<32x1xi32>
    %28 = arith.sitofp %27 : vector<32x1xi32> to vector<32x1xf32>
    %c2_i32 = arith.constant 2 : i32
    %29 = vector.broadcast %c2_i32 : i32 to vector<32x1xi32>
    %30 = arith.addi %17, %29 : vector<32x1xi32>
    %c0_i32_7 = arith.constant 0 : i32
    %31 = vector.broadcast %c0_i32_7 : i32 to vector<32x1xi32>
    %32 = arith.cmpi sge, %30, %31 : vector<32x1xi32>
    %c2_i32_8 = arith.constant 2 : i32
    %33 = vector.broadcast %c2_i32_8 : i32 to vector<32x1xi32>
    %34 = arith.addi %17, %33 : vector<32x1xi32>
    %c16_i32_9 = arith.constant 16 : i32
    %35 = vector.broadcast %c16_i32_9 : i32 to vector<32x1xi32>
    %36 = arith.cmpi slt, %34, %35 : vector<32x1xi32>
    %37 = arith.andi %32, %36 : vector<32x1xi1>
    %38 = arith.extui %37 : vector<32x1xi1> to vector<32x1xi32>
    %39 = arith.sitofp %38 : vector<32x1xi32> to vector<32x1xf32>
    %c0_10 = arith.constant 0 : index
    %c0_11 = arith.constant 0 : index
    %40 = vector.load %arg1[%c0_10, %c0_11] : memref<32x32xf32, #tpu.memory_space<vmem>>, vector<32x32xf32>
    %cst = arith.constant dense<0.000000e+00> : vector<32x32xf32>
    %41 = tpu.matmul %0, %40, %cst {dimension_numbers = #tpu.dot_dimension_numbers<[1], [0], [0], [1], [0, 0, 1, 1], [], []>} : vector<32x32xf32>, vector<32x32xf32>, vector<32x32xf32> -> vector<32x32xf32>
    %c0_12 = arith.constant 0 : index
    %c0_13 = arith.constant 0 : index
    %42 = vector.load %arg2[%c0_12, %c0_13] : memref<1x32xf32, #tpu.memory_space<vmem>>, vector<1x32xf32>
    %43 = vector.broadcast %42 : vector<1x32xf32> to vector<32x32xf32>
    %44 = arith.addf %41, %43 : vector<32x32xf32>
    %cst_14 = arith.constant 0.000000e+00 : f32
    %45 = vector.broadcast %cst_14 : f32 to vector<32x32xf32>
    %46 = arith.maximumf %44, %45 : vector<32x32xf32>
    %c0_15 = arith.constant 0 : index
    %c0_16 = arith.constant 0 : index
    %47 = vector.load %arg3[%c0_15, %c0_16] : memref<1x32xf32, #tpu.memory_space<vmem>>, vector<1x32xf32>
    %c0_17 = arith.constant 0 : index
    %c0_18 = arith.constant 0 : index
    %48 = vector.load %arg4[%c0_17, %c0_18] : memref<1x32xf32, #tpu.memory_space<vmem>>, vector<1x32xf32>
    %cst_19 = arith.constant dense<0.000000e+00> : vector<32xf32>
    %49 = vector.multi_reduction <add>, %46, %cst_19 [0] : vector<32x32xf32> to vector<32xf32>
    %50 = vector.shape_cast %49 : vector<32xf32> to vector<1x32xf32>
    %cst_20 = arith.constant 3.200000e+01 : f32
    %51 = vector.broadcast %cst_20 : f32 to vector<1x32xf32>
    %52 = arith.divf %50, %51 : vector<1x32xf32>
    %53 = vector.broadcast %52 : vector<1x32xf32> to vector<32x32xf32>
    %54 = arith.subf %46, %53 : vector<32x32xf32>
    %55 = arith.mulf %54, %54 : vector<32x32xf32>
    %cst_21 = arith.constant dense<0.000000e+00> : vector<32xf32>
    %56 = vector.multi_reduction <add>, %55, %cst_21 [0] : vector<32x32xf32> to vector<32xf32>
    %57 = vector.shape_cast %56 : vector<32xf32> to vector<1x32xf32>
    %cst_22 = arith.constant 3.200000e+01 : f32
    %58 = vector.broadcast %cst_22 : f32 to vector<1x32xf32>
    %59 = arith.divf %57, %58 : vector<1x32xf32>
    %60 = vector.broadcast %52 : vector<1x32xf32> to vector<32x32xf32>
    %61 = arith.subf %46, %60 : vector<32x32xf32>
    %cst_23 = arith.constant 9.99999974E-6 : f32
    %62 = vector.broadcast %cst_23 : f32 to vector<1x32xf32>
    %63 = arith.addf %59, %62 : vector<1x32xf32>
    %64 = math.rsqrt %63 : vector<1x32xf32>
    %65 = vector.broadcast %64 : vector<1x32xf32> to vector<32x32xf32>
    %66 = arith.mulf %61, %65 : vector<32x32xf32>
    %67 = vector.broadcast %47 : vector<1x32xf32> to vector<32x32xf32>
    %68 = arith.mulf %66, %67 : vector<32x32xf32>
    %69 = vector.broadcast %48 : vector<1x32xf32> to vector<32x32xf32>
    %70 = arith.addf %68, %69 : vector<32x32xf32>
    %71 = vector.extract_strided_slice %70 {offsets = [0, 0], sizes = [32, 4], strides = [1, 1]} : vector<32x32xf32> to vector<32x4xf32>
    %72 = vector.extract_strided_slice %70 {offsets = [0, 4], sizes = [32, 4], strides = [1, 1]} : vector<32x32xf32> to vector<32x4xf32>
    %73 = vector.extract_strided_slice %70 {offsets = [0, 8], sizes = [32, 4], strides = [1, 1]} : vector<32x32xf32> to vector<32x4xf32>
    %74 = vector.extract_strided_slice %70 {offsets = [0, 12], sizes = [32, 4], strides = [1, 1]} : vector<32x32xf32> to vector<32x4xf32>
    %75 = vector.extract_strided_slice %70 {offsets = [0, 16], sizes = [32, 4], strides = [1, 1]} : vector<32x32xf32> to vector<32x4xf32>
    %76 = vector.extract_strided_slice %70 {offsets = [0, 20], sizes = [32, 4], strides = [1, 1]} : vector<32x32xf32> to vector<32x4xf32>
    %77 = vector.extract_strided_slice %70 {offsets = [0, 24], sizes = [32, 4], strides = [1, 1]} : vector<32x32xf32> to vector<32x4xf32>
    %78 = vector.extract_strided_slice %70 {offsets = [0, 28], sizes = [32, 4], strides = [1, 1]} : vector<32x32xf32> to vector<32x4xf32>
    %cst_24 = arith.constant 0.000000e+00 : f32
    %79 = vector.broadcast %cst_24 : f32 to vector<2x4xf32>
    %80 = vector.extract_strided_slice %71 {offsets = [0, 0], sizes = [30, 4], strides = [1, 1]} : vector<32x4xf32> to vector<30x4xf32>
    %81 = tpu.concatenate %79, %80 in 0 : vector<2x4xf32>, vector<30x4xf32> -> vector<32x4xf32>
    %82 = vector.broadcast %28 : vector<32x1xf32> to vector<32x4xf32>
    %83 = arith.mulf %81, %82 : vector<32x4xf32>
    %84 = vector.extract_strided_slice %71 {offsets = [2, 0], sizes = [30, 4], strides = [1, 1]} : vector<32x4xf32> to vector<30x4xf32>
    %cst_25 = arith.constant 0.000000e+00 : f32
    %85 = vector.broadcast %cst_25 : f32 to vector<2x4xf32>
    %86 = tpu.concatenate %84, %85 in 0 : vector<30x4xf32>, vector<2x4xf32> -> vector<32x4xf32>
    %87 = vector.broadcast %39 : vector<32x1xf32> to vector<32x4xf32>
    %88 = arith.mulf %86, %87 : vector<32x4xf32>
    %89 = tpu.concatenate %83, %71, %88 in 1 : vector<32x4xf32>, vector<32x4xf32>, vector<32x4xf32> -> vector<32x12xf32>
    %c0_26 = arith.constant 0 : index
    %c0_27 = arith.constant 0 : index
    %c0_28 = arith.constant 0 : index
    %90 = vector.load %arg5[%c0_26, %c0_27, %c0_28] : memref<7x12x4xf32, #tpu.memory_space<vmem>>, vector<1x12x4xf32>
    %91 = vector.shape_cast %90 : vector<1x12x4xf32> to vector<12x4xf32>
    %cst_29 = arith.constant dense<0.000000e+00> : vector<32x4xf32>
    %92 = tpu.matmul %89, %91, %cst_29 {dimension_numbers = #tpu.dot_dimension_numbers<[1], [0], [0], [1], [0, 0, 1, 1], [], []>} : vector<32x12xf32>, vector<12x4xf32>, vector<32x4xf32> -> vector<32x4xf32>
    %c0_30 = arith.constant 0 : index
    %c0_31 = arith.constant 0 : index
    %93 = vector.load %arg6[%c0_30, %c0_31] : memref<7x4xf32, #tpu.memory_space<vmem>>, vector<1x4xf32>
    %94 = vector.broadcast %93 : vector<1x4xf32> to vector<32x4xf32>
    %95 = arith.addf %92, %94 : vector<32x4xf32>
    %cst_32 = arith.constant 0.000000e+00 : f32
    %96 = vector.broadcast %cst_32 : f32 to vector<32x4xf32>
    %97 = arith.maximumf %95, %96 : vector<32x4xf32>
    %c0_33 = arith.constant 0 : index
    %c0_34 = arith.constant 0 : index
    %98 = vector.load %arg7[%c0_33, %c0_34] : memref<7x4xf32, #tpu.memory_space<vmem>>, vector<1x4xf32>
    %c0_35 = arith.constant 0 : index
    %c0_36 = arith.constant 0 : index
    %99 = vector.load %arg8[%c0_35, %c0_36] : memref<7x4xf32, #tpu.memory_space<vmem>>, vector<1x4xf32>
    %cst_37 = arith.constant dense<0.000000e+00> : vector<4xf32>
    %100 = vector.multi_reduction <add>, %97, %cst_37 [0] : vector<32x4xf32> to vector<4xf32>
    %101 = vector.shape_cast %100 : vector<4xf32> to vector<1x4xf32>
    %cst_38 = arith.constant 3.200000e+01 : f32
    %102 = vector.broadcast %cst_38 : f32 to vector<1x4xf32>
    %103 = arith.divf %101, %102 : vector<1x4xf32>
    %104 = vector.broadcast %103 : vector<1x4xf32> to vector<32x4xf32>
    %105 = arith.subf %97, %104 : vector<32x4xf32>
    %106 = arith.mulf %105, %105 : vector<32x4xf32>
    %cst_39 = arith.constant dense<0.000000e+00> : vector<4xf32>
    %107 = vector.multi_reduction <add>, %106, %cst_39 [0] : vector<32x4xf32> to vector<4xf32>
    %108 = vector.shape_cast %107 : vector<4xf32> to vector<1x4xf32>
    %cst_40 = arith.constant 3.200000e+01 : f32
    %109 = vector.broadcast %cst_40 : f32 to vector<1x4xf32>
    %110 = arith.divf %108, %109 : vector<1x4xf32>
    %111 = vector.broadcast %103 : vector<1x4xf32> to vector<32x4xf32>
    %112 = arith.subf %97, %111 : vector<32x4xf32>
    %cst_41 = arith.constant 9.99999974E-6 : f32
    %113 = vector.broadcast %cst_41 : f32 to vector<1x4xf32>
    %114 = arith.addf %110, %113 : vector<1x4xf32>
    %115 = math.rsqrt %114 : vector<1x4xf32>
    %116 = vector.broadcast %115 : vector<1x4xf32> to vector<32x4xf32>
    %117 = arith.mulf %112, %116 : vector<32x4xf32>
    %118 = vector.broadcast %98 : vector<1x4xf32> to vector<32x4xf32>
    %119 = arith.mulf %117, %118 : vector<32x4xf32>
    %120 = vector.broadcast %99 : vector<1x4xf32> to vector<32x4xf32>
    %121 = arith.addf %119, %120 : vector<32x4xf32>
    %122 = arith.addf %121, %72 : vector<32x4xf32>
    %cst_42 = arith.constant 0.000000e+00 : f32
    %123 = vector.broadcast %cst_42 : f32 to vector<2x4xf32>
    %124 = vector.extract_strided_slice %122 {offsets = [0, 0], sizes = [30, 4], strides = [1, 1]} : vector<32x4xf32> to vector<30x4xf32>
    %125 = tpu.concatenate %123, %124 in 0 : vector<2x4xf32>, vector<30x4xf32> -> vector<32x4xf32>
    %126 = vector.broadcast %28 : vector<32x1xf32> to vector<32x4xf32>
    %127 = arith.mulf %125, %126 : vector<32x4xf32>
    %128 = vector.extract_strided_slice %122 {offsets = [2, 0], sizes = [30, 4], strides = [1, 1]} : vector<32x4xf32> to vector<30x4xf32>
    %cst_43 = arith.constant 0.000000e+00 : f32
    %129 = vector.broadcast %cst_43 : f32 to vector<2x4xf32>
    %130 = tpu.concatenate %128, %129 in 0 : vector<30x4xf32>, vector<2x4xf32> -> vector<32x4xf32>
    %131 = vector.broadcast %39 : vector<32x1xf32> to vector<32x4xf32>
    %132 = arith.mulf %130, %131 : vector<32x4xf32>
    %133 = tpu.concatenate %127, %122, %132 in 1 : vector<32x4xf32>, vector<32x4xf32>, vector<32x4xf32> -> vector<32x12xf32>
    %c1 = arith.constant 1 : index
    %c0_44 = arith.constant 0 : index
    %c0_45 = arith.constant 0 : index
    %134 = vector.load %arg5[%c1, %c0_44, %c0_45] : memref<7x12x4xf32, #tpu.memory_space<vmem>>, vector<1x12x4xf32>
    %135 = vector.shape_cast %134 : vector<1x12x4xf32> to vector<12x4xf32>
    %cst_46 = arith.constant dense<0.000000e+00> : vector<32x4xf32>
    %136 = tpu.matmul %133, %135, %cst_46 {dimension_numbers = #tpu.dot_dimension_numbers<[1], [0], [0], [1], [0, 0, 1, 1], [], []>} : vector<32x12xf32>, vector<12x4xf32>, vector<32x4xf32> -> vector<32x4xf32>
    %c1_47 = arith.constant 1 : index
    %c0_48 = arith.constant 0 : index
    %137 = vector.load %arg6[%c1_47, %c0_48] : memref<7x4xf32, #tpu.memory_space<vmem>>, vector<1x4xf32>
    %138 = vector.broadcast %137 : vector<1x4xf32> to vector<32x4xf32>
    %139 = arith.addf %136, %138 : vector<32x4xf32>
    %cst_49 = arith.constant 0.000000e+00 : f32
    %140 = vector.broadcast %cst_49 : f32 to vector<32x4xf32>
    %141 = arith.maximumf %139, %140 : vector<32x4xf32>
    %c1_50 = arith.constant 1 : index
    %c0_51 = arith.constant 0 : index
    %142 = vector.load %arg7[%c1_50, %c0_51] : memref<7x4xf32, #tpu.memory_space<vmem>>, vector<1x4xf32>
    %c1_52 = arith.constant 1 : index
    %c0_53 = arith.constant 0 : index
    %143 = vector.load %arg8[%c1_52, %c0_53] : memref<7x4xf32, #tpu.memory_space<vmem>>, vector<1x4xf32>
    %cst_54 = arith.constant dense<0.000000e+00> : vector<4xf32>
    %144 = vector.multi_reduction <add>, %141, %cst_54 [0] : vector<32x4xf32> to vector<4xf32>
    %145 = vector.shape_cast %144 : vector<4xf32> to vector<1x4xf32>
    %cst_55 = arith.constant 3.200000e+01 : f32
    %146 = vector.broadcast %cst_55 : f32 to vector<1x4xf32>
    %147 = arith.divf %145, %146 : vector<1x4xf32>
    %148 = vector.broadcast %147 : vector<1x4xf32> to vector<32x4xf32>
    %149 = arith.subf %141, %148 : vector<32x4xf32>
    %150 = arith.mulf %149, %149 : vector<32x4xf32>
    %cst_56 = arith.constant dense<0.000000e+00> : vector<4xf32>
    %151 = vector.multi_reduction <add>, %150, %cst_56 [0] : vector<32x4xf32> to vector<4xf32>
    %152 = vector.shape_cast %151 : vector<4xf32> to vector<1x4xf32>
    %cst_57 = arith.constant 3.200000e+01 : f32
    %153 = vector.broadcast %cst_57 : f32 to vector<1x4xf32>
    %154 = arith.divf %152, %153 : vector<1x4xf32>
    %155 = vector.broadcast %147 : vector<1x4xf32> to vector<32x4xf32>
    %156 = arith.subf %141, %155 : vector<32x4xf32>
    %cst_58 = arith.constant 9.99999974E-6 : f32
    %157 = vector.broadcast %cst_58 : f32 to vector<1x4xf32>
    %158 = arith.addf %154, %157 : vector<1x4xf32>
    %159 = math.rsqrt %158 : vector<1x4xf32>
    %160 = vector.broadcast %159 : vector<1x4xf32> to vector<32x4xf32>
    %161 = arith.mulf %156, %160 : vector<32x4xf32>
    %162 = vector.broadcast %142 : vector<1x4xf32> to vector<32x4xf32>
    %163 = arith.mulf %161, %162 : vector<32x4xf32>
    %164 = vector.broadcast %143 : vector<1x4xf32> to vector<32x4xf32>
    %165 = arith.addf %163, %164 : vector<32x4xf32>
    %166 = arith.addf %165, %73 : vector<32x4xf32>
    %cst_59 = arith.constant 0.000000e+00 : f32
    %167 = vector.broadcast %cst_59 : f32 to vector<2x4xf32>
    %168 = vector.extract_strided_slice %166 {offsets = [0, 0], sizes = [30, 4], strides = [1, 1]} : vector<32x4xf32> to vector<30x4xf32>
    %169 = tpu.concatenate %167, %168 in 0 : vector<2x4xf32>, vector<30x4xf32> -> vector<32x4xf32>
    %170 = vector.broadcast %28 : vector<32x1xf32> to vector<32x4xf32>
    %171 = arith.mulf %169, %170 : vector<32x4xf32>
    %172 = vector.extract_strided_slice %166 {offsets = [2, 0], sizes = [30, 4], strides = [1, 1]} : vector<32x4xf32> to vector<30x4xf32>
    %cst_60 = arith.constant 0.000000e+00 : f32
    %173 = vector.broadcast %cst_60 : f32 to vector<2x4xf32>
    %174 = tpu.concatenate %172, %173 in 0 : vector<30x4xf32>, vector<2x4xf32> -> vector<32x4xf32>
    %175 = vector.broadcast %39 : vector<32x1xf32> to vector<32x4xf32>
    %176 = arith.mulf %174, %175 : vector<32x4xf32>
    %177 = tpu.concatenate %171, %166, %176 in 1 : vector<32x4xf32>, vector<32x4xf32>, vector<32x4xf32> -> vector<32x12xf32>
    %c2 = arith.constant 2 : index
    %c0_61 = arith.constant 0 : index
    %c0_62 = arith.constant 0 : index
    %178 = vector.load %arg5[%c2, %c0_61, %c0_62] : memref<7x12x4xf32, #tpu.memory_space<vmem>>, vector<1x12x4xf32>
    %179 = vector.shape_cast %178 : vector<1x12x4xf32> to vector<12x4xf32>
    %cst_63 = arith.constant dense<0.000000e+00> : vector<32x4xf32>
    %180 = tpu.matmul %177, %179, %cst_63 {dimension_numbers = #tpu.dot_dimension_numbers<[1], [0], [0], [1], [0, 0, 1, 1], [], []>} : vector<32x12xf32>, vector<12x4xf32>, vector<32x4xf32> -> vector<32x4xf32>
    %c2_64 = arith.constant 2 : index
    %c0_65 = arith.constant 0 : index
    %181 = vector.load %arg6[%c2_64, %c0_65] : memref<7x4xf32, #tpu.memory_space<vmem>>, vector<1x4xf32>
    %182 = vector.broadcast %181 : vector<1x4xf32> to vector<32x4xf32>
    %183 = arith.addf %180, %182 : vector<32x4xf32>
    %cst_66 = arith.constant 0.000000e+00 : f32
    %184 = vector.broadcast %cst_66 : f32 to vector<32x4xf32>
    %185 = arith.maximumf %183, %184 : vector<32x4xf32>
    %c2_67 = arith.constant 2 : index
    %c0_68 = arith.constant 0 : index
    %186 = vector.load %arg7[%c2_67, %c0_68] : memref<7x4xf32, #tpu.memory_space<vmem>>, vector<1x4xf32>
    %c2_69 = arith.constant 2 : index
    %c0_70 = arith.constant 0 : index
    %187 = vector.load %arg8[%c2_69, %c0_70] : memref<7x4xf32, #tpu.memory_space<vmem>>, vector<1x4xf32>
    %cst_71 = arith.constant dense<0.000000e+00> : vector<4xf32>
    %188 = vector.multi_reduction <add>, %185, %cst_71 [0] : vector<32x4xf32> to vector<4xf32>
    %189 = vector.shape_cast %188 : vector<4xf32> to vector<1x4xf32>
    %cst_72 = arith.constant 3.200000e+01 : f32
    %190 = vector.broadcast %cst_72 : f32 to vector<1x4xf32>
    %191 = arith.divf %189, %190 : vector<1x4xf32>
    %192 = vector.broadcast %191 : vector<1x4xf32> to vector<32x4xf32>
    %193 = arith.subf %185, %192 : vector<32x4xf32>
    %194 = arith.mulf %193, %193 : vector<32x4xf32>
    %cst_73 = arith.constant dense<0.000000e+00> : vector<4xf32>
    %195 = vector.multi_reduction <add>, %194, %cst_73 [0] : vector<32x4xf32> to vector<4xf32>
    %196 = vector.shape_cast %195 : vector<4xf32> to vector<1x4xf32>
    %cst_74 = arith.constant 3.200000e+01 : f32
    %197 = vector.broadcast %cst_74 : f32 to vector<1x4xf32>
    %198 = arith.divf %196, %197 : vector<1x4xf32>
    %199 = vector.broadcast %191 : vector<1x4xf32> to vector<32x4xf32>
    %200 = arith.subf %185, %199 : vector<32x4xf32>
    %cst_75 = arith.constant 9.99999974E-6 : f32
    %201 = vector.broadcast %cst_75 : f32 to vector<1x4xf32>
    %202 = arith.addf %198, %201 : vector<1x4xf32>
    %203 = math.rsqrt %202 : vector<1x4xf32>
    %204 = vector.broadcast %203 : vector<1x4xf32> to vector<32x4xf32>
    %205 = arith.mulf %200, %204 : vector<32x4xf32>
    %206 = vector.broadcast %186 : vector<1x4xf32> to vector<32x4xf32>
    %207 = arith.mulf %205, %206 : vector<32x4xf32>
    %208 = vector.broadcast %187 : vector<1x4xf32> to vector<32x4xf32>
    %209 = arith.addf %207, %208 : vector<32x4xf32>
    %210 = arith.addf %209, %74 : vector<32x4xf32>
    %cst_76 = arith.constant 0.000000e+00 : f32
    %211 = vector.broadcast %cst_76 : f32 to vector<2x4xf32>
    %212 = vector.extract_strided_slice %210 {offsets = [0, 0], sizes = [30, 4], strides = [1, 1]} : vector<32x4xf32> to vector<30x4xf32>
    %213 = tpu.concatenate %211, %212 in 0 : vector<2x4xf32>, vector<30x4xf32> -> vector<32x4xf32>
    %214 = vector.broadcast %28 : vector<32x1xf32> to vector<32x4xf32>
    %215 = arith.mulf %213, %214 : vector<32x4xf32>
    %216 = vector.extract_strided_slice %210 {offsets = [2, 0], sizes = [30, 4], strides = [1, 1]} : vector<32x4xf32> to vector<30x4xf32>
    %cst_77 = arith.constant 0.000000e+00 : f32
    %217 = vector.broadcast %cst_77 : f32 to vector<2x4xf32>
    %218 = tpu.concatenate %216, %217 in 0 : vector<30x4xf32>, vector<2x4xf32> -> vector<32x4xf32>
    %219 = vector.broadcast %39 : vector<32x1xf32> to vector<32x4xf32>
    %220 = arith.mulf %218, %219 : vector<32x4xf32>
    %221 = tpu.concatenate %215, %210, %220 in 1 : vector<32x4xf32>, vector<32x4xf32>, vector<32x4xf32> -> vector<32x12xf32>
    %c3 = arith.constant 3 : index
    %c0_78 = arith.constant 0 : index
    %c0_79 = arith.constant 0 : index
    %222 = vector.load %arg5[%c3, %c0_78, %c0_79] : memref<7x12x4xf32, #tpu.memory_space<vmem>>, vector<1x12x4xf32>
    %223 = vector.shape_cast %222 : vector<1x12x4xf32> to vector<12x4xf32>
    %cst_80 = arith.constant dense<0.000000e+00> : vector<32x4xf32>
    %224 = tpu.matmul %221, %223, %cst_80 {dimension_numbers = #tpu.dot_dimension_numbers<[1], [0], [0], [1], [0, 0, 1, 1], [], []>} : vector<32x12xf32>, vector<12x4xf32>, vector<32x4xf32> -> vector<32x4xf32>
    %c3_81 = arith.constant 3 : index
    %c0_82 = arith.constant 0 : index
    %225 = vector.load %arg6[%c3_81, %c0_82] : memref<7x4xf32, #tpu.memory_space<vmem>>, vector<1x4xf32>
    %226 = vector.broadcast %225 : vector<1x4xf32> to vector<32x4xf32>
    %227 = arith.addf %224, %226 : vector<32x4xf32>
    %cst_83 = arith.constant 0.000000e+00 : f32
    %228 = vector.broadcast %cst_83 : f32 to vector<32x4xf32>
    %229 = arith.maximumf %227, %228 : vector<32x4xf32>
    %c3_84 = arith.constant 3 : index
    %c0_85 = arith.constant 0 : index
    %230 = vector.load %arg7[%c3_84, %c0_85] : memref<7x4xf32, #tpu.memory_space<vmem>>, vector<1x4xf32>
    %c3_86 = arith.constant 3 : index
    %c0_87 = arith.constant 0 : index
    %231 = vector.load %arg8[%c3_86, %c0_87] : memref<7x4xf32, #tpu.memory_space<vmem>>, vector<1x4xf32>
    %cst_88 = arith.constant dense<0.000000e+00> : vector<4xf32>
    %232 = vector.multi_reduction <add>, %229, %cst_88 [0] : vector<32x4xf32> to vector<4xf32>
    %233 = vector.shape_cast %232 : vector<4xf32> to vector<1x4xf32>
    %cst_89 = arith.constant 3.200000e+01 : f32
    %234 = vector.broadcast %cst_89 : f32 to vector<1x4xf32>
    %235 = arith.divf %233, %234 : vector<1x4xf32>
    %236 = vector.broadcast %235 : vector<1x4xf32> to vector<32x4xf32>
    %237 = arith.subf %229, %236 : vector<32x4xf32>
    %238 = arith.mulf %237, %237 : vector<32x4xf32>
    %cst_90 = arith.constant dense<0.000000e+00> : vector<4xf32>
    %239 = vector.multi_reduction <add>, %238, %cst_90 [0] : vector<32x4xf32> to vector<4xf32>
    %240 = vector.shape_cast %239 : vector<4xf32> to vector<1x4xf32>
    %cst_91 = arith.constant 3.200000e+01 : f32
    %241 = vector.broadcast %cst_91 : f32 to vector<1x4xf32>
    %242 = arith.divf %240, %241 : vector<1x4xf32>
    %243 = vector.broadcast %235 : vector<1x4xf32> to vector<32x4xf32>
    %244 = arith.subf %229, %243 : vector<32x4xf32>
    %cst_92 = arith.constant 9.99999974E-6 : f32
    %245 = vector.broadcast %cst_92 : f32 to vector<1x4xf32>
    %246 = arith.addf %242, %245 : vector<1x4xf32>
    %247 = math.rsqrt %246 : vector<1x4xf32>
    %248 = vector.broadcast %247 : vector<1x4xf32> to vector<32x4xf32>
    %249 = arith.mulf %244, %248 : vector<32x4xf32>
    %250 = vector.broadcast %230 : vector<1x4xf32> to vector<32x4xf32>
    %251 = arith.mulf %249, %250 : vector<32x4xf32>
    %252 = vector.broadcast %231 : vector<1x4xf32> to vector<32x4xf32>
    %253 = arith.addf %251, %252 : vector<32x4xf32>
    %254 = arith.addf %253, %75 : vector<32x4xf32>
    %cst_93 = arith.constant 0.000000e+00 : f32
    %255 = vector.broadcast %cst_93 : f32 to vector<2x4xf32>
    %256 = vector.extract_strided_slice %254 {offsets = [0, 0], sizes = [30, 4], strides = [1, 1]} : vector<32x4xf32> to vector<30x4xf32>
    %257 = tpu.concatenate %255, %256 in 0 : vector<2x4xf32>, vector<30x4xf32> -> vector<32x4xf32>
    %258 = vector.broadcast %28 : vector<32x1xf32> to vector<32x4xf32>
    %259 = arith.mulf %257, %258 : vector<32x4xf32>
    %260 = vector.extract_strided_slice %254 {offsets = [2, 0], sizes = [30, 4], strides = [1, 1]} : vector<32x4xf32> to vector<30x4xf32>
    %cst_94 = arith.constant 0.000000e+00 : f32
    %261 = vector.broadcast %cst_94 : f32 to vector<2x4xf32>
    %262 = tpu.concatenate %260, %261 in 0 : vector<30x4xf32>, vector<2x4xf32> -> vector<32x4xf32>
    %263 = vector.broadcast %39 : vector<32x1xf32> to vector<32x4xf32>
    %264 = arith.mulf %262, %263 : vector<32x4xf32>
    %265 = tpu.concatenate %259, %254, %264 in 1 : vector<32x4xf32>, vector<32x4xf32>, vector<32x4xf32> -> vector<32x12xf32>
    %c4 = arith.constant 4 : index
    %c0_95 = arith.constant 0 : index
    %c0_96 = arith.constant 0 : index
    %266 = vector.load %arg5[%c4, %c0_95, %c0_96] : memref<7x12x4xf32, #tpu.memory_space<vmem>>, vector<1x12x4xf32>
    %267 = vector.shape_cast %266 : vector<1x12x4xf32> to vector<12x4xf32>
    %cst_97 = arith.constant dense<0.000000e+00> : vector<32x4xf32>
    %268 = tpu.matmul %265, %267, %cst_97 {dimension_numbers = #tpu.dot_dimension_numbers<[1], [0], [0], [1], [0, 0, 1, 1], [], []>} : vector<32x12xf32>, vector<12x4xf32>, vector<32x4xf32> -> vector<32x4xf32>
    %c4_98 = arith.constant 4 : index
    %c0_99 = arith.constant 0 : index
    %269 = vector.load %arg6[%c4_98, %c0_99] : memref<7x4xf32, #tpu.memory_space<vmem>>, vector<1x4xf32>
    %270 = vector.broadcast %269 : vector<1x4xf32> to vector<32x4xf32>
    %271 = arith.addf %268, %270 : vector<32x4xf32>
    %cst_100 = arith.constant 0.000000e+00 : f32
    %272 = vector.broadcast %cst_100 : f32 to vector<32x4xf32>
    %273 = arith.maximumf %271, %272 : vector<32x4xf32>
    %c4_101 = arith.constant 4 : index
    %c0_102 = arith.constant 0 : index
    %274 = vector.load %arg7[%c4_101, %c0_102] : memref<7x4xf32, #tpu.memory_space<vmem>>, vector<1x4xf32>
    %c4_103 = arith.constant 4 : index
    %c0_104 = arith.constant 0 : index
    %275 = vector.load %arg8[%c4_103, %c0_104] : memref<7x4xf32, #tpu.memory_space<vmem>>, vector<1x4xf32>
    %cst_105 = arith.constant dense<0.000000e+00> : vector<4xf32>
    %276 = vector.multi_reduction <add>, %273, %cst_105 [0] : vector<32x4xf32> to vector<4xf32>
    %277 = vector.shape_cast %276 : vector<4xf32> to vector<1x4xf32>
    %cst_106 = arith.constant 3.200000e+01 : f32
    %278 = vector.broadcast %cst_106 : f32 to vector<1x4xf32>
    %279 = arith.divf %277, %278 : vector<1x4xf32>
    %280 = vector.broadcast %279 : vector<1x4xf32> to vector<32x4xf32>
    %281 = arith.subf %273, %280 : vector<32x4xf32>
    %282 = arith.mulf %281, %281 : vector<32x4xf32>
    %cst_107 = arith.constant dense<0.000000e+00> : vector<4xf32>
    %283 = vector.multi_reduction <add>, %282, %cst_107 [0] : vector<32x4xf32> to vector<4xf32>
    %284 = vector.shape_cast %283 : vector<4xf32> to vector<1x4xf32>
    %cst_108 = arith.constant 3.200000e+01 : f32
    %285 = vector.broadcast %cst_108 : f32 to vector<1x4xf32>
    %286 = arith.divf %284, %285 : vector<1x4xf32>
    %287 = vector.broadcast %279 : vector<1x4xf32> to vector<32x4xf32>
    %288 = arith.subf %273, %287 : vector<32x4xf32>
    %cst_109 = arith.constant 9.99999974E-6 : f32
    %289 = vector.broadcast %cst_109 : f32 to vector<1x4xf32>
    %290 = arith.addf %286, %289 : vector<1x4xf32>
    %291 = math.rsqrt %290 : vector<1x4xf32>
    %292 = vector.broadcast %291 : vector<1x4xf32> to vector<32x4xf32>
    %293 = arith.mulf %288, %292 : vector<32x4xf32>
    %294 = vector.broadcast %274 : vector<1x4xf32> to vector<32x4xf32>
    %295 = arith.mulf %293, %294 : vector<32x4xf32>
    %296 = vector.broadcast %275 : vector<1x4xf32> to vector<32x4xf32>
    %297 = arith.addf %295, %296 : vector<32x4xf32>
    %298 = arith.addf %297, %76 : vector<32x4xf32>
    %cst_110 = arith.constant 0.000000e+00 : f32
    %299 = vector.broadcast %cst_110 : f32 to vector<2x4xf32>
    %300 = vector.extract_strided_slice %298 {offsets = [0, 0], sizes = [30, 4], strides = [1, 1]} : vector<32x4xf32> to vector<30x4xf32>
    %301 = tpu.concatenate %299, %300 in 0 : vector<2x4xf32>, vector<30x4xf32> -> vector<32x4xf32>
    %302 = vector.broadcast %28 : vector<32x1xf32> to vector<32x4xf32>
    %303 = arith.mulf %301, %302 : vector<32x4xf32>
    %304 = vector.extract_strided_slice %298 {offsets = [2, 0], sizes = [30, 4], strides = [1, 1]} : vector<32x4xf32> to vector<30x4xf32>
    %cst_111 = arith.constant 0.000000e+00 : f32
    %305 = vector.broadcast %cst_111 : f32 to vector<2x4xf32>
    %306 = tpu.concatenate %304, %305 in 0 : vector<30x4xf32>, vector<2x4xf32> -> vector<32x4xf32>
    %307 = vector.broadcast %39 : vector<32x1xf32> to vector<32x4xf32>
    %308 = arith.mulf %306, %307 : vector<32x4xf32>
    %309 = tpu.concatenate %303, %298, %308 in 1 : vector<32x4xf32>, vector<32x4xf32>, vector<32x4xf32> -> vector<32x12xf32>
    %c5 = arith.constant 5 : index
    %c0_112 = arith.constant 0 : index
    %c0_113 = arith.constant 0 : index
    %310 = vector.load %arg5[%c5, %c0_112, %c0_113] : memref<7x12x4xf32, #tpu.memory_space<vmem>>, vector<1x12x4xf32>
    %311 = vector.shape_cast %310 : vector<1x12x4xf32> to vector<12x4xf32>
    %cst_114 = arith.constant dense<0.000000e+00> : vector<32x4xf32>
    %312 = tpu.matmul %309, %311, %cst_114 {dimension_numbers = #tpu.dot_dimension_numbers<[1], [0], [0], [1], [0, 0, 1, 1], [], []>} : vector<32x12xf32>, vector<12x4xf32>, vector<32x4xf32> -> vector<32x4xf32>
    %c5_115 = arith.constant 5 : index
    %c0_116 = arith.constant 0 : index
    %313 = vector.load %arg6[%c5_115, %c0_116] : memref<7x4xf32, #tpu.memory_space<vmem>>, vector<1x4xf32>
    %314 = vector.broadcast %313 : vector<1x4xf32> to vector<32x4xf32>
    %315 = arith.addf %312, %314 : vector<32x4xf32>
    %cst_117 = arith.constant 0.000000e+00 : f32
    %316 = vector.broadcast %cst_117 : f32 to vector<32x4xf32>
    %317 = arith.maximumf %315, %316 : vector<32x4xf32>
    %c5_118 = arith.constant 5 : index
    %c0_119 = arith.constant 0 : index
    %318 = vector.load %arg7[%c5_118, %c0_119] : memref<7x4xf32, #tpu.memory_space<vmem>>, vector<1x4xf32>
    %c5_120 = arith.constant 5 : index
    %c0_121 = arith.constant 0 : index
    %319 = vector.load %arg8[%c5_120, %c0_121] : memref<7x4xf32, #tpu.memory_space<vmem>>, vector<1x4xf32>
    %cst_122 = arith.constant dense<0.000000e+00> : vector<4xf32>
    %320 = vector.multi_reduction <add>, %317, %cst_122 [0] : vector<32x4xf32> to vector<4xf32>
    %321 = vector.shape_cast %320 : vector<4xf32> to vector<1x4xf32>
    %cst_123 = arith.constant 3.200000e+01 : f32
    %322 = vector.broadcast %cst_123 : f32 to vector<1x4xf32>
    %323 = arith.divf %321, %322 : vector<1x4xf32>
    %324 = vector.broadcast %323 : vector<1x4xf32> to vector<32x4xf32>
    %325 = arith.subf %317, %324 : vector<32x4xf32>
    %326 = arith.mulf %325, %325 : vector<32x4xf32>
    %cst_124 = arith.constant dense<0.000000e+00> : vector<4xf32>
    %327 = vector.multi_reduction <add>, %326, %cst_124 [0] : vector<32x4xf32> to vector<4xf32>
    %328 = vector.shape_cast %327 : vector<4xf32> to vector<1x4xf32>
    %cst_125 = arith.constant 3.200000e+01 : f32
    %329 = vector.broadcast %cst_125 : f32 to vector<1x4xf32>
    %330 = arith.divf %328, %329 : vector<1x4xf32>
    %331 = vector.broadcast %323 : vector<1x4xf32> to vector<32x4xf32>
    %332 = arith.subf %317, %331 : vector<32x4xf32>
    %cst_126 = arith.constant 9.99999974E-6 : f32
    %333 = vector.broadcast %cst_126 : f32 to vector<1x4xf32>
    %334 = arith.addf %330, %333 : vector<1x4xf32>
    %335 = math.rsqrt %334 : vector<1x4xf32>
    %336 = vector.broadcast %335 : vector<1x4xf32> to vector<32x4xf32>
    %337 = arith.mulf %332, %336 : vector<32x4xf32>
    %338 = vector.broadcast %318 : vector<1x4xf32> to vector<32x4xf32>
    %339 = arith.mulf %337, %338 : vector<32x4xf32>
    %340 = vector.broadcast %319 : vector<1x4xf32> to vector<32x4xf32>
    %341 = arith.addf %339, %340 : vector<32x4xf32>
    %342 = arith.addf %341, %77 : vector<32x4xf32>
    %cst_127 = arith.constant 0.000000e+00 : f32
    %343 = vector.broadcast %cst_127 : f32 to vector<2x4xf32>
    %344 = vector.extract_strided_slice %342 {offsets = [0, 0], sizes = [30, 4], strides = [1, 1]} : vector<32x4xf32> to vector<30x4xf32>
    %345 = tpu.concatenate %343, %344 in 0 : vector<2x4xf32>, vector<30x4xf32> -> vector<32x4xf32>
    %346 = vector.broadcast %28 : vector<32x1xf32> to vector<32x4xf32>
    %347 = arith.mulf %345, %346 : vector<32x4xf32>
    %348 = vector.extract_strided_slice %342 {offsets = [2, 0], sizes = [30, 4], strides = [1, 1]} : vector<32x4xf32> to vector<30x4xf32>
    %cst_128 = arith.constant 0.000000e+00 : f32
    %349 = vector.broadcast %cst_128 : f32 to vector<2x4xf32>
    %350 = tpu.concatenate %348, %349 in 0 : vector<30x4xf32>, vector<2x4xf32> -> vector<32x4xf32>
    %351 = vector.broadcast %39 : vector<32x1xf32> to vector<32x4xf32>
    %352 = arith.mulf %350, %351 : vector<32x4xf32>
    %353 = tpu.concatenate %347, %342, %352 in 1 : vector<32x4xf32>, vector<32x4xf32>, vector<32x4xf32> -> vector<32x12xf32>
    %c6 = arith.constant 6 : index
    %c0_129 = arith.constant 0 : index
    %c0_130 = arith.constant 0 : index
    %354 = vector.load %arg5[%c6, %c0_129, %c0_130] : memref<7x12x4xf32, #tpu.memory_space<vmem>>, vector<1x12x4xf32>
    %355 = vector.shape_cast %354 : vector<1x12x4xf32> to vector<12x4xf32>
    %cst_131 = arith.constant dense<0.000000e+00> : vector<32x4xf32>
    %356 = tpu.matmul %353, %355, %cst_131 {dimension_numbers = #tpu.dot_dimension_numbers<[1], [0], [0], [1], [0, 0, 1, 1], [], []>} : vector<32x12xf32>, vector<12x4xf32>, vector<32x4xf32> -> vector<32x4xf32>
    %c6_132 = arith.constant 6 : index
    %c0_133 = arith.constant 0 : index
    %357 = vector.load %arg6[%c6_132, %c0_133] : memref<7x4xf32, #tpu.memory_space<vmem>>, vector<1x4xf32>
    %358 = vector.broadcast %357 : vector<1x4xf32> to vector<32x4xf32>
    %359 = arith.addf %356, %358 : vector<32x4xf32>
    %cst_134 = arith.constant 0.000000e+00 : f32
    %360 = vector.broadcast %cst_134 : f32 to vector<32x4xf32>
    %361 = arith.maximumf %359, %360 : vector<32x4xf32>
    %c6_135 = arith.constant 6 : index
    %c0_136 = arith.constant 0 : index
    %362 = vector.load %arg7[%c6_135, %c0_136] : memref<7x4xf32, #tpu.memory_space<vmem>>, vector<1x4xf32>
    %c6_137 = arith.constant 6 : index
    %c0_138 = arith.constant 0 : index
    %363 = vector.load %arg8[%c6_137, %c0_138] : memref<7x4xf32, #tpu.memory_space<vmem>>, vector<1x4xf32>
    %cst_139 = arith.constant dense<0.000000e+00> : vector<4xf32>
    %364 = vector.multi_reduction <add>, %361, %cst_139 [0] : vector<32x4xf32> to vector<4xf32>
    %365 = vector.shape_cast %364 : vector<4xf32> to vector<1x4xf32>
    %cst_140 = arith.constant 3.200000e+01 : f32
    %366 = vector.broadcast %cst_140 : f32 to vector<1x4xf32>
    %367 = arith.divf %365, %366 : vector<1x4xf32>
    %368 = vector.broadcast %367 : vector<1x4xf32> to vector<32x4xf32>
    %369 = arith.subf %361, %368 : vector<32x4xf32>
    %370 = arith.mulf %369, %369 : vector<32x4xf32>
    %cst_141 = arith.constant dense<0.000000e+00> : vector<4xf32>
    %371 = vector.multi_reduction <add>, %370, %cst_141 [0] : vector<32x4xf32> to vector<4xf32>
    %372 = vector.shape_cast %371 : vector<4xf32> to vector<1x4xf32>
    %cst_142 = arith.constant 3.200000e+01 : f32
    %373 = vector.broadcast %cst_142 : f32 to vector<1x4xf32>
    %374 = arith.divf %372, %373 : vector<1x4xf32>
    %375 = vector.broadcast %367 : vector<1x4xf32> to vector<32x4xf32>
    %376 = arith.subf %361, %375 : vector<32x4xf32>
    %cst_143 = arith.constant 9.99999974E-6 : f32
    %377 = vector.broadcast %cst_143 : f32 to vector<1x4xf32>
    %378 = arith.addf %374, %377 : vector<1x4xf32>
    %379 = math.rsqrt %378 : vector<1x4xf32>
    %380 = vector.broadcast %379 : vector<1x4xf32> to vector<32x4xf32>
    %381 = arith.mulf %376, %380 : vector<32x4xf32>
    %382 = vector.broadcast %362 : vector<1x4xf32> to vector<32x4xf32>
    %383 = arith.mulf %381, %382 : vector<32x4xf32>
    %384 = vector.broadcast %363 : vector<1x4xf32> to vector<32x4xf32>
    %385 = arith.addf %383, %384 : vector<32x4xf32>
    %386 = tpu.concatenate %121, %165, %209, %253, %297, %341, %385, %78 in 1 : vector<32x4xf32>, vector<32x4xf32>, vector<32x4xf32>, vector<32x4xf32>, vector<32x4xf32>, vector<32x4xf32>, vector<32x4xf32>, vector<32x4xf32> -> vector<32x32xf32>
    %c0_144 = arith.constant 0 : index
    %c0_145 = arith.constant 0 : index
    %387 = vector.load %arg9[%c0_144, %c0_145] : memref<32x32xf32, #tpu.memory_space<vmem>>, vector<32x32xf32>
    %cst_146 = arith.constant dense<0.000000e+00> : vector<32x32xf32>
    %388 = tpu.matmul %386, %387, %cst_146 {dimension_numbers = #tpu.dot_dimension_numbers<[1], [0], [0], [1], [0, 0, 1, 1], [], []>} : vector<32x32xf32>, vector<32x32xf32>, vector<32x32xf32> -> vector<32x32xf32>
    %c0_147 = arith.constant 0 : index
    %c0_148 = arith.constant 0 : index
    %389 = vector.load %arg10[%c0_147, %c0_148] : memref<1x32xf32, #tpu.memory_space<vmem>>, vector<1x32xf32>
    %390 = vector.broadcast %389 : vector<1x32xf32> to vector<32x32xf32>
    %391 = arith.addf %388, %390 : vector<32x32xf32>
    %cst_149 = arith.constant 0.000000e+00 : f32
    %392 = vector.broadcast %cst_149 : f32 to vector<32x32xf32>
    %393 = arith.maximumf %391, %392 : vector<32x32xf32>
    %c0_150 = arith.constant 0 : index
    %c0_151 = arith.constant 0 : index
    %394 = vector.load %arg11[%c0_150, %c0_151] : memref<1x32xf32, #tpu.memory_space<vmem>>, vector<1x32xf32>
    %c0_152 = arith.constant 0 : index
    %c0_153 = arith.constant 0 : index
    %395 = vector.load %arg12[%c0_152, %c0_153] : memref<1x32xf32, #tpu.memory_space<vmem>>, vector<1x32xf32>
    %cst_154 = arith.constant dense<0.000000e+00> : vector<32xf32>
    %396 = vector.multi_reduction <add>, %393, %cst_154 [0] : vector<32x32xf32> to vector<32xf32>
    %397 = vector.shape_cast %396 : vector<32xf32> to vector<1x32xf32>
    %cst_155 = arith.constant 3.200000e+01 : f32
    %398 = vector.broadcast %cst_155 : f32 to vector<1x32xf32>
    %399 = arith.divf %397, %398 : vector<1x32xf32>
    %400 = vector.broadcast %399 : vector<1x32xf32> to vector<32x32xf32>
    %401 = arith.subf %393, %400 : vector<32x32xf32>
    %402 = arith.mulf %401, %401 : vector<32x32xf32>
    %cst_156 = arith.constant dense<0.000000e+00> : vector<32xf32>
    %403 = vector.multi_reduction <add>, %402, %cst_156 [0] : vector<32x32xf32> to vector<32xf32>
    %404 = vector.shape_cast %403 : vector<32xf32> to vector<1x32xf32>
    %cst_157 = arith.constant 3.200000e+01 : f32
    %405 = vector.broadcast %cst_157 : f32 to vector<1x32xf32>
    %406 = arith.divf %404, %405 : vector<1x32xf32>
    %407 = vector.broadcast %399 : vector<1x32xf32> to vector<32x32xf32>
    %408 = arith.subf %393, %407 : vector<32x32xf32>
    %cst_158 = arith.constant 9.99999974E-6 : f32
    %409 = vector.broadcast %cst_158 : f32 to vector<1x32xf32>
    %410 = arith.addf %406, %409 : vector<1x32xf32>
    %411 = math.rsqrt %410 : vector<1x32xf32>
    %412 = vector.broadcast %411 : vector<1x32xf32> to vector<32x32xf32>
    %413 = arith.mulf %408, %412 : vector<32x32xf32>
    %414 = vector.broadcast %394 : vector<1x32xf32> to vector<32x32xf32>
    %415 = arith.mulf %413, %414 : vector<32x32xf32>
    %416 = vector.broadcast %395 : vector<1x32xf32> to vector<32x32xf32>
    %417 = arith.addf %415, %416 : vector<32x32xf32>
    %418 = vector.extract_strided_slice %417 {offsets = [0, 0], sizes = [16, 32], strides = [1, 1]} : vector<32x32xf32> to vector<16x32xf32>
    %cst_159 = arith.constant dense<0.000000e+00> : vector<32xf32>
    %419 = vector.multi_reduction <add>, %418, %cst_159 [0] : vector<16x32xf32> to vector<32xf32>
    %420 = vector.shape_cast %419 : vector<32xf32> to vector<1x32xf32>
    %cst_160 = arith.constant 1.600000e+01 : f32
    %421 = vector.broadcast %cst_160 : f32 to vector<1x32xf32>
    %422 = arith.divf %420, %421 : vector<1x32xf32>
    %423 = vector.extract_strided_slice %417 {offsets = [16, 0], sizes = [16, 32], strides = [1, 1]} : vector<32x32xf32> to vector<16x32xf32>
    %cst_161 = arith.constant dense<0.000000e+00> : vector<32xf32>
    %424 = vector.multi_reduction <add>, %423, %cst_161 [0] : vector<16x32xf32> to vector<32xf32>
    %425 = vector.shape_cast %424 : vector<32xf32> to vector<1x32xf32>
    %cst_162 = arith.constant 1.600000e+01 : f32
    %426 = vector.broadcast %cst_162 : f32 to vector<1x32xf32>
    %427 = arith.divf %425, %426 : vector<1x32xf32>
    %428 = tpu.concatenate %422, %427 in 0 : vector<1x32xf32>, vector<1x32xf32> -> vector<2x32xf32>
    %c0_163 = arith.constant 0 : index
    %c0_164 = arith.constant 0 : index
    %429 = vector.load %arg13[%c0_163, %c0_164] : memref<32x128xf32, #tpu.memory_space<vmem>>, vector<32x128xf32>
    %cst_165 = arith.constant dense<0.000000e+00> : vector<2x128xf32>
    %430 = tpu.matmul %428, %429, %cst_165 {dimension_numbers = #tpu.dot_dimension_numbers<[1], [0], [0], [1], [0, 0, 1, 1], [], []>} : vector<2x32xf32>, vector<32x128xf32>, vector<2x128xf32> -> vector<2x128xf32>
    %c0_166 = arith.constant 0 : index
    %c0_167 = arith.constant 0 : index
    %431 = vector.load %arg14[%c0_166, %c0_167] : memref<1x128xf32, #tpu.memory_space<vmem>>, vector<1x128xf32>
    %432 = vector.broadcast %431 : vector<1x128xf32> to vector<2x128xf32>
    %433 = arith.addf %430, %432 : vector<2x128xf32>
    %cst_168 = arith.constant 0.000000e+00 : f32
    %434 = vector.broadcast %cst_168 : f32 to vector<2x128xf32>
    %435 = arith.maximumf %433, %434 : vector<2x128xf32>
    %c0_169 = arith.constant 0 : index
    %c0_170 = arith.constant 0 : index
    %436 = vector.load %arg15[%c0_169, %c0_170] : memref<128x32xf32, #tpu.memory_space<vmem>>, vector<128x32xf32>
    %cst_171 = arith.constant dense<0.000000e+00> : vector<2x32xf32>
    %437 = tpu.matmul %435, %436, %cst_171 {dimension_numbers = #tpu.dot_dimension_numbers<[1], [0], [0], [1], [0, 0, 1, 1], [], []>} : vector<2x128xf32>, vector<128x32xf32>, vector<2x32xf32> -> vector<2x32xf32>
    %c0_172 = arith.constant 0 : index
    %c0_173 = arith.constant 0 : index
    %438 = vector.load %arg16[%c0_172, %c0_173] : memref<1x32xf32, #tpu.memory_space<vmem>>, vector<1x32xf32>
    %439 = vector.broadcast %438 : vector<1x32xf32> to vector<2x32xf32>
    %440 = arith.addf %437, %439 : vector<2x32xf32>
    %441 = arith.negf %440 : vector<2x32xf32>
    %442 = math.exp %441 : vector<2x32xf32>
    %cst_174 = arith.constant 1.000000e+00 : f32
    %443 = vector.broadcast %cst_174 : f32 to vector<2x32xf32>
    %444 = arith.addf %443, %442 : vector<2x32xf32>
    %445 = arith.divf %443, %444 : vector<2x32xf32>
    %446 = vector.extract_strided_slice %445 {offsets = [0, 0], sizes = [1, 32], strides = [1, 1]} : vector<2x32xf32> to vector<1x32xf32>
    %447 = vector.shape_cast %446 : vector<1x32xf32> to vector<1x32xf32>
    %448 = vector.broadcast %447 : vector<1x32xf32> to vector<16x32xf32>
    %449 = vector.extract_strided_slice %445 {offsets = [1, 0], sizes = [1, 32], strides = [1, 1]} : vector<2x32xf32> to vector<1x32xf32>
    %450 = vector.shape_cast %449 : vector<1x32xf32> to vector<1x32xf32>
    %451 = vector.broadcast %450 : vector<1x32xf32> to vector<16x32xf32>
    %452 = tpu.concatenate %448, %451 in 0 : vector<16x32xf32>, vector<16x32xf32> -> vector<32x32xf32>
    %453 = arith.mulf %417, %452 : vector<32x32xf32>
    %454 = arith.addf %453, %0 : vector<32x32xf32>
    %cst_175 = arith.constant 0.000000e+00 : f32
    %455 = vector.broadcast %cst_175 : f32 to vector<32x96xf32>
    %456 = tpu.concatenate %454, %455 in 1 : vector<32x32xf32>, vector<32x96xf32> -> vector<32x128xf32>
    %c0_176 = arith.constant 0 : index
    %c0_177 = arith.constant 0 : index
    %457 = vector.load %arg17[%c0_176, %c0_177] : memref<32x128xf32, #tpu.memory_space<vmem>>, vector<32x128xf32>
    tpu.vector_store %arg17[%c0_176, %c0_177], %456 {strides = array<i32>} : memref<32x128xf32, #tpu.memory_space<vmem>>, vector<32x128xf32>,
    return
  }
}

</mosaic_0001>

<llo_original>
// kernel: tpu_custom_call.1
$region0: #{tpu_custom_call.1}
  #allocation0 [shape = 'u32[]', space=smem, size = 0x4, offset = 0x4, fixed_abs, tag = 'smem constant byte address 0x4 - core index']
  #allocation1 [shape = 'u32[144,128]{1,0:T(1,128)}', space=vmem, size = 0x12000, scoped, tag = 'internal scratch']
  %s0 = inlined_call_operand.vmem [shape: f32[32,32], index: 0, kind: input, shape index: {}]
  %s1 = inlined_call_operand.vmem [shape: f32[32,32], index: 1, kind: input, shape index: {}]
  %s2 = inlined_call_operand.vmem [shape: f32[1,32], index: 2, kind: input, shape index: {}]
  %s3 = inlined_call_operand.vmem [shape: f32[1,32], index: 3, kind: input, shape index: {}]
  %s4 = inlined_call_operand.vmem [shape: f32[1,32], index: 4, kind: input, shape index: {}]
  %s5 = inlined_call_operand.vmem [shape: f32[7,12,4], index: 5, kind: input, shape index: {}]
  %s6 = inlined_call_operand.vmem [shape: f32[7,4], index: 6, kind: input, shape index: {}]
  %s7 = inlined_call_operand.vmem [shape: f32[7,4], index: 7, kind: input, shape index: {}]
  %s8 = inlined_call_operand.vmem [shape: f32[7,4], index: 8, kind: input, shape index: {}]
  %s9 = inlined_call_operand.vmem [shape: f32[32,32], index: 9, kind: input, shape index: {}]
  %s10 = inlined_call_operand.vmem [shape: f32[1,32], index: 10, kind: input, shape index: {}]
  %s11 = inlined_call_operand.vmem [shape: f32[1,32], index: 11, kind: input, shape index: {}]
  %s12 = inlined_call_operand.vmem [shape: f32[1,32], index: 12, kind: input, shape index: {}]
  %s13 = inlined_call_operand.vmem [shape: f32[32,128], index: 13, kind: input, shape index: {}]
  %s14 = inlined_call_operand.vmem [shape: f32[1,128], index: 14, kind: input, shape index: {}]
  %s15 = inlined_call_operand.vmem [shape: f32[128,32], index: 15, kind: input, shape index: {}]
  %s16 = inlined_call_operand.vmem [shape: f32[1,32], index: 16, kind: input, shape index: {}]
  %s17 = inlined_call_operand.hbm [shape: f32[32,128], index: 17, kind: output, shape index: {}]
  %s18 = sld [smem:[#allocation0]]
  $region78: #{tpu_custom_call.1} parent=0
    _
  %s20 = ssub.s32 1, %s18
  %s21 = scalar_select 0, %s20, %s18
  $region1: #{tpu_custom_call.1} parent=0
    #allocation2 [shape = 'u8[16384]{0}', space=vmem, size = 0x4000, scoped, tag = 'output window, operand 0, single buffered']
    #allocation3 [shape = 's32[1]{0}', space=sflag, size = 0x4, scoped, tag = 'scoped memory for tpu_custom_call.1']
    %22 = vsyncpa [#allocation3], 0
    // Predicated region
    $region2: #{tpu_custom_call.1} parent=1 // pred_check
      _
    $region3: #{tpu_custom_call.1} parent=1 // pred_check_branch
      %24 = sbr.rel (0) target = $region5
    $region4: #{tpu_custom_call.1} parent=1 // pred_region
      _
    $region5: #{tpu_custom_call.1} parent=1 // pred_fallthru
      _
    // Predicated region
    $region6: #{tpu_custom_call.1} parent=1 // pred_check
      _
    $region7: #{tpu_custom_call.1} parent=1 // pred_check_branch
      %26 = sbr.rel (0) target = $region9
    $region8: #{tpu_custom_call.1} parent=1 // pred_region
      _
    $region9: #{tpu_custom_call.1} parent=1 // pred_fallthru
      _
    // Predicated region
    $region10: #{tpu_custom_call.1} parent=1 // pred_check
      _
    $region11: #{tpu_custom_call.1} parent=1 // pred_check_branch
      %28 = sbr.rel (0) target = $region13
    $region12: #{tpu_custom_call.1} parent=1 // pred_region
      _
    $region13: #{tpu_custom_call.1} parent=1 // pred_fallthru
      _
    // Predicated region
    $region14: #{tpu_custom_call.1} parent=1 // pred_check
      _
    $region15: #{tpu_custom_call.1} parent=1 // pred_check_branch
      %30 = sbr.rel (0) target = $region17
    $region16: #{tpu_custom_call.1} parent=1 // pred_region
      _
    $region17: #{tpu_custom_call.1} parent=1 // pred_fallthru
      _
    // Predicated region
    $region18: #{tpu_custom_call.1} parent=1 // pred_check
      _
    $region19: #{tpu_custom_call.1} parent=1 // pred_check_branch
      %32 = sbr.rel (0) target = $region21
    $region20: #{tpu_custom_call.1} parent=1 // pred_region
      _
    $region21: #{tpu_custom_call.1} parent=1 // pred_fallthru
      _
    // Predicated region
    $region22: #{tpu_custom_call.1} parent=1 // pred_check
      _
    $region23: #{tpu_custom_call.1} parent=1 // pred_check_branch
      %34 = sbr.rel (0) target = $region25
    $region24: #{tpu_custom_call.1} parent=1 // pred_region
      _
    $region25: #{tpu_custom_call.1} parent=1 // pred_fallthru
      _
    // Predicated region
    $region26: #{tpu_custom_call.1} parent=1 // pred_check
      _
    $region27: #{tpu_custom_call.1} parent=1 // pred_check_branch
      %36 = sbr.rel (0) target = $region29
    $region28: #{tpu_custom_call.1} parent=1 // pred_region
      _
    $region29: #{tpu_custom_call.1} parent=1 // pred_fallthru
      _
    // Predicated region
    $region30: #{tpu_custom_call.1} parent=1 // pred_check
      _
    $region31: #{tpu_custom_call.1} parent=1 // pred_check_branch
      %38 = sbr.rel (0) target = $region33
    $region32: #{tpu_custom_call.1} parent=1 // pred_region
      _
    $region33: #{tpu_custom_call.1} parent=1 // pred_fallthru
      _
    // Predicated region
    $region34: #{tpu_custom_call.1} parent=1 // pred_check
      _
    $region35: #{tpu_custom_call.1} parent=1 // pred_check_branch
      %40 = sbr.rel (0) target = $region37
    $region36: #{tpu_custom_call.1} parent=1 // pred_region
      _
    $region37: #{tpu_custom_call.1} parent=1 // pred_fallthru
      _
    // Predicated region
    $region38: #{tpu_custom_call.1} parent=1 // pred_check
      _
    $region39: #{tpu_custom_call.1} parent=1 // pred_check_branch
      %42 = sbr.rel (0) target = $region41
    $region40: #{tpu_custom_call.1} parent=1 // pred_region
      _
    $region41: #{tpu_custom_call.1} parent=1 // pred_fallthru
      _
    // Predicated region
    $region42: #{tpu_custom_call.1} parent=1 // pred_check
      _
    $region43: #{tpu_custom_call.1} parent=1 // pred_check_branch
      %44 = sbr.rel (0) target = $region45
    $region44: #{tpu_custom_call.1} parent=1 // pred_region
      _
    $region45: #{tpu_custom_call.1} parent=1 // pred_fallthru
      _
    // Predicated region
    $region46: #{tpu_custom_call.1} parent=1 // pred_check
      _
    $region47: #{tpu_custom_call.1} parent=1 // pred_check_branch
      %46 = sbr.rel (0) target = $region49
    $region48: #{tpu_custom_call.1} parent=1 // pred_region
      _
    $region49: #{tpu_custom_call.1} parent=1 // pred_fallthru
      _
    // Predicated region
    $region50: #{tpu_custom_call.1} parent=1 // pred_check
      _
    $region51: #{tpu_custom_call.1} parent=1 // pred_check_branch
      %48 = sbr.rel (0) target = $region53
    $region52: #{tpu_custom_call.1} parent=1 // pred_region
      _
    $region53: #{tpu_custom_call.1} parent=1 // pred_fallthru
      _
    // Predicated region
    $region54: #{tpu_custom_call.1} parent=1 // pred_check
      _
    $region55: #{tpu_custom_call.1} parent=1 // pred_check_branch
      %50 = sbr.rel (0) target = $region57
    $region56: #{tpu_custom_call.1} parent=1 // pred_region
      _
    $region57: #{tpu_custom_call.1} parent=1 // pred_fallthru
      _
    // Predicated region
    $region58: #{tpu_custom_call.1} parent=1 // pred_check
      _
    $region59: #{tpu_custom_call.1} parent=1 // pred_check_branch
      %52 = sbr.rel (0) target = $region61
    $region60: #{tpu_custom_call.1} parent=1 // pred_region
      _
    $region61: #{tpu_custom_call.1} parent=1 // pred_fallthru
      _
    // Predicated region
    $region62: #{tpu_custom_call.1} parent=1 // pred_check
      _
    $region63: #{tpu_custom_call.1} parent=1 // pred_check_branch
      %54 = sbr.rel (0) target = $region65
    $region64: #{tpu_custom_call.1} parent=1 // pred_region
      _
    $region65: #{tpu_custom_call.1} parent=1 // pred_fallthru
      _
    // Predicated region
    $region66: #{tpu_custom_call.1} parent=1 // pred_check
      _
    $region67: #{tpu_custom_call.1} parent=1 // pred_check_branch
      %56 = sbr.rel (0) target = $region69
    $region68: #{tpu_custom_call.1} parent=1 // pred_region
      _
    $region69: #{tpu_custom_call.1} parent=1 // pred_fallthru
      _
    %v57 = vld [vmem:[%s0] sm:$0xff]
    %v58 = vld [vmem:[%s0 + $0x8] sm:$0xff]
    %v59 = vld [vmem:[%s0 + $0x10] sm:$0xff]
    %v60 = vld [vmem:[%s0 + $0x18] sm:$0xff]
    %v61 = vlaneseq
    %v62 = vshrl.u32 %v61, 7
    %v63 = vadd.s32 %v62, 8
    %v64 = vadd.s32 %v62, 16
    %v65 = vadd.s32 %v62, 24
    %vm66 = vcmp.lt.s32.totalorder %v62, 0
    %v67 = vsub.s32 0, %v62
    %v68 = vsel %vm66, %v67, %v62
    %v69 = vshrl.u32 %v68, 4
    %v70 = vand.u32 %v68, 15
    %v71 = vsub.s32 0, %v70
    %v72 = vsel %vm66, %v71, %v70
    %vm73 = vcmp.lt.s32.totalorder %v63, 0
    %v74 = vsub.s32 0, %v63
    %v75 = vsel %vm73, %v74, %v63
    %v76 = vshrl.u32 %v75, 4
    %v77 = vand.u32 %v75, 15
    %v78 = vsub.s32 0, %v77
    %v79 = vsel %vm73, %v78, %v77
    %vm80 = vcmp.lt.s32.totalorder %v64, 0
    %v81 = vsub.s32 0, %v64
    %v82 = vsel %vm80, %v81, %v64
    %v83 = vshrl.u32 %v82, 4
    %v84 = vand.u32 %v82, 15
    %v85 = vsub.s32 0, %v84
    %v86 = vsel %vm80, %v85, %v84
    %vm87 = vcmp.lt.s32.totalorder %v65, 0
    %v88 = vsub.s32 0, %v65
    %v89 = vsel %vm87, %v88, %v65
    %v90 = vshrl.u32 %v89, 4
    %v91 = vand.u32 %v89, 15
    %v92 = vsub.s32 0, %v91
    %v93 = vsel %vm87, %v92, %v91
    %vm94 = vcmp.ne.s32.totalorder %v72, 0
    %vm95 = vcmp.ne.s32.totalorder %v79, 0
    %vm96 = vcmp.ne.s32.totalorder %v86, 0
    %vm97 = vcmp.ne.s32.totalorder %v93, 0
    %vm98 = vcmp.lt.s32.totalorder %v72, 0
    %vm99 = vcmp.lt.s32.totalorder %v79, 0
    %vm100 = vcmp.lt.s32.totalorder %v86, 0
    %vm101 = vcmp.lt.s32.totalorder %v93, 0
    %vm102 = vmand %vm98, %vm94
    %vm103 = vmand %vm99, %vm95
    %vm104 = vmand %vm100, %vm96
    %vm105 = vmand %vm101, %vm97
    %v106 = vadd.s32 %v72, 16
    %v107 = vadd.s32 %v79, 16
    %v108 = vadd.s32 %v86, 16
    %v109 = vadd.s32 %v93, 16
    %v110 = vsel %vm102, %v106, %v72
    %v111 = vsel %vm103, %v107, %v79
    %v112 = vsel %vm104, %v108, %v86
    %v113 = vsel %vm105, %v109, %v93
    %v114 = vadd.s32 %v110, 4294967294
    %v115 = vadd.s32 %v111, 4294967294
    %v116 = vadd.s32 %v112, 4294967294
    %v117 = vadd.s32 %v113, 4294967294
    %vm118 = vcmp.ge.s32.totalorder %v114, 0
    %vm119 = vcmp.ge.s32.totalorder %v115, 0
    %vm120 = vcmp.ge.s32.totalorder %v116, 0
    %vm121 = vcmp.ge.s32.totalorder %v117, 0
    %vm122 = vcmp.lt.s32.totalorder %v114, 16
    %vm123 = vcmp.lt.s32.totalorder %v115, 16
    %vm124 = vcmp.lt.s32.totalorder %v116, 16
    %vm125 = vcmp.lt.s32.totalorder %v117, 16
    %vm126 = vmand %vm118, %vm122
    %vm127 = vmand %vm119, %vm123
    %vm128 = vmand %vm120, %vm124
    %vm129 = vmand %vm121, %vm125
    %v130 = vsel %vm126, 1, 0
    %v131 = vsel %vm127, 1, 0
    %v132 = vsel %vm128, 1, 0
    %v133 = vsel %vm129, 1, 0
    %v134 = vcvt.s32.f32 %v130
    %v135 = vcvt.s32.f32 %v131
    %v136 = vcvt.s32.f32 %v132
    %v137 = vcvt.s32.f32 %v133
    %v138 = vadd.s32 %v110, 2
    %v139 = vadd.s32 %v111, 2
    %v140 = vadd.s32 %v112, 2
    %v141 = vadd.s32 %v113, 2
    %vm142 = vcmp.ge.s32.totalorder %v138, 0
    %vm143 = vcmp.ge.s32.totalorder %v139, 0
    %vm144 = vcmp.ge.s32.totalorder %v140, 0
    %vm145 = vcmp.ge.s32.totalorder %v141, 0
    %vm146 = vcmp.lt.s32.totalorder %v138, 16
    %vm147 = vcmp.lt.s32.totalorder %v139, 16
    %vm148 = vcmp.lt.s32.totalorder %v140, 16
    %vm149 = vcmp.lt.s32.totalorder %v141, 16
    %vm150 = vmand %vm142, %vm146
    %vm151 = vmand %vm143, %vm147
    %vm152 = vmand %vm144, %vm148
    %vm153 = vmand %vm145, %vm149
    %v154 = vsel %vm150, 1, 0
    %v155 = vsel %vm151, 1, 0
    %v156 = vsel %vm152, 1, 0
    %v157 = vsel %vm153, 1, 0
    %v158 = vcvt.s32.f32 %v154
    %v159 = vcvt.s32.f32 %v155
    %v160 = vcvt.s32.f32 %v156
    %v161 = vcvt.s32.f32 %v157
    %v162 = vld [vmem:[%s1] sm:$0xff]
    %v163 = vld [vmem:[%s1 + $0x8] sm:$0xff]
    %v164 = vld [vmem:[%s1 + $0x10] sm:$0xff]
    %v165 = vld [vmem:[%s1 + $0x18] sm:$0xff]
    %v166 = vld [vmem:[%s2] sm:$0x1]
    %v168 = vlaneseq
    %v169 = vshrl.u32 %v168, 7
    %v170 = vsub.s32 0, %v169
    %v171 = vrot.slane %v166, %v170
    %vm173 = vcmask 261120
    %v175 = vsel %vm173, %v57, 0
    %v178 = vsel %vm173, %v58, 0
    %v181 = vsel %vm173, %v59, 0
    %v184 = vsel %vm173, %v60, 0
    %186 = vmatprep.subr.mxu0 0.0
    %187 = vmatpush1.msra.mxu0 0.0
    %188 = vmatprep.subr.mxu0 0.0
    %189 = vmatpush1.msra.mxu0 0.0
    %190 = vmatprep.subr.mxu0 0.0
    %191 = vmatpush1.msra.mxu0 0.0
    %192 = vmatprep.subr.mxu0 0.0
    %193 = vmatpush1.msra.mxu0 0.0
    %194 = vmatprep.subr.mxu0 0.0
    %195 = vmatpush1.msra.mxu0 0.0
    %196 = vmatprep.subr.mxu0 0.0
    %197 = vmatpush1.msra.mxu0 0.0
    %198 = vmatprep.subr.mxu0 0.0
    %199 = vmatpush1.msra.mxu0 0.0
    %200 = vmatprep.subr.mxu0 0.0
    %201 = vmatpush1.msra.mxu0 0.0
    %202 = vmatprep.subr.mxu0 0.0
    %203 = vmatpush1.msra.mxu0 0.0
    %204 = vmatprep.subr.mxu0 0.0
    %205 = vmatpush1.msra.mxu0 0.0
    %206 = vmatprep.subr.mxu0 0.0
    %207 = vmatpush1.msra.mxu0 0.0
    %208 = vmatprep.subr.mxu0 0.0
    %209 = vmatpush1.msra.mxu0 0.0
    %210 = vmatprep.subr.mxu0 0.0
    %211 = vmatpush1.msra.mxu0 %v165
    %212 = vmatprep.subr.mxu0 0.0
    %213 = vmatpush1.msra.mxu0 %v164
    %214 = vmatprep.subr.mxu0 0.0
    %215 = vmatpush1.msra.mxu0 %v163
    %216 = vmatprep.subr.mxu0 0.0
    %217 = vmatpush1.msra.mxu0 %v162
    %218 = vmatprep.subr.mxu0 0.0
    %219 = vmatpush2.msra.mxu0 0.0
    %220 = vmatprep.subr.mxu0 0.0
    %221 = vmatpush2.msra.mxu0 0.0
    %222 = vmatprep.subr.mxu0 0.0
    %223 = vmatpush2.msra.mxu0 0.0
    %224 = vmatprep.subr.mxu0 0.0
    %225 = vmatpush2.msra.mxu0 0.0
    %226 = vmatprep.subr.mxu0 0.0
    %227 = vmatpush2.msra.mxu0 0.0
    %228 = vmatprep.subr.mxu0 0.0
    %229 = vmatpush2.msra.mxu0 0.0
    %230 = vmatprep.subr.mxu0 0.0
    %231 = vmatpush2.msra.mxu0 0.0
    %232 = vmatprep.subr.mxu0 0.0
    %233 = vmatpush2.msra.mxu0 0.0
    %234 = vmatprep.subr.mxu0 0.0
    %235 = vmatpush2.msra.mxu0 0.0
    %236 = vmatprep.subr.mxu0 0.0
    %237 = vmatpush2.msra.mxu0 0.0
    %238 = vmatprep.subr.mxu0 0.0
    %239 = vmatpush2.msra.mxu0 0.0
    %240 = vmatprep.subr.mxu0 0.0
    %241 = vmatpush2.msra.mxu0 0.0
    %242 = vmatprep.subr.mxu0 0.0
    %243 = vmatpush2.msra.mxu0 0.0
    %244 = vmatprep.subr.mxu0 0.0
    %245 = vmatpush2.msra.mxu0 0.0
    %246 = vmatprep.subr.mxu0 0.0
    %247 = vmatpush2.msra.mxu0 0.0
    %248 = vmatprep.subr.mxu0 0.0
    %249 = vmatpush2.msra.mxu0 0.0
    %250 = vmatprep.mubr.f32.mxu0 0.0
    %251 = vmatmul.mubr.f32.gmra.mxu0 %v175
    %v252 = vpop.f32.mrf.mxu0
    %v253 = vadd.f32 %v171, %v252
    %v254 = vpop.f32.mrf.mxu0
    %255 = vmatprep.mubr.f32.mxu0 0.0
    %256 = vmatmul.mubr.f32.gmra.mxu0 %v178
    %v257 = vpop.f32.mrf.mxu0
    %v258 = vadd.f32 %v171, %v257
    %v259 = vpop.f32.mrf.mxu0
    %260 = vmatprep.mubr.f32.mxu0 0.0
    %261 = vmatmul.mubr.f32.gmra.mxu0 %v181
    %v262 = vpop.f32.mrf.mxu0
    %v263 = vadd.f32 %v171, %v262
    %v264 = vpop.f32.mrf.mxu0
    %265 = vmatprep.mubr.f32.mxu0 0.0
    %266 = vmatmul.mubr.f32.gmra.mxu0 %v184
    %v267 = vpop.f32.mrf.mxu0
    %v268 = vadd.f32 %v171, %v267
    %v269 = vpop.f32.mrf.mxu0
    %270 = vdwg.mxu0
    %v271 = vmax.f32 %v253, 0.0
    %v272 = vmax.f32 %v258, 0.0
    %v273 = vmax.f32 %v263, 0.0
    %v274 = vmax.f32 %v268, 0.0
    %v275 = vld [vmem:[%s3] sm:$0x1]
    %v276 = vld [vmem:[%s4] sm:$0x1]
    %v277 = vsel %vm173, %v271, 0.0
    %v278 = vsel %vm173, %v272, 0.0
    %v279 = vadd.f32 %v277, %v278
    %v280 = vsel %vm173, %v273, 0.0
    %v281 = vadd.f32 %v279, %v280
    %v282 = vsel %vm173, %v274, 0.0
    %v283 = vadd.f32 %v281, %v282
    %v284 = vrot.slane %v283, 4
    %v285 = vadd.f32 %v283, %v284
    %v286 = vrot.slane %v285, 2
    %v287 = vadd.f32 %v285, %v286
    %v288 = vrot.slane %v287, 1
    %v289 = vadd.f32 %v287, %v288
    %v290 = vrcp.pop 32.0
    %v291 = vmul.f32 %v289, %v290
    %v292 = vsub.f32 %v271, %v291
    %v293 = vsub.f32 %v272, %v291
    %v294 = vsub.f32 %v273, %v291
    %v295 = vsub.f32 %v274, %v291
    %v296 = vmul.f32 %v292, %v292
    %v297 = vmul.f32 %v293, %v293
    %v298 = vmul.f32 %v294, %v294
    %v299 = vmul.f32 %v295, %v295
    %v300 = vsel %vm173, %v296, 0.0
    %v301 = vsel %vm173, %v297, 0.0
    %v302 = vadd.f32 %v300, %v301
    %v303 = vsel %vm173, %v298, 0.0
    %v304 = vadd.f32 %v302, %v303
    %v305 = vsel %vm173, %v299, 0.0
    %v306 = vadd.f32 %v304, %v305
    %v307 = vrot.slane %v306, 4
    %v308 = vadd.f32 %v306, %v307
    %v309 = vrot.slane %v308, 2
    %v310 = vadd.f32 %v308, %v309
    %v311 = vrot.slane %v310, 1
    %v312 = vadd.f32 %v310, %v311
    %v313 = vmul.f32 %v312, %v290
    %v314 = vadd.f32 %v313, 1e-05
    %v315 = vrsqrt.pop %v314
    %v316 = vmul.f32 %v292, %v315
    %v317 = vmul.f32 %v293, %v315
    %v318 = vmul.f32 %v294, %v315
    %v319 = vmul.f32 %v295, %v315
    %v321 = vlaneseq
    %v322 = vshrl.u32 %v321, 7
    %v323 = vsub.s32 0, %v322
    %v324 = vrot.slane %v275, %v323
    %v326 = vmul.f32 %v316, %v324
    %v327 = vmul.f32 %v317, %v324
    %v328 = vmul.f32 %v318, %v324
    %v329 = vmul.f32 %v319, %v324
    %v331 = vlaneseq
    %v332 = vshrl.u32 %v331, 7
    %v333 = vsub.s32 0, %v332
    %v334 = vrot.slane %v276, %v333
    %v336 = vadd.f32 %v326, %v334
    %v337 = vadd.f32 %v327, %v334
    %v338 = vadd.f32 %v328, %v334
    %v339 = vadd.f32 %v329, %v334
    %vm344 = vcmask 1041408
    %v345 = vrot.slane %v336, 6
    %v346 = vrot.slane %v337, 6
    %v347 = vsel %vm344, %v345, %v346
    %v348 = vrot.slane %v338, 6
    %v349 = vsel %vm344, %v346, %v348
    %v350 = vrot.slane %v339, 6
    %v351 = vsel %vm344, %v348, %v350
    %v356 = vsel %vm344, 0.0, %v345
    %v357 = vmul.f32 %v356, %v134
    %v358 = vmul.f32 %v347, %v135
    %v359 = vmul.f32 %v349, %v136
    %v360 = vmul.f32 %v351, %v137
    %vm361 = vcmask 1045504
    %v362 = vrot.slane %v336, 2
    %v363 = vrot.slane %v337, 2
    %v364 = vsel %vm361, %v362, %v363
    %v365 = vrot.slane %v338, 2
    %v366 = vsel %vm361, %v363, %v365
    %v367 = vrot.slane %v339, 2
    %v368 = vsel %vm361, %v365, %v367
    %v373 = vsel %vm361, %v367, 0.0
    %v374 = vmul.f32 %v364, %v158
    %v375 = vmul.f32 %v366, %v159
    %v376 = vmul.f32 %v368, %v160
    %v377 = vmul.f32 %v373, %v161
    %378 = vrot.lane.b32.xlu0 %v336, 4
    %v379 = vpop.permute.xlu0 %378
    %380 = vrot.lane.b32.xlu0 %v337, 4
    %v381 = vpop.permute.xlu0 %380
    %382 = vrot.lane.b32.xlu0 %v338, 4
    %v383 = vpop.permute.xlu0 %382
    %384 = vrot.lane.b32.xlu0 %v339, 4
    %v385 = vpop.permute.xlu0 %384
    %394 = vrot.lane.b32.xlu0 %v374, 8
    %v395 = vpop.permute.xlu0 %394
    %396 = vrot.lane.b32.xlu0 %v375, 8
    %v397 = vpop.permute.xlu0 %396
    %398 = vrot.lane.b32.xlu0 %v376, 8
    %v399 = vpop.permute.xlu0 %398
    %400 = vrot.lane.b32.xlu0 %v377, 8
    %v401 = vpop.permute.xlu0 %400
    %vm406 = vcmask 31744
    %v407 = vsel %vm406, %v357, %v379
    %v408 = vsel %vm406, %v358, %v381
    %v409 = vsel %vm406, %v359, %v383
    %v410 = vsel %vm406, %v360, %v385
    %vm411 = vcmask 64512
    %v412 = vsel %vm411, %v407, %v395
    %v413 = vsel %vm411, %v408, %v397
    %v414 = vsel %vm411, %v409, %v399
    %v415 = vsel %vm411, %v410, %v401
    %v416 = vld [vmem:[%s5] sm:$0xff]
    %v417 = vld [vmem:[%s5 + $0x8] sm:$0xf]
    %v418 = vld [vmem:[%s6] sm:$0x1]
    %v419 = vlaneseq
    %v420 = vshrl.u32 %v419, 7
    %v421 = vsub.s32 0, %v420
    %v422 = vrot.slane %v418, %v421
    %vm423 = vcmask 97280
    %v425 = vsel %vm423, %v412, 0
    %v428 = vsel %vm423, %v413, 0
    %v431 = vsel %vm423, %v414, 0
    %v434 = vsel %vm423, %v415, 0
    %vm436 = vcmask 1043456
    %v438 = vsel %vm436, %v417, 0
    %440 = vmatprep.subr.mxu0 0.0
    %441 = vmatpush1.msra.mxu0 0.0
    %442 = vmatprep.subr.mxu0 0.0
    %443 = vmatpush1.msra.mxu0 0.0
    %444 = vmatprep.subr.mxu0 0.0
    %445 = vmatpush1.msra.mxu0 0.0
    %446 = vmatprep.subr.mxu0 0.0
    %447 = vmatpush1.msra.mxu0 0.0
    %448 = vmatprep.subr.mxu0 0.0
    %449 = vmatpush1.msra.mxu0 0.0
    %450 = vmatprep.subr.mxu0 0.0
    %451 = vmatpush1.msra.mxu0 0.0
    %452 = vmatprep.subr.mxu0 0.0
    %453 = vmatpush1.msra.mxu0 0.0
    %454 = vmatprep.subr.mxu0 0.0
    %455 = vmatpush1.msra.mxu0 0.0
    %456 = vmatprep.subr.mxu0 0.0
    %457 = vmatpush1.msra.mxu0 0.0
    %458 = vmatprep.subr.mxu0 0.0
    %459 = vmatpush1.msra.mxu0 0.0
    %460 = vmatprep.subr.mxu0 0.0
    %461 = vmatpush1.msra.mxu0 0.0
    %462 = vmatprep.subr.mxu0 0.0
    %463 = vmatpush1.msra.mxu0 0.0
    %464 = vmatprep.subr.mxu0 0.0
    %465 = vmatpush1.msra.mxu0 0.0
    %466 = vmatprep.subr.mxu0 0.0
    %467 = vmatpush1.msra.mxu0 0.0
    %468 = vmatprep.subr.mxu0 0.0
    %469 = vmatpush1.msra.mxu0 %v438
    %470 = vmatprep.subr.mxu0 0.0
    %471 = vmatpush1.msra.mxu0 %v416
    %472 = vmatprep.subr.mxu0 0.0
    %473 = vmatpush2.msra.mxu0 0.0
    %474 = vmatprep.subr.mxu0 0.0
    %475 = vmatpush2.msra.mxu0 0.0
    %476 = vmatprep.subr.mxu0 0.0
    %477 = vmatpush2.msra.mxu0 0.0
    %478 = vmatprep.subr.mxu0 0.0
    %479 = vmatpush2.msra.mxu0 0.0
    %480 = vmatprep.subr.mxu0 0.0
    %481 = vmatpush2.msra.mxu0 0.0
    %482 = vmatprep.subr.mxu0 0.0
    %483 = vmatpush2.msra.mxu0 0.0
    %484 = vmatprep.subr.mxu0 0.0
    %485 = vmatpush2.msra.mxu0 0.0
    %486 = vmatprep.subr.mxu0 0.0
    %487 = vmatpush2.msra.mxu0 0.0
    %488 = vmatprep.subr.mxu0 0.0
    %489 = vmatpush2.msra.mxu0 0.0
    %490 = vmatprep.subr.mxu0 0.0
    %491 = vmatpush2.msra.mxu0 0.0
    %492 = vmatprep.subr.mxu0 0.0
    %493 = vmatpush2.msra.mxu0 0.0
    %494 = vmatprep.subr.mxu0 0.0
    %495 = vmatpush2.msra.mxu0 0.0
    %496 = vmatprep.subr.mxu0 0.0
    %497 = vmatpush2.msra.mxu0 0.0
    %498 = vmatprep.subr.mxu0 0.0
    %499 = vmatpush2.msra.mxu0 0.0
    %500 = vmatprep.subr.mxu0 0.0
    %501 = vmatpush2.msra.mxu0 0.0
    %502 = vmatprep.subr.mxu0 0.0
    %503 = vmatpush2.msra.mxu0 0.0
    %504 = vmatprep.mubr.f32.mxu0 0.0
    %505 = vmatmul.mubr.f32.gmra.mxu0 %v425
    %v506 = vpop.f32.mrf.mxu0
    %v507 = vadd.f32 %v422, %v506
    %v508 = vpop.f32.mrf.mxu0
    %509 = vmatprep.mubr.f32.mxu0 0.0
    %510 = vmatmul.mubr.f32.gmra.mxu0 %v428
    %v511 = vpop.f32.mrf.mxu0
    %v512 = vadd.f32 %v422, %v511
    %v513 = vpop.f32.mrf.mxu0
    %514 = vmatprep.mubr.f32.mxu0 0.0
    %515 = vmatmul.mubr.f32.gmra.mxu0 %v431
    %v516 = vpop.f32.mrf.mxu0
    %v517 = vadd.f32 %v422, %v516
    %v518 = vpop.f32.mrf.mxu0
    %519 = vmatprep.mubr.f32.mxu0 0.0
    %520 = vmatmul.mubr.f32.gmra.mxu0 %v434
    %v521 = vpop.f32.mrf.mxu0
    %v522 = vadd.f32 %v422, %v521
    %v523 = vpop.f32.mrf.mxu0
    %524 = vdwg.mxu0
    %v525 = vmax.f32 %v507, 0.0
    %v526 = vmax.f32 %v512, 0.0
    %v527 = vmax.f32 %v517, 0.0
    %v528 = vmax.f32 %v522, 0.0
    %v529 = vld [vmem:[%s7] sm:$0x1]
    %v530 = vld [vmem:[%s8] sm:$0x1]
    %v531 = vsel %vm406, %v525, 0.0
    %v532 = vsel %vm406, %v526, 0.0
    %v533 = vadd.f32 %v531, %v532
    %v534 = vsel %vm406, %v527, 0.0
    %v535 = vadd.f32 %v533, %v534
    %v536 = vsel %vm406, %v528, 0.0
    %v537 = vadd.f32 %v535, %v536
    %v538 = vrot.slane %v537, 4
    %v539 = vadd.f32 %v537, %v538
    %v540 = vrot.slane %v539, 2
    %v541 = vadd.f32 %v539, %v540
    %v542 = vrot.slane %v541, 1
    %v543 = vadd.f32 %v541, %v542
    %v544 = vmul.f32 %v543, %v290
    %v545 = vsub.f32 %v525, %v544
    %v546 = vsub.f32 %v526, %v544
    %v547 = vsub.f32 %v527, %v544
    %v548 = vsub.f32 %v528, %v544
    %v549 = vmul.f32 %v545, %v545
    %v550 = vmul.f32 %v546, %v546
    %v551 = vmul.f32 %v547, %v547
    %v552 = vmul.f32 %v548, %v548
    %v553 = vsel %vm406, %v549, 0.0
    %v554 = vsel %vm406, %v550, 0.0
    %v555 = vadd.f32 %v553, %v554
    %v556 = vsel %vm406, %v551, 0.0
    %v557 = vadd.f32 %v555, %v556
    %v558 = vsel %vm406, %v552, 0.0
    %v559 = vadd.f32 %v557, %v558
    %v560 = vrot.slane %v559, 4
    %v561 = vadd.f32 %v559, %v560
    %v562 = vrot.slane %v561, 2
    %v563 = vadd.f32 %v561, %v562
    %v564 = vrot.slane %v563, 1
    %v565 = vadd.f32 %v563, %v564
    %v566 = vmul.f32 %v565, %v290
    %v567 = vadd.f32 %v566, 1e-05
    %v568 = vrsqrt.pop %v567
    %v569 = vmul.f32 %v545, %v568
    %v570 = vmul.f32 %v546, %v568
    %v571 = vmul.f32 %v547, %v568
    %v572 = vmul.f32 %v548, %v568
    %v573 = vlaneseq
    %v574 = vshrl.u32 %v573, 7
    %v575 = vsub.s32 0, %v574
    %v576 = vrot.slane %v529, %v575
    %v577 = vmul.f32 %v569, %v576
    %v578 = vmul.f32 %v570, %v576
    %v579 = vmul.f32 %v571, %v576
    %v580 = vmul.f32 %v572, %v576
    %v581 = vlaneseq
    %v582 = vshrl.u32 %v581, 7
    %v583 = vsub.s32 0, %v582
    %v584 = vrot.slane %v530, %v583
    %v585 = vadd.f32 %v577, %v584
    %v586 = vadd.f32 %v578, %v584
    %v587 = vadd.f32 %v579, %v584
    %v588 = vadd.f32 %v580, %v584
    %589 = vrot.lane.b32.xlu0 %v336, 124
    %v590 = vpop.permute.xlu0 %589
    %591 = vrot.lane.b32.xlu0 %v337, 124
    %v592 = vpop.permute.xlu0 %591
    %593 = vrot.lane.b32.xlu0 %v338, 124
    %v594 = vpop.permute.xlu0 %593
    %595 = vrot.lane.b32.xlu0 %v339, 124
    %v596 = vpop.permute.xlu0 %595
    %v601 = vadd.f32 %v585, %v590
    %v602 = vadd.f32 %v586, %v592
    %v603 = vadd.f32 %v587, %v594
    %v604 = vadd.f32 %v588, %v596
    %v609 = vrot.slane %v601, 6
    %v610 = vrot.slane %v602, 6
    %v611 = vsel %vm344, %v609, %v610
    %v612 = vrot.slane %v603, 6
    %v613 = vsel %vm344, %v610, %v612
    %v614 = vrot.slane %v604, 6
    %v615 = vsel %vm344, %v612, %v614
    %v620 = vsel %vm344, 0.0, %v609
    %v621 = vmul.f32 %v620, %v134
    %v622 = vmul.f32 %v611, %v135
    %v623 = vmul.f32 %v613, %v136
    %v624 = vmul.f32 %v615, %v137
    %v625 = vrot.slane %v601, 2
    %v626 = vrot.slane %v602, 2
    %v627 = vsel %vm361, %v625, %v626
    %v628 = vrot.slane %v603, 2
    %v629 = vsel %vm361, %v626, %v628
    %v630 = vrot.slane %v604, 2
    %v631 = vsel %vm361, %v628, %v630
    %v636 = vsel %vm361, %v630, 0.0
    %v637 = vmul.f32 %v627, %v158
    %v638 = vmul.f32 %v629, %v159
    %v639 = vmul.f32 %v631, %v160
    %v640 = vmul.f32 %v636, %v161
    %641 = vrot.lane.b32.xlu0 %v601, 4
    %v642 = vpop.permute.xlu0 %641
    %643 = vrot.lane.b32.xlu0 %v602, 4
    %v644 = vpop.permute.xlu0 %643
    %645 = vrot.lane.b32.xlu0 %v603, 4
    %v646 = vpop.permute.xlu0 %645
    %647 = vrot.lane.b32.xlu0 %v604, 4
    %v648 = vpop.permute.xlu0 %647
    %657 = vrot.lane.b32.xlu0 %v637, 8
    %v658 = vpop.permute.xlu0 %657
    %659 = vrot.lane.b32.xlu0 %v638, 8
    %v660 = vpop.permute.xlu0 %659
    %661 = vrot.lane.b32.xlu0 %v639, 8
    %v662 = vpop.permute.xlu0 %661
    %663 = vrot.lane.b32.xlu0 %v640, 8
    %v664 = vpop.permute.xlu0 %663
    %v669 = vsel %vm406, %v621, %v642
    %v670 = vsel %vm406, %v622, %v644
    %v671 = vsel %vm406, %v623, %v646
    %v672 = vsel %vm406, %v624, %v648
    %v673 = vsel %vm411, %v669, %v658
    %v674 = vsel %vm411, %v670, %v660
    %v675 = vsel %vm411, %v671, %v662
    %v676 = vsel %vm411, %v672, %v664
    %s677 = scalar_lea.vmem %s5, 16
    %v678 = vld [vmem:[%s677] sm:$0xff]
    %v679 = vld [vmem:[%s677 + $0x8] sm:$0xf]
    %v680 = vld [vmem:[%s6 + $0x1] sm:$0x1]
    %v681 = vlaneseq
    %v682 = vshrl.u32 %v681, 7
    %v683 = vsub.s32 0, %v682
    %v684 = vrot.slane %v680, %v683
    %v686 = vsel %vm423, %v673, 0
    %v689 = vsel %vm423, %v674, 0
    %v692 = vsel %vm423, %v675, 0
    %v695 = vsel %vm423, %v676, 0
    %v698 = vsel %vm436, %v679, 0
    %700 = vmatprep.subr.mxu0 0.0
    %701 = vmatpush1.msra.mxu0 0.0
    %702 = vmatprep.subr.mxu0 0.0
    %703 = vmatpush1.msra.mxu0 0.0
    %704 = vmatprep.subr.mxu0 0.0
    %705 = vmatpush1.msra.mxu0 0.0
    %706 = vmatprep.subr.mxu0 0.0
    %707 = vmatpush1.msra.mxu0 0.0
    %708 = vmatprep.subr.mxu0 0.0
    %709 = vmatpush1.msra.mxu0 0.0
    %710 = vmatprep.subr.mxu0 0.0
    %711 = vmatpush1.msra.mxu0 0.0
    %712 = vmatprep.subr.mxu0 0.0
    %713 = vmatpush1.msra.mxu0 0.0
    %714 = vmatprep.subr.mxu0 0.0
    %715 = vmatpush1.msra.mxu0 0.0
    %716 = vmatprep.subr.mxu0 0.0
    %717 = vmatpush1.msra.mxu0 0.0
    %718 = vmatprep.subr.mxu0 0.0
    %719 = vmatpush1.msra.mxu0 0.0
    %720 = vmatprep.subr.mxu0 0.0
    %721 = vmatpush1.msra.mxu0 0.0
    %722 = vmatprep.subr.mxu0 0.0
    %723 = vmatpush1.msra.mxu0 0.0
    %724 = vmatprep.subr.mxu0 0.0
    %725 = vmatpush1.msra.mxu0 0.0
    %726 = vmatprep.subr.mxu0 0.0
    %727 = vmatpush1.msra.mxu0 0.0
    %728 = vmatprep.subr.mxu0 0.0
    %729 = vmatpush1.msra.mxu0 %v698
    %730 = vmatprep.subr.mxu0 0.0
    %731 = vmatpush1.msra.mxu0 %v678
    %732 = vmatprep.subr.mxu0 0.0
    %733 = vmatpush2.msra.mxu0 0.0
    %734 = vmatprep.subr.mxu0 0.0
    %735 = vmatpush2.msra.mxu0 0.0
    %736 = vmatprep.subr.mxu0 0.0
    %737 = vmatpush2.msra.mxu0 0.0
    %738 = vmatprep.subr.mxu0 0.0
    %739 = vmatpush2.msra.mxu0 0.0
    %740 = vmatprep.subr.mxu0 0.0
    %741 = vmatpush2.msra.mxu0 0.0
    %742 = vmatprep.subr.mxu0 0.0
    %743 = vmatpush2.msra.mxu0 0.0
    %744 = vmatprep.subr.mxu0 0.0
    %745 = vmatpush2.msra.mxu0 0.0
    %746 = vmatprep.subr.mxu0 0.0
    %747 = vmatpush2.msra.mxu0 0.0
    %748 = vmatprep.subr.mxu0 0.0
    %749 = vmatpush2.msra.mxu0 0.0
    %750 = vmatprep.subr.mxu0 0.0
    %751 = vmatpush2.msra.mxu0 0.0
    %752 = vmatprep.subr.mxu0 0.0
    %753 = vmatpush2.msra.mxu0 0.0
    %754 = vmatprep.subr.mxu0 0.0
    %755 = vmatpush2.msra.mxu0 0.0
    %756 = vmatprep.subr.mxu0 0.0
    %757 = vmatpush2.msra.mxu0 0.0
    %758 = vmatprep.subr.mxu0 0.0
    %759 = vmatpush2.msra.mxu0 0.0
    %760 = vmatprep.subr.mxu0 0.0
    %761 = vmatpush2.msra.mxu0 0.0
    %762 = vmatprep.subr.mxu0 0.0
    %763 = vmatpush2.msra.mxu0 0.0
    %764 = vmatprep.mubr.f32.mxu0 0.0
    %765 = vmatmul.mubr.f32.gmra.mxu0 %v686
    %v766 = vpop.f32.mrf.mxu0
    %v767 = vadd.f32 %v684, %v766
    %v768 = vpop.f32.mrf.mxu0
    %769 = vmatprep.mubr.f32.mxu0 0.0
    %770 = vmatmul.mubr.f32.gmra.mxu0 %v689
    %v771 = vpop.f32.mrf.mxu0
    %v772 = vadd.f32 %v684, %v771
    %v773 = vpop.f32.mrf.mxu0
    %774 = vmatprep.mubr.f32.mxu0 0.0
    %775 = vmatmul.mubr.f32.gmra.mxu0 %v692
    %v776 = vpop.f32.mrf.mxu0
    %v777 = vadd.f32 %v684, %v776
    %v778 = vpop.f32.mrf.mxu0
    %779 = vmatprep.mubr.f32.mxu0 0.0
    %780 = vmatmul.mubr.f32.gmra.mxu0 %v695
    %v781 = vpop.f32.mrf.mxu0
    %v782 = vadd.f32 %v684, %v781
    %v783 = vpop.f32.mrf.mxu0
    %784 = vdwg.mxu0
    %v785 = vmax.f32 %v767, 0.0
    %v786 = vmax.f32 %v772, 0.0
    %v787 = vmax.f32 %v777, 0.0
    %v788 = vmax.f32 %v782, 0.0
    %v789 = vld [vmem:[%s7 + $0x1] sm:$0x1]
    %v790 = vld [vmem:[%s8 + $0x1] sm:$0x1]
    %v791 = vsel %vm406, %v785, 0.0
    %v792 = vsel %vm406, %v786, 0.0
    %v793 = vadd.f32 %v791, %v792
    %v794 = vsel %vm406, %v787, 0.0
    %v795 = vadd.f32 %v793, %v794
    %v796 = vsel %vm406, %v788, 0.0
    %v797 = vadd.f32 %v795, %v796
    %v798 = vrot.slane %v797, 4
    %v799 = vadd.f32 %v797, %v798
    %v800 = vrot.slane %v799, 2
    %v801 = vadd.f32 %v799, %v800
    %v802 = vrot.slane %v801, 1
    %v803 = vadd.f32 %v801, %v802
    %v804 = vmul.f32 %v803, %v290
    %v805 = vsub.f32 %v785, %v804
    %v806 = vsub.f32 %v786, %v804
    %v807 = vsub.f32 %v787, %v804
    %v808 = vsub.f32 %v788, %v804
    %v809 = vmul.f32 %v805, %v805
    %v810 = vmul.f32 %v806, %v806
    %v811 = vmul.f32 %v807, %v807
    %v812 = vmul.f32 %v808, %v808
    %v813 = vsel %vm406, %v809, 0.0
    %v814 = vsel %vm406, %v810, 0.0
    %v815 = vadd.f32 %v813, %v814
    %v816 = vsel %vm406, %v811, 0.0
    %v817 = vadd.f32 %v815, %v816
    %v818 = vsel %vm406, %v812, 0.0
    %v819 = vadd.f32 %v817, %v818
    %v820 = vrot.slane %v819, 4
    %v821 = vadd.f32 %v819, %v820
    %v822 = vrot.slane %v821, 2
    %v823 = vadd.f32 %v821, %v822
    %v824 = vrot.slane %v823, 1
    %v825 = vadd.f32 %v823, %v824
    %v826 = vmul.f32 %v825, %v290
    %v827 = vadd.f32 %v826, 1e-05
    %v828 = vrsqrt.pop %v827
    %v829 = vmul.f32 %v805, %v828
    %v830 = vmul.f32 %v806, %v828
    %v831 = vmul.f32 %v807, %v828
    %v832 = vmul.f32 %v808, %v828
    %v833 = vlaneseq
    %v834 = vshrl.u32 %v833, 7
    %v835 = vsub.s32 0, %v834
    %v836 = vrot.slane %v789, %v835
    %v837 = vmul.f32 %v829, %v836
    %v838 = vmul.f32 %v830, %v836
    %v839 = vmul.f32 %v831, %v836
    %v840 = vmul.f32 %v832, %v836
    %v841 = vlaneseq
    %v842 = vshrl.u32 %v841, 7
    %v843 = vsub.s32 0, %v842
    %v844 = vrot.slane %v790, %v843
    %v845 = vadd.f32 %v837, %v844
    %v846 = vadd.f32 %v838, %v844
    %v847 = vadd.f32 %v839, %v844
    %v848 = vadd.f32 %v840, %v844
    %849 = vrot.lane.b32.xlu0 %v336, 120
    %v850 = vpop.permute.xlu0 %849
    %851 = vrot.lane.b32.xlu0 %v337, 120
    %v852 = vpop.permute.xlu0 %851
    %853 = vrot.lane.b32.xlu0 %v338, 120
    %v854 = vpop.permute.xlu0 %853
    %855 = vrot.lane.b32.xlu0 %v339, 120
    %v856 = vpop.permute.xlu0 %855
    %v861 = vadd.f32 %v845, %v850
    %v862 = vadd.f32 %v846, %v852
    %v863 = vadd.f32 %v847, %v854
    %v864 = vadd.f32 %v848, %v856
    %v869 = vrot.slane %v861, 6
    %v870 = vrot.slane %v862, 6
    %v871 = vsel %vm344, %v869, %v870
    %v872 = vrot.slane %v863, 6
    %v873 = vsel %vm344, %v870, %v872
    %v874 = vrot.slane %v864, 6
    %v875 = vsel %vm344, %v872, %v874
    %v880 = vsel %vm344, 0.0, %v869
    %v881 = vmul.f32 %v880, %v134
    %v882 = vmul.f32 %v871, %v135
    %v883 = vmul.f32 %v873, %v136
    %v884 = vmul.f32 %v875, %v137
    %v885 = vrot.slane %v861, 2
    %v886 = vrot.slane %v862, 2
    %v887 = vsel %vm361, %v885, %v886
    %v888 = vrot.slane %v863, 2
    %v889 = vsel %vm361, %v886, %v888
    %v890 = vrot.slane %v864, 2
    %v891 = vsel %vm361, %v888, %v890
    %v896 = vsel %vm361, %v890, 0.0
    %v897 = vmul.f32 %v887, %v158
    %v898 = vmul.f32 %v889, %v159
    %v899 = vmul.f32 %v891, %v160
    %v900 = vmul.f32 %v896, %v161
    %901 = vrot.lane.b32.xlu0 %v861, 4
    %v902 = vpop.permute.xlu0 %901
    %903 = vrot.lane.b32.xlu0 %v862, 4
    %v904 = vpop.permute.xlu0 %903
    %905 = vrot.lane.b32.xlu0 %v863, 4
    %v906 = vpop.permute.xlu0 %905
    %907 = vrot.lane.b32.xlu0 %v864, 4
    %v908 = vpop.permute.xlu0 %907
    %917 = vrot.lane.b32.xlu0 %v897, 8
    %v918 = vpop.permute.xlu0 %917
    %919 = vrot.lane.b32.xlu0 %v898, 8
    %v920 = vpop.permute.xlu0 %919
    %921 = vrot.lane.b32.xlu0 %v899, 8
    %v922 = vpop.permute.xlu0 %921
    %923 = vrot.lane.b32.xlu0 %v900, 8
    %v924 = vpop.permute.xlu0 %923
    %v929 = vsel %vm406, %v881, %v902
    %v930 = vsel %vm406, %v882, %v904
    %v931 = vsel %vm406, %v883, %v906
    %v932 = vsel %vm406, %v884, %v908
    %v933 = vsel %vm411, %v929, %v918
    %v934 = vsel %vm411, %v930, %v920
    %v935 = vsel %vm411, %v931, %v922
    %v936 = vsel %vm411, %v932, %v924
    %s937 = scalar_lea.vmem %s5, 32
    %v938 = vld [vmem:[%s937] sm:$0xff]
    %v939 = vld [vmem:[%s937 + $0x8] sm:$0xf]
    %v940 = vld [vmem:[%s6 + $0x2] sm:$0x1]
    %v941 = vlaneseq
    %v942 = vshrl.u32 %v941, 7
    %v943 = vsub.s32 0, %v942
    %v944 = vrot.slane %v940, %v943
    %v946 = vsel %vm423, %v933, 0
    %v949 = vsel %vm423, %v934, 0
    %v952 = vsel %vm423, %v935, 0
    %v955 = vsel %vm423, %v936, 0
    %v958 = vsel %vm436, %v939, 0
    %960 = vmatprep.subr.mxu0 0.0
    %961 = vmatpush1.msra.mxu0 0.0
    %962 = vmatprep.subr.mxu0 0.0
    %963 = vmatpush1.msra.mxu0 0.0
    %964 = vmatprep.subr.mxu0 0.0
    %965 = vmatpush1.msra.mxu0 0.0
    %966 = vmatprep.subr.mxu0 0.0
    %967 = vmatpush1.msra.mxu0 0.0
    %968 = vmatprep.subr.mxu0 0.0
    %969 = vmatpush1.msra.mxu0 0.0
    %970 = vmatprep.subr.mxu0 0.0
    %971 = vmatpush1.msra.mxu0 0.0
    %972 = vmatprep.subr.mxu0 0.0
    %973 = vmatpush1.msra.mxu0 0.0
    %974 = vmatprep.subr.mxu0 0.0
    %975 = vmatpush1.msra.mxu0 0.0
    %976 = vmatprep.subr.mxu0 0.0
    %977 = vmatpush1.msra.mxu0 0.0
    %978 = vmatprep.subr.mxu0 0.0
    %979 = vmatpush1.msra.mxu0 0.0
    %980 = vmatprep.subr.mxu0 0.0
    %981 = vmatpush1.msra.mxu0 0.0
    %982 = vmatprep.subr.mxu0 0.0
    %983 = vmatpush1.msra.mxu0 0.0
    %984 = vmatprep.subr.mxu0 0.0
    %985 = vmatpush1.msra.mxu0 0.0
    %986 = vmatprep.subr.mxu0 0.0
    %987 = vmatpush1.msra.mxu0 0.0
    %988 = vmatprep.subr.mxu0 0.0
    %989 = vmatpush1.msra.mxu0 %v958
    %990 = vmatprep.subr.mxu0 0.0
    %991 = vmatpush1.msra.mxu0 %v938
    %992 = vmatprep.subr.mxu0 0.0
    %993 = vmatpush2.msra.mxu0 0.0
    %994 = vmatprep.subr.mxu0 0.0
    %995 = vmatpush2.msra.mxu0 0.0
    %996 = vmatprep.subr.mxu0 0.0
    %997 = vmatpush2.msra.mxu0 0.0
    %998 = vmatprep.subr.mxu0 0.0
    %999 = vmatpush2.msra.mxu0 0.0
    %1000 = vmatprep.subr.mxu0 0.0
    %1001 = vmatpush2.msra.mxu0 0.0
    %1002 = vmatprep.subr.mxu0 0.0
    %1003 = vmatpush2.msra.mxu0 0.0
    %1004 = vmatprep.subr.mxu0 0.0
    %1005 = vmatpush2.msra.mxu0 0.0
    %1006 = vmatprep.subr.mxu0 0.0
    %1007 = vmatpush2.msra.mxu0 0.0
    %1008 = vmatprep.subr.mxu0 0.0
    %1009 = vmatpush2.msra.mxu0 0.0
    %1010 = vmatprep.subr.mxu0 0.0
    %1011 = vmatpush2.msra.mxu0 0.0
    %1012 = vmatprep.subr.mxu0 0.0
    %1013 = vmatpush2.msra.mxu0 0.0
    %1014 = vmatprep.subr.mxu0 0.0
    %1015 = vmatpush2.msra.mxu0 0.0
    %1016 = vmatprep.subr.mxu0 0.0
    %1017 = vmatpush2.msra.mxu0 0.0
    %1018 = vmatprep.subr.mxu0 0.0
    %1019 = vmatpush2.msra.mxu0 0.0
    %1020 = vmatprep.subr.mxu0 0.0
    %1021 = vmatpush2.msra.mxu0 0.0
    %1022 = vmatprep.subr.mxu0 0.0
    %1023 = vmatpush2.msra.mxu0 0.0
    %1024 = vmatprep.mubr.f32.mxu0 0.0
    %1025 = vmatmul.mubr.f32.gmra.mxu0 %v946
    %v1026 = vpop.f32.mrf.mxu0
    %v1027 = vadd.f32 %v944, %v1026
    %v1028 = vpop.f32.mrf.mxu0
    %1029 = vmatprep.mubr.f32.mxu0 0.0
    %1030 = vmatmul.mubr.f32.gmra.mxu0 %v949
    %v1031 = vpop.f32.mrf.mxu0
    %v1032 = vadd.f32 %v944, %v1031
    %v1033 = vpop.f32.mrf.mxu0
    %1034 = vmatprep.mubr.f32.mxu0 0.0
    %1035 = vmatmul.mubr.f32.gmra.mxu0 %v952
    %v1036 = vpop.f32.mrf.mxu0
    %v1037 = vadd.f32 %v944, %v1036
    %v1038 = vpop.f32.mrf.mxu0
    %1039 = vmatprep.mubr.f32.mxu0 0.0
    %1040 = vmatmul.mubr.f32.gmra.mxu0 %v955
    %v1041 = vpop.f32.mrf.mxu0
    %v1042 = vadd.f32 %v944, %v1041
    %v1043 = vpop.f32.mrf.mxu0
    %1044 = vdwg.mxu0
    %v1045 = vmax.f32 %v1027, 0.0
    %v1046 = vmax.f32 %v1032, 0.0
    %v1047 = vmax.f32 %v1037, 0.0
    %v1048 = vmax.f32 %v1042, 0.0
    %v1049 = vld [vmem:[%s7 + $0x2] sm:$0x1]
    %v1050 = vld [vmem:[%s8 + $0x2] sm:$0x1]
    %v1051 = vsel %vm406, %v1045, 0.0
    %v1052 = vsel %vm406, %v1046, 0.0
    %v1053 = vadd.f32 %v1051, %v1052
    %v1054 = vsel %vm406, %v1047, 0.0
    %v1055 = vadd.f32 %v1053, %v1054
    %v1056 = vsel %vm406, %v1048, 0.0
    %v1057 = vadd.f32 %v1055, %v1056
    %v1058 = vrot.slane %v1057, 4
    %v1059 = vadd.f32 %v1057, %v1058
    %v1060 = vrot.slane %v1059, 2
    %v1061 = vadd.f32 %v1059, %v1060
    %v1062 = vrot.slane %v1061, 1
    %v1063 = vadd.f32 %v1061, %v1062
    %v1064 = vmul.f32 %v1063, %v290
    %v1065 = vsub.f32 %v1045, %v1064
    %v1066 = vsub.f32 %v1046, %v1064
    %v1067 = vsub.f32 %v1047, %v1064
    %v1068 = vsub.f32 %v1048, %v1064
    %v1069 = vmul.f32 %v1065, %v1065
    %v1070 = vmul.f32 %v1066, %v1066
    %v1071 = vmul.f32 %v1067, %v1067
    %v1072 = vmul.f32 %v1068, %v1068
    %v1073 = vsel %vm406, %v1069, 0.0
    %v1074 = vsel %vm406, %v1070, 0.0
    %v1075 = vadd.f32 %v1073, %v1074
    %v1076 = vsel %vm406, %v1071, 0.0
    %v1077 = vadd.f32 %v1075, %v1076
    %v1078 = vsel %vm406, %v1072, 0.0
    %v1079 = vadd.f32 %v1077, %v1078
    %v1080 = vrot.slane %v1079, 4
    %v1081 = vadd.f32 %v1079, %v1080
    %v1082 = vrot.slane %v1081, 2
    %v1083 = vadd.f32 %v1081, %v1082
    %v1084 = vrot.slane %v1083, 1
    %v1085 = vadd.f32 %v1083, %v1084
    %v1086 = vmul.f32 %v1085, %v290
    %v1087 = vadd.f32 %v1086, 1e-05
    %v1088 = vrsqrt.pop %v1087
    %v1089 = vmul.f32 %v1065, %v1088
    %v1090 = vmul.f32 %v1066, %v1088
    %v1091 = vmul.f32 %v1067, %v1088
    %v1092 = vmul.f32 %v1068, %v1088
    %v1093 = vlaneseq
    %v1094 = vshrl.u32 %v1093, 7
    %v1095 = vsub.s32 0, %v1094
    %v1096 = vrot.slane %v1049, %v1095
    %v1097 = vmul.f32 %v1089, %v1096
    %v1098 = vmul.f32 %v1090, %v1096
    %v1099 = vmul.f32 %v1091, %v1096
    %v1100 = vmul.f32 %v1092, %v1096
    %v1101 = vlaneseq
    %v1102 = vshrl.u32 %v1101, 7
    %v1103 = vsub.s32 0, %v1102
    %v1104 = vrot.slane %v1050, %v1103
    %v1105 = vadd.f32 %v1097, %v1104
    %v1106 = vadd.f32 %v1098, %v1104
    %v1107 = vadd.f32 %v1099, %v1104
    %v1108 = vadd.f32 %v1100, %v1104
    %1109 = vrot.lane.b32.xlu0 %v336, 116
    %v1110 = vpop.permute.xlu0 %1109
    %1111 = vrot.lane.b32.xlu0 %v337, 116
    %v1112 = vpop.permute.xlu0 %1111
    %1113 = vrot.lane.b32.xlu0 %v338, 116
    %v1114 = vpop.permute.xlu0 %1113
    %1115 = vrot.lane.b32.xlu0 %v339, 116
    %v1116 = vpop.permute.xlu0 %1115
    %v1121 = vadd.f32 %v1105, %v1110
    %v1122 = vadd.f32 %v1106, %v1112
    %v1123 = vadd.f32 %v1107, %v1114
    %v1124 = vadd.f32 %v1108, %v1116
    %v1129 = vrot.slane %v1121, 6
    %v1130 = vrot.slane %v1122, 6
    %v1131 = vsel %vm344, %v1129, %v1130
    %v1132 = vrot.slane %v1123, 6
    %v1133 = vsel %vm344, %v1130, %v1132
    %v1134 = vrot.slane %v1124, 6
    %v1135 = vsel %vm344, %v1132, %v1134
    %v1140 = vsel %vm344, 0.0, %v1129
    %v1141 = vmul.f32 %v1140, %v134
    %v1142 = vmul.f32 %v1131, %v135
    %v1143 = vmul.f32 %v1133, %v136
    %v1144 = vmul.f32 %v1135, %v137
    %v1145 = vrot.slane %v1121, 2
    %v1146 = vrot.slane %v1122, 2
    %v1147 = vsel %vm361, %v1145, %v1146
    %v1148 = vrot.slane %v1123, 2
    %v1149 = vsel %vm361, %v1146, %v1148
    %v1150 = vrot.slane %v1124, 2
    %v1151 = vsel %vm361, %v1148, %v1150
    %v1156 = vsel %vm361, %v1150, 0.0
    %v1157 = vmul.f32 %v1147, %v158
    %v1158 = vmul.f32 %v1149, %v159
    %v1159 = vmul.f32 %v1151, %v160
    %v1160 = vmul.f32 %v1156, %v161
    %1161 = vrot.lane.b32.xlu0 %v1121, 4
    %v1162 = vpop.permute.xlu0 %1161
    %1163 = vrot.lane.b32.xlu0 %v1122, 4
    %v1164 = vpop.permute.xlu0 %1163
    %1165 = vrot.lane.b32.xlu0 %v1123, 4
    %v1166 = vpop.permute.xlu0 %1165
    %1167 = vrot.lane.b32.xlu0 %v1124, 4
    %v1168 = vpop.permute.xlu0 %1167
    %1177 = vrot.lane.b32.xlu0 %v1157, 8
    %v1178 = vpop.permute.xlu0 %1177
    %1179 = vrot.lane.b32.xlu0 %v1158, 8
    %v1180 = vpop.permute.xlu0 %1179
    %1181 = vrot.lane.b32.xlu0 %v1159, 8
    %v1182 = vpop.permute.xlu0 %1181
    %1183 = vrot.lane.b32.xlu0 %v1160, 8
    %v1184 = vpop.permute.xlu0 %1183
    %v1189 = vsel %vm406, %v1141, %v1162
    %v1190 = vsel %vm406, %v1142, %v1164
    %v1191 = vsel %vm406, %v1143, %v1166
    %v1192 = vsel %vm406, %v1144, %v1168
    %v1193 = vsel %vm411, %v1189, %v1178
    %v1194 = vsel %vm411, %v1190, %v1180
    %v1195 = vsel %vm411, %v1191, %v1182
    %v1196 = vsel %vm411, %v1192, %v1184
    %s1197 = scalar_lea.vmem %s5, 48
    %v1198 = vld [vmem:[%s1197] sm:$0xff]
    %v1199 = vld [vmem:[%s1197 + $0x8] sm:$0xf]
    %v1200 = vld [vmem:[%s6 + $0x3] sm:$0x1]
    %v1201 = vlaneseq
    %v1202 = vshrl.u32 %v1201, 7
    %v1203 = vsub.s32 0, %v1202
    %v1204 = vrot.slane %v1200, %v1203
    %v1206 = vsel %vm423, %v1193, 0
    %v1209 = vsel %vm423, %v1194, 0
    %v1212 = vsel %vm423, %v1195, 0
    %v1215 = vsel %vm423, %v1196, 0
    %v1218 = vsel %vm436, %v1199, 0
    %1220 = vmatprep.subr.mxu0 0.0
    %1221 = vmatpush1.msra.mxu0 0.0
    %1222 = vmatprep.subr.mxu0 0.0
    %1223 = vmatpush1.msra.mxu0 0.0
    %1224 = vmatprep.subr.mxu0 0.0
    %1225 = vmatpush1.msra.mxu0 0.0
    %1226 = vmatprep.subr.mxu0 0.0
    %1227 = vmatpush1.msra.mxu0 0.0
    %1228 = vmatprep.subr.mxu0 0.0
    %1229 = vmatpush1.msra.mxu0 0.0
    %1230 = vmatprep.subr.mxu0 0.0
    %1231 = vmatpush1.msra.mxu0 0.0
    %1232 = vmatprep.subr.mxu0 0.0
    %1233 = vmatpush1.msra.mxu0 0.0
    %1234 = vmatprep.subr.mxu0 0.0
    %1235 = vmatpush1.msra.mxu0 0.0
    %1236 = vmatprep.subr.mxu0 0.0
    %1237 = vmatpush1.msra.mxu0 0.0
    %1238 = vmatprep.subr.mxu0 0.0
    %1239 = vmatpush1.msra.mxu0 0.0
    %1240 = vmatprep.subr.mxu0 0.0
    %1241 = vmatpush1.msra.mxu0 0.0
    %1242 = vmatprep.subr.mxu0 0.0
    %1243 = vmatpush1.msra.mxu0 0.0
    %1244 = vmatprep.subr.mxu0 0.0
    %1245 = vmatpush1.msra.mxu0 0.0
    %1246 = vmatprep.subr.mxu0 0.0
    %1247 = vmatpush1.msra.mxu0 0.0
    %1248 = vmatprep.subr.mxu0 0.0
    %1249 = vmatpush1.msra.mxu0 %v1218
    %1250 = vmatprep.subr.mxu0 0.0
    %1251 = vmatpush1.msra.mxu0 %v1198
    %1252 = vmatprep.subr.mxu0 0.0
    %1253 = vmatpush2.msra.mxu0 0.0
    %1254 = vmatprep.subr.mxu0 0.0
    %1255 = vmatpush2.msra.mxu0 0.0
    %1256 = vmatprep.subr.mxu0 0.0
    %1257 = vmatpush2.msra.mxu0 0.0
    %1258 = vmatprep.subr.mxu0 0.0
    %1259 = vmatpush2.msra.mxu0 0.0
    %1260 = vmatprep.subr.mxu0 0.0
    %1261 = vmatpush2.msra.mxu0 0.0
    %1262 = vmatprep.subr.mxu0 0.0
    %1263 = vmatpush2.msra.mxu0 0.0
    %1264 = vmatprep.subr.mxu0 0.0
    %1265 = vmatpush2.msra.mxu0 0.0
    %1266 = vmatprep.subr.mxu0 0.0
    %1267 = vmatpush2.msra.mxu0 0.0
    %1268 = vmatprep.subr.mxu0 0.0
    %1269 = vmatpush2.msra.mxu0 0.0
    %1270 = vmatprep.subr.mxu0 0.0
    %1271 = vmatpush2.msra.mxu0 0.0
    %1272 = vmatprep.subr.mxu0 0.0
    %1273 = vmatpush2.msra.mxu0 0.0
    %1274 = vmatprep.subr.mxu0 0.0
    %1275 = vmatpush2.msra.mxu0 0.0
    %1276 = vmatprep.subr.mxu0 0.0
    %1277 = vmatpush2.msra.mxu0 0.0
    %1278 = vmatprep.subr.mxu0 0.0
    %1279 = vmatpush2.msra.mxu0 0.0
    %1280 = vmatprep.subr.mxu0 0.0
    %1281 = vmatpush2.msra.mxu0 0.0
    %1282 = vmatprep.subr.mxu0 0.0
    %1283 = vmatpush2.msra.mxu0 0.0
    %1284 = vmatprep.mubr.f32.mxu0 0.0
    %1285 = vmatmul.mubr.f32.gmra.mxu0 %v1206
    %v1286 = vpop.f32.mrf.mxu0
    %v1287 = vadd.f32 %v1204, %v1286
    %v1288 = vpop.f32.mrf.mxu0
    %1289 = vmatprep.mubr.f32.mxu0 0.0
    %1290 = vmatmul.mubr.f32.gmra.mxu0 %v1209
    %v1291 = vpop.f32.mrf.mxu0
    %v1292 = vadd.f32 %v1204, %v1291
    %v1293 = vpop.f32.mrf.mxu0
    %1294 = vmatprep.mubr.f32.mxu0 0.0
    %1295 = vmatmul.mubr.f32.gmra.mxu0 %v1212
    %v1296 = vpop.f32.mrf.mxu0
    %v1297 = vadd.f32 %v1204, %v1296
    %v1298 = vpop.f32.mrf.mxu0
    %1299 = vmatprep.mubr.f32.mxu0 0.0
    %1300 = vmatmul.mubr.f32.gmra.mxu0 %v1215
    %v1301 = vpop.f32.mrf.mxu0
    %v1302 = vadd.f32 %v1204, %v1301
    %v1303 = vpop.f32.mrf.mxu0
    %1304 = vdwg.mxu0
    %v1305 = vmax.f32 %v1287, 0.0
    %v1306 = vmax.f32 %v1292, 0.0
    %v1307 = vmax.f32 %v1297, 0.0
    %v1308 = vmax.f32 %v1302, 0.0
    %v1309 = vld [vmem:[%s7 + $0x3] sm:$0x1]
    %v1310 = vld [vmem:[%s8 + $0x3] sm:$0x1]
    %v1311 = vsel %vm406, %v1305, 0.0
    %v1312 = vsel %vm406, %v1306, 0.0
    %v1313 = vadd.f32 %v1311, %v1312
    %v1314 = vsel %vm406, %v1307, 0.0
    %v1315 = vadd.f32 %v1313, %v1314
    %v1316 = vsel %vm406, %v1308, 0.0
    %v1317 = vadd.f32 %v1315, %v1316
    %v1318 = vrot.slane %v1317, 4
    %v1319 = vadd.f32 %v1317, %v1318
    %v1320 = vrot.slane %v1319, 2
    %v1321 = vadd.f32 %v1319, %v1320
    %v1322 = vrot.slane %v1321, 1
    %v1323 = vadd.f32 %v1321, %v1322
    %v1324 = vmul.f32 %v1323, %v290
    %v1325 = vsub.f32 %v1305, %v1324
    %v1326 = vsub.f32 %v1306, %v1324
    %v1327 = vsub.f32 %v1307, %v1324
    %v1328 = vsub.f32 %v1308, %v1324
    %v1329 = vmul.f32 %v1325, %v1325
    %v1330 = vmul.f32 %v1326, %v1326
    %v1331 = vmul.f32 %v1327, %v1327
    %v1332 = vmul.f32 %v1328, %v1328
    %v1333 = vsel %vm406, %v1329, 0.0
    %v1334 = vsel %vm406, %v1330, 0.0
    %v1335 = vadd.f32 %v1333, %v1334
    %v1336 = vsel %vm406, %v1331, 0.0
    %v1337 = vadd.f32 %v1335, %v1336
    %v1338 = vsel %vm406, %v1332, 0.0
    %v1339 = vadd.f32 %v1337, %v1338
    %v1340 = vrot.slane %v1339, 4
    %v1341 = vadd.f32 %v1339, %v1340
    %v1342 = vrot.slane %v1341, 2
    %v1343 = vadd.f32 %v1341, %v1342
    %v1344 = vrot.slane %v1343, 1
    %v1345 = vadd.f32 %v1343, %v1344
    %v1346 = vmul.f32 %v1345, %v290
    %v1347 = vadd.f32 %v1346, 1e-05
    %v1348 = vrsqrt.pop %v1347
    %v1349 = vmul.f32 %v1325, %v1348
    %v1350 = vmul.f32 %v1326, %v1348
    %v1351 = vmul.f32 %v1327, %v1348
    %v1352 = vmul.f32 %v1328, %v1348
    %v1353 = vlaneseq
    %v1354 = vshrl.u32 %v1353, 7
    %v1355 = vsub.s32 0, %v1354
    %v1356 = vrot.slane %v1309, %v1355
    %v1357 = vmul.f32 %v1349, %v1356
    %v1358 = vmul.f32 %v1350, %v1356
    %v1359 = vmul.f32 %v1351, %v1356
    %v1360 = vmul.f32 %v1352, %v1356
    %v1361 = vlaneseq
    %v1362 = vshrl.u32 %v1361, 7
    %v1363 = vsub.s32 0, %v1362
    %v1364 = vrot.slane %v1310, %v1363
    %v1365 = vadd.f32 %v1357, %v1364
    %v1366 = vadd.f32 %v1358, %v1364
    %v1367 = vadd.f32 %v1359, %v1364
    %v1368 = vadd.f32 %v1360, %v1364
    %1369 = vrot.lane.b32.xlu0 %v336, 112
    %v1370 = vpop.permute.xlu0 %1369
    %1371 = vrot.lane.b32.xlu0 %v337, 112
    %v1372 = vpop.permute.xlu0 %1371
    %1373 = vrot.lane.b32.xlu0 %v338, 112
    %v1374 = vpop.permute.xlu0 %1373
    %1375 = vrot.lane.b32.xlu0 %v339, 112
    %v1376 = vpop.permute.xlu0 %1375
    %v1381 = vadd.f32 %v1365, %v1370
    %v1382 = vadd.f32 %v1366, %v1372
    %v1383 = vadd.f32 %v1367, %v1374
    %v1384 = vadd.f32 %v1368, %v1376
    %v1389 = vrot.slane %v1381, 6
    %v1390 = vrot.slane %v1382, 6
    %v1391 = vsel %vm344, %v1389, %v1390
    %v1392 = vrot.slane %v1383, 6
    %v1393 = vsel %vm344, %v1390, %v1392
    %v1394 = vrot.slane %v1384, 6
    %v1395 = vsel %vm344, %v1392, %v1394
    %v1400 = vsel %vm344, 0.0, %v1389
    %v1401 = vmul.f32 %v1400, %v134
    %v1402 = vmul.f32 %v1391, %v135
    %v1403 = vmul.f32 %v1393, %v136
    %v1404 = vmul.f32 %v1395, %v137
    %v1405 = vrot.slane %v1381, 2
    %v1406 = vrot.slane %v1382, 2
    %v1407 = vsel %vm361, %v1405, %v1406
    %v1408 = vrot.slane %v1383, 2
    %v1409 = vsel %vm361, %v1406, %v1408
    %v1410 = vrot.slane %v1384, 2
    %v1411 = vsel %vm361, %v1408, %v1410
    %v1416 = vsel %vm361, %v1410, 0.0
    %v1417 = vmul.f32 %v1407, %v158
    %v1418 = vmul.f32 %v1409, %v159
    %v1419 = vmul.f32 %v1411, %v160
    %v1420 = vmul.f32 %v1416, %v161
    %1421 = vrot.lane.b32.xlu0 %v1381, 4
    %v1422 = vpop.permute.xlu0 %1421
    %1423 = vrot.lane.b32.xlu0 %v1382, 4
    %v1424 = vpop.permute.xlu0 %1423
    %1425 = vrot.lane.b32.xlu0 %v1383, 4
    %v1426 = vpop.permute.xlu0 %1425
    %1427 = vrot.lane.b32.xlu0 %v1384, 4
    %v1428 = vpop.permute.xlu0 %1427
    %1437 = vrot.lane.b32.xlu0 %v1417, 8
    %v1438 = vpop.permute.xlu0 %1437
    %1439 = vrot.lane.b32.xlu0 %v1418, 8
    %v1440 = vpop.permute.xlu0 %1439
    %1441 = vrot.lane.b32.xlu0 %v1419, 8
    %v1442 = vpop.permute.xlu0 %1441
    %1443 = vrot.lane.b32.xlu0 %v1420, 8
    %v1444 = vpop.permute.xlu0 %1443
    %v1449 = vsel %vm406, %v1401, %v1422
    %v1450 = vsel %vm406, %v1402, %v1424
    %v1451 = vsel %vm406, %v1403, %v1426
    %v1452 = vsel %vm406, %v1404, %v1428
    %v1453 = vsel %vm411, %v1449, %v1438
    %v1454 = vsel %vm411, %v1450, %v1440
    %v1455 = vsel %vm411, %v1451, %v1442
    %v1456 = vsel %vm411, %v1452, %v1444
    %s1457 = scalar_lea.vmem %s5, 64
    %v1458 = vld [vmem:[%s1457] sm:$0xff]
    %v1459 = vld [vmem:[%s1457 + $0x8] sm:$0xf]
    %v1460 = vld [vmem:[%s6 + $0x4] sm:$0x1]
    %v1461 = vlaneseq
    %v1462 = vshrl.u32 %v1461, 7
    %v1463 = vsub.s32 0, %v1462
    %v1464 = vrot.slane %v1460, %v1463
    %v1466 = vsel %vm423, %v1453, 0
    %v1469 = vsel %vm423, %v1454, 0
    %v1472 = vsel %vm423, %v1455, 0
    %v1475 = vsel %vm423, %v1456, 0
    %v1478 = vsel %vm436, %v1459, 0
    %1480 = vmatprep.subr.mxu0 0.0
    %1481 = vmatpush1.msra.mxu0 0.0
    %1482 = vmatprep.subr.mxu0 0.0
    %1483 = vmatpush1.msra.mxu0 0.0
    %1484 = vmatprep.subr.mxu0 0.0
    %1485 = vmatpush1.msra.mxu0 0.0
    %1486 = vmatprep.subr.mxu0 0.0
    %1487 = vmatpush1.msra.mxu0 0.0
    %1488 = vmatprep.subr.mxu0 0.0
    %1489 = vmatpush1.msra.mxu0 0.0
    %1490 = vmatprep.subr.mxu0 0.0
    %1491 = vmatpush1.msra.mxu0 0.0
    %1492 = vmatprep.subr.mxu0 0.0
    %1493 = vmatpush1.msra.mxu0 0.0
    %1494 = vmatprep.subr.mxu0 0.0
    %1495 = vmatpush1.msra.mxu0 0.0
    %1496 = vmatprep.subr.mxu0 0.0
    %1497 = vmatpush1.msra.mxu0 0.0
    %1498 = vmatprep.subr.mxu0 0.0
    %1499 = vmatpush1.msra.mxu0 0.0
    %1500 = vmatprep.subr.mxu0 0.0
    %1501 = vmatpush1.msra.mxu0 0.0
    %1502 = vmatprep.subr.mxu0 0.0
    %1503 = vmatpush1.msra.mxu0 0.0
    %1504 = vmatprep.subr.mxu0 0.0
    %1505 = vmatpush1.msra.mxu0 0.0
    %1506 = vmatprep.subr.mxu0 0.0
    %1507 = vmatpush1.msra.mxu0 0.0
    %1508 = vmatprep.subr.mxu0 0.0
    %1509 = vmatpush1.msra.mxu0 %v1478
    %1510 = vmatprep.subr.mxu0 0.0
    %1511 = vmatpush1.msra.mxu0 %v1458
    %1512 = vmatprep.subr.mxu0 0.0
    %1513 = vmatpush2.msra.mxu0 0.0
    %1514 = vmatprep.subr.mxu0 0.0
    %1515 = vmatpush2.msra.mxu0 0.0
    %1516 = vmatprep.subr.mxu0 0.0
    %1517 = vmatpush2.msra.mxu0 0.0
    %1518 = vmatprep.subr.mxu0 0.0
    %1519 = vmatpush2.msra.mxu0 0.0
    %1520 = vmatprep.subr.mxu0 0.0
    %1521 = vmatpush2.msra.mxu0 0.0
    %1522 = vmatprep.subr.mxu0 0.0
    %1523 = vmatpush2.msra.mxu0 0.0
    %1524 = vmatprep.subr.mxu0 0.0
    %1525 = vmatpush2.msra.mxu0 0.0
    %1526 = vmatprep.subr.mxu0 0.0
    %1527 = vmatpush2.msra.mxu0 0.0
    %1528 = vmatprep.subr.mxu0 0.0
    %1529 = vmatpush2.msra.mxu0 0.0
    %1530 = vmatprep.subr.mxu0 0.0
    %1531 = vmatpush2.msra.mxu0 0.0
    %1532 = vmatprep.subr.mxu0 0.0
    %1533 = vmatpush2.msra.mxu0 0.0
    %1534 = vmatprep.subr.mxu0 0.0
    %1535 = vmatpush2.msra.mxu0 0.0
    %1536 = vmatprep.subr.mxu0 0.0
    %1537 = vmatpush2.msra.mxu0 0.0
    %1538 = vmatprep.subr.mxu0 0.0
    %1539 = vmatpush2.msra.mxu0 0.0
    %1540 = vmatprep.subr.mxu0 0.0
    %1541 = vmatpush2.msra.mxu0 0.0
    %1542 = vmatprep.subr.mxu0 0.0
    %1543 = vmatpush2.msra.mxu0 0.0
    %1544 = vmatprep.mubr.f32.mxu0 0.0
    %1545 = vmatmul.mubr.f32.gmra.mxu0 %v1466
    %v1546 = vpop.f32.mrf.mxu0
    %v1547 = vadd.f32 %v1464, %v1546
    %v1548 = vpop.f32.mrf.mxu0
    %1549 = vmatprep.mubr.f32.mxu0 0.0
    %1550 = vmatmul.mubr.f32.gmra.mxu0 %v1469
    %v1551 = vpop.f32.mrf.mxu0
    %v1552 = vadd.f32 %v1464, %v1551
    %v1553 = vpop.f32.mrf.mxu0
    %1554 = vmatprep.mubr.f32.mxu0 0.0
    %1555 = vmatmul.mubr.f32.gmra.mxu0 %v1472
    %v1556 = vpop.f32.mrf.mxu0
    %v1557 = vadd.f32 %v1464, %v1556
    %v1558 = vpop.f32.mrf.mxu0
    %1559 = vmatprep.mubr.f32.mxu0 0.0
    %1560 = vmatmul.mubr.f32.gmra.mxu0 %v1475
    %v1561 = vpop.f32.mrf.mxu0
    %v1562 = vadd.f32 %v1464, %v1561
    %v1563 = vpop.f32.mrf.mxu0
    %1564 = vdwg.mxu0
    %v1565 = vmax.f32 %v1547, 0.0
    %v1566 = vmax.f32 %v1552, 0.0
    %v1567 = vmax.f32 %v1557, 0.0
    %v1568 = vmax.f32 %v1562, 0.0
    %v1569 = vld [vmem:[%s7 + $0x4] sm:$0x1]
    %v1570 = vld [vmem:[%s8 + $0x4] sm:$0x1]
    %v1571 = vsel %vm406, %v1565, 0.0
    %v1572 = vsel %vm406, %v1566, 0.0
    %v1573 = vadd.f32 %v1571, %v1572
    %v1574 = vsel %vm406, %v1567, 0.0
    %v1575 = vadd.f32 %v1573, %v1574
    %v1576 = vsel %vm406, %v1568, 0.0
    %v1577 = vadd.f32 %v1575, %v1576
    %v1578 = vrot.slane %v1577, 4
    %v1579 = vadd.f32 %v1577, %v1578
    %v1580 = vrot.slane %v1579, 2
    %v1581 = vadd.f32 %v1579, %v1580
    %v1582 = vrot.slane %v1581, 1
    %v1583 = vadd.f32 %v1581, %v1582
    %v1584 = vmul.f32 %v1583, %v290
    %v1585 = vsub.f32 %v1565, %v1584
    %v1586 = vsub.f32 %v1566, %v1584
    %v1587 = vsub.f32 %v1567, %v1584
    %v1588 = vsub.f32 %v1568, %v1584
    %v1589 = vmul.f32 %v1585, %v1585
    %v1590 = vmul.f32 %v1586, %v1586
    %v1591 = vmul.f32 %v1587, %v1587
    %v1592 = vmul.f32 %v1588, %v1588
    %v1593 = vsel %vm406, %v1589, 0.0
    %v1594 = vsel %vm406, %v1590, 0.0
    %v1595 = vadd.f32 %v1593, %v1594
    %v1596 = vsel %vm406, %v1591, 0.0
    %v1597 = vadd.f32 %v1595, %v1596
    %v1598 = vsel %vm406, %v1592, 0.0
    %v1599 = vadd.f32 %v1597, %v1598
    %v1600 = vrot.slane %v1599, 4
    %v1601 = vadd.f32 %v1599, %v1600
    %v1602 = vrot.slane %v1601, 2
    %v1603 = vadd.f32 %v1601, %v1602
    %v1604 = vrot.slane %v1603, 1
    %v1605 = vadd.f32 %v1603, %v1604
    %v1606 = vmul.f32 %v1605, %v290
    %v1607 = vadd.f32 %v1606, 1e-05
    %v1608 = vrsqrt.pop %v1607
    %v1609 = vmul.f32 %v1585, %v1608
    %v1610 = vmul.f32 %v1586, %v1608
    %v1611 = vmul.f32 %v1587, %v1608
    %v1612 = vmul.f32 %v1588, %v1608
    %v1613 = vlaneseq
    %v1614 = vshrl.u32 %v1613, 7
    %v1615 = vsub.s32 0, %v1614
    %v1616 = vrot.slane %v1569, %v1615
    %v1617 = vmul.f32 %v1609, %v1616
    %v1618 = vmul.f32 %v1610, %v1616
    %v1619 = vmul.f32 %v1611, %v1616
    %v1620 = vmul.f32 %v1612, %v1616
    %v1621 = vlaneseq
    %v1622 = vshrl.u32 %v1621, 7
    %v1623 = vsub.s32 0, %v1622
    %v1624 = vrot.slane %v1570, %v1623
    %v1625 = vadd.f32 %v1617, %v1624
    %v1626 = vadd.f32 %v1618, %v1624
    %v1627 = vadd.f32 %v1619, %v1624
    %v1628 = vadd.f32 %v1620, %v1624
    %1629 = vrot.lane.b32.xlu0 %v336, 108
    %v1630 = vpop.permute.xlu0 %1629
    %1631 = vrot.lane.b32.xlu0 %v337, 108
    %v1632 = vpop.permute.xlu0 %1631
    %1633 = vrot.lane.b32.xlu0 %v338, 108
    %v1634 = vpop.permute.xlu0 %1633
    %1635 = vrot.lane.b32.xlu0 %v339, 108
    %v1636 = vpop.permute.xlu0 %1635
    %v1641 = vadd.f32 %v1625, %v1630
    %v1642 = vadd.f32 %v1626, %v1632
    %v1643 = vadd.f32 %v1627, %v1634
    %v1644 = vadd.f32 %v1628, %v1636
    %v1649 = vrot.slane %v1641, 6
    %v1650 = vrot.slane %v1642, 6
    %v1651 = vsel %vm344, %v1649, %v1650
    %v1652 = vrot.slane %v1643, 6
    %v1653 = vsel %vm344, %v1650, %v1652
    %v1654 = vrot.slane %v1644, 6
    %v1655 = vsel %vm344, %v1652, %v1654
    %v1660 = vsel %vm344, 0.0, %v1649
    %v1661 = vmul.f32 %v1660, %v134
    %v1662 = vmul.f32 %v1651, %v135
    %v1663 = vmul.f32 %v1653, %v136
    %v1664 = vmul.f32 %v1655, %v137
    %v1665 = vrot.slane %v1641, 2
    %v1666 = vrot.slane %v1642, 2
    %v1667 = vsel %vm361, %v1665, %v1666
    %v1668 = vrot.slane %v1643, 2
    %v1669 = vsel %vm361, %v1666, %v1668
    %v1670 = vrot.slane %v1644, 2
    %v1671 = vsel %vm361, %v1668, %v1670
    %v1676 = vsel %vm361, %v1670, 0.0
    %v1677 = vmul.f32 %v1667, %v158
    %v1678 = vmul.f32 %v1669, %v159
    %v1679 = vmul.f32 %v1671, %v160
    %v1680 = vmul.f32 %v1676, %v161
    %1681 = vrot.lane.b32.xlu0 %v1641, 4
    %v1682 = vpop.permute.xlu0 %1681
    %1683 = vrot.lane.b32.xlu0 %v1642, 4
    %v1684 = vpop.permute.xlu0 %1683
    %1685 = vrot.lane.b32.xlu0 %v1643, 4
    %v1686 = vpop.permute.xlu0 %1685
    %1687 = vrot.lane.b32.xlu0 %v1644, 4
    %v1688 = vpop.permute.xlu0 %1687
    %1697 = vrot.lane.b32.xlu0 %v1677, 8
    %v1698 = vpop.permute.xlu0 %1697
    %1699 = vrot.lane.b32.xlu0 %v1678, 8
    %v1700 = vpop.permute.xlu0 %1699
    %1701 = vrot.lane.b32.xlu0 %v1679, 8
    %v1702 = vpop.permute.xlu0 %1701
    %1703 = vrot.lane.b32.xlu0 %v1680, 8
    %v1704 = vpop.permute.xlu0 %1703
    %v1709 = vsel %vm406, %v1661, %v1682
    %v1710 = vsel %vm406, %v1662, %v1684
    %v1711 = vsel %vm406, %v1663, %v1686
    %v1712 = vsel %vm406, %v1664, %v1688
    %v1713 = vsel %vm411, %v1709, %v1698
    %v1714 = vsel %vm411, %v1710, %v1700
    %v1715 = vsel %vm411, %v1711, %v1702
    %v1716 = vsel %vm411, %v1712, %v1704
    %s1717 = scalar_lea.vmem %s5, 80
    %v1718 = vld [vmem:[%s1717] sm:$0xff]
    %v1719 = vld [vmem:[%s1717 + $0x8] sm:$0xf]
    %v1720 = vld [vmem:[%s6 + $0x5] sm:$0x1]
    %v1721 = vlaneseq
    %v1722 = vshrl.u32 %v1721, 7
    %v1723 = vsub.s32 0, %v1722
    %v1724 = vrot.slane %v1720, %v1723
    %v1726 = vsel %vm423, %v1713, 0
    %v1729 = vsel %vm423, %v1714, 0
    %v1732 = vsel %vm423, %v1715, 0
    %v1735 = vsel %vm423, %v1716, 0
    %v1738 = vsel %vm436, %v1719, 0
    %1740 = vmatprep.subr.mxu0 0.0
    %1741 = vmatpush1.msra.mxu0 0.0
    %1742 = vmatprep.subr.mxu0 0.0
    %1743 = vmatpush1.msra.mxu0 0.0
    %1744 = vmatprep.subr.mxu0 0.0
    %1745 = vmatpush1.msra.mxu0 0.0
    %1746 = vmatprep.subr.mxu0 0.0
    %1747 = vmatpush1.msra.mxu0 0.0
    %1748 = vmatprep.subr.mxu0 0.0
    %1749 = vmatpush1.msra.mxu0 0.0
    %1750 = vmatprep.subr.mxu0 0.0
    %1751 = vmatpush1.msra.mxu0 0.0
    %1752 = vmatprep.subr.mxu0 0.0
    %1753 = vmatpush1.msra.mxu0 0.0
    %1754 = vmatprep.subr.mxu0 0.0
    %1755 = vmatpush1.msra.mxu0 0.0
    %1756 = vmatprep.subr.mxu0 0.0
    %1757 = vmatpush1.msra.mxu0 0.0
    %1758 = vmatprep.subr.mxu0 0.0
    %1759 = vmatpush1.msra.mxu0 0.0
    %1760 = vmatprep.subr.mxu0 0.0
    %1761 = vmatpush1.msra.mxu0 0.0
    %1762 = vmatprep.subr.mxu0 0.0
    %1763 = vmatpush1.msra.mxu0 0.0
    %1764 = vmatprep.subr.mxu0 0.0
    %1765 = vmatpush1.msra.mxu0 0.0
    %1766 = vmatprep.subr.mxu0 0.0
    %1767 = vmatpush1.msra.mxu0 0.0
    %1768 = vmatprep.subr.mxu0 0.0
    %1769 = vmatpush1.msra.mxu0 %v1738
    %1770 = vmatprep.subr.mxu0 0.0
    %1771 = vmatpush1.msra.mxu0 %v1718
    %1772 = vmatprep.subr.mxu0 0.0
    %1773 = vmatpush2.msra.mxu0 0.0
    %1774 = vmatprep.subr.mxu0 0.0
    %1775 = vmatpush2.msra.mxu0 0.0
    %1776 = vmatprep.subr.mxu0 0.0
    %1777 = vmatpush2.msra.mxu0 0.0
    %1778 = vmatprep.subr.mxu0 0.0
    %1779 = vmatpush2.msra.mxu0 0.0
    %1780 = vmatprep.subr.mxu0 0.0
    %1781 = vmatpush2.msra.mxu0 0.0
    %1782 = vmatprep.subr.mxu0 0.0
    %1783 = vmatpush2.msra.mxu0 0.0
    %1784 = vmatprep.subr.mxu0 0.0
    %1785 = vmatpush2.msra.mxu0 0.0
    %1786 = vmatprep.subr.mxu0 0.0
    %1787 = vmatpush2.msra.mxu0 0.0
    %1788 = vmatprep.subr.mxu0 0.0
    %1789 = vmatpush2.msra.mxu0 0.0
    %1790 = vmatprep.subr.mxu0 0.0
    %1791 = vmatpush2.msra.mxu0 0.0
    %1792 = vmatprep.subr.mxu0 0.0
    %1793 = vmatpush2.msra.mxu0 0.0
    %1794 = vmatprep.subr.mxu0 0.0
    %1795 = vmatpush2.msra.mxu0 0.0
    %1796 = vmatprep.subr.mxu0 0.0
    %1797 = vmatpush2.msra.mxu0 0.0
    %1798 = vmatprep.subr.mxu0 0.0
    %1799 = vmatpush2.msra.mxu0 0.0
    %1800 = vmatprep.subr.mxu0 0.0
    %1801 = vmatpush2.msra.mxu0 0.0
    %1802 = vmatprep.subr.mxu0 0.0
    %1803 = vmatpush2.msra.mxu0 0.0
    %1804 = vmatprep.mubr.f32.mxu0 0.0
    %1805 = vmatmul.mubr.f32.gmra.mxu0 %v1726
    %v1806 = vpop.f32.mrf.mxu0
    %v1807 = vadd.f32 %v1724, %v1806
    %v1808 = vpop.f32.mrf.mxu0
    %1809 = vmatprep.mubr.f32.mxu0 0.0
    %1810 = vmatmul.mubr.f32.gmra.mxu0 %v1729
    %v1811 = vpop.f32.mrf.mxu0
    %v1812 = vadd.f32 %v1724, %v1811
    %v1813 = vpop.f32.mrf.mxu0
    %1814 = vmatprep.mubr.f32.mxu0 0.0
    %1815 = vmatmul.mubr.f32.gmra.mxu0 %v1732
    %v1816 = vpop.f32.mrf.mxu0
    %v1817 = vadd.f32 %v1724, %v1816
    %v1818 = vpop.f32.mrf.mxu0
    %1819 = vmatprep.mubr.f32.mxu0 0.0
    %1820 = vmatmul.mubr.f32.gmra.mxu0 %v1735
    %v1821 = vpop.f32.mrf.mxu0
    %v1822 = vadd.f32 %v1724, %v1821
    %v1823 = vpop.f32.mrf.mxu0
    %1824 = vdwg.mxu0
    %v1825 = vmax.f32 %v1807, 0.0
    %v1826 = vmax.f32 %v1812, 0.0
    %v1827 = vmax.f32 %v1817, 0.0
    %v1828 = vmax.f32 %v1822, 0.0
    %v1829 = vld [vmem:[%s7 + $0x5] sm:$0x1]
    %v1830 = vld [vmem:[%s8 + $0x5] sm:$0x1]
    %v1831 = vsel %vm406, %v1825, 0.0
    %v1832 = vsel %vm406, %v1826, 0.0
    %v1833 = vadd.f32 %v1831, %v1832
    %v1834 = vsel %vm406, %v1827, 0.0
    %v1835 = vadd.f32 %v1833, %v1834
    %v1836 = vsel %vm406, %v1828, 0.0
    %v1837 = vadd.f32 %v1835, %v1836
    %v1838 = vrot.slane %v1837, 4
    %v1839 = vadd.f32 %v1837, %v1838
    %v1840 = vrot.slane %v1839, 2
    %v1841 = vadd.f32 %v1839, %v1840
    %v1842 = vrot.slane %v1841, 1
    %v1843 = vadd.f32 %v1841, %v1842
    %v1844 = vmul.f32 %v1843, %v290
    %v1845 = vsub.f32 %v1825, %v1844
    %v1846 = vsub.f32 %v1826, %v1844
    %v1847 = vsub.f32 %v1827, %v1844
    %v1848 = vsub.f32 %v1828, %v1844
    %v1849 = vmul.f32 %v1845, %v1845
    %v1850 = vmul.f32 %v1846, %v1846
    %v1851 = vmul.f32 %v1847, %v1847
    %v1852 = vmul.f32 %v1848, %v1848
    %v1853 = vsel %vm406, %v1849, 0.0
    %v1854 = vsel %vm406, %v1850, 0.0
    %v1855 = vadd.f32 %v1853, %v1854
    %v1856 = vsel %vm406, %v1851, 0.0
    %v1857 = vadd.f32 %v1855, %v1856
    %v1858 = vsel %vm406, %v1852, 0.0
    %v1859 = vadd.f32 %v1857, %v1858
    %v1860 = vrot.slane %v1859, 4
    %v1861 = vadd.f32 %v1859, %v1860
    %v1862 = vrot.slane %v1861, 2
    %v1863 = vadd.f32 %v1861, %v1862
    %v1864 = vrot.slane %v1863, 1
    %v1865 = vadd.f32 %v1863, %v1864
    %v1866 = vmul.f32 %v1865, %v290
    %v1867 = vadd.f32 %v1866, 1e-05
    %v1868 = vrsqrt.pop %v1867
    %v1869 = vmul.f32 %v1845, %v1868
    %v1870 = vmul.f32 %v1846, %v1868
    %v1871 = vmul.f32 %v1847, %v1868
    %v1872 = vmul.f32 %v1848, %v1868
    %v1873 = vlaneseq
    %v1874 = vshrl.u32 %v1873, 7
    %v1875 = vsub.s32 0, %v1874
    %v1876 = vrot.slane %v1829, %v1875
    %v1877 = vmul.f32 %v1869, %v1876
    %v1878 = vmul.f32 %v1870, %v1876
    %v1879 = vmul.f32 %v1871, %v1876
    %v1880 = vmul.f32 %v1872, %v1876
    %v1881 = vlaneseq
    %v1882 = vshrl.u32 %v1881, 7
    %v1883 = vsub.s32 0, %v1882
    %v1884 = vrot.slane %v1830, %v1883
    %v1885 = vadd.f32 %v1877, %v1884
    %v1886 = vadd.f32 %v1878, %v1884
    %v1887 = vadd.f32 %v1879, %v1884
    %v1888 = vadd.f32 %v1880, %v1884
    %1889 = vrot.lane.b32.xlu0 %v336, 104
    %v1890 = vpop.permute.xlu0 %1889
    %1891 = vrot.lane.b32.xlu0 %v337, 104
    %v1892 = vpop.permute.xlu0 %1891
    %1893 = vrot.lane.b32.xlu0 %v338, 104
    %v1894 = vpop.permute.xlu0 %1893
    %1895 = vrot.lane.b32.xlu0 %v339, 104
    %v1896 = vpop.permute.xlu0 %1895
    %v1901 = vadd.f32 %v1885, %v1890
    %v1902 = vadd.f32 %v1886, %v1892
    %v1903 = vadd.f32 %v1887, %v1894
    %v1904 = vadd.f32 %v1888, %v1896
    %v1909 = vrot.slane %v1901, 6
    %v1910 = vrot.slane %v1902, 6
    %v1911 = vsel %vm344, %v1909, %v1910
    %v1912 = vrot.slane %v1903, 6
    %v1913 = vsel %vm344, %v1910, %v1912
    %v1914 = vrot.slane %v1904, 6
    %v1915 = vsel %vm344, %v1912, %v1914
    %v1920 = vsel %vm344, 0.0, %v1909
    %v1921 = vmul.f32 %v1920, %v134
    %v1922 = vmul.f32 %v1911, %v135
    %v1923 = vmul.f32 %v1913, %v136
    %v1924 = vmul.f32 %v1915, %v137
    %v1925 = vrot.slane %v1901, 2
    %v1926 = vrot.slane %v1902, 2
    %v1927 = vsel %vm361, %v1925, %v1926
    %v1928 = vrot.slane %v1903, 2
    %v1929 = vsel %vm361, %v1926, %v1928
    %v1930 = vrot.slane %v1904, 2
    %v1931 = vsel %vm361, %v1928, %v1930
    %v1936 = vsel %vm361, %v1930, 0.0
    %v1937 = vmul.f32 %v1927, %v158
    %v1938 = vmul.f32 %v1929, %v159
    %v1939 = vmul.f32 %v1931, %v160
    %v1940 = vmul.f32 %v1936, %v161
    %1941 = vrot.lane.b32.xlu0 %v1901, 4
    %v1942 = vpop.permute.xlu0 %1941
    %1943 = vrot.lane.b32.xlu0 %v1902, 4
    %v1944 = vpop.permute.xlu0 %1943
    %1945 = vrot.lane.b32.xlu0 %v1903, 4
    %v1946 = vpop.permute.xlu0 %1945
    %1947 = vrot.lane.b32.xlu0 %v1904, 4
    %v1948 = vpop.permute.xlu0 %1947
    %1957 = vrot.lane.b32.xlu0 %v1937, 8
    %v1958 = vpop.permute.xlu0 %1957
    %1959 = vrot.lane.b32.xlu0 %v1938, 8
    %v1960 = vpop.permute.xlu0 %1959
    %1961 = vrot.lane.b32.xlu0 %v1939, 8
    %v1962 = vpop.permute.xlu0 %1961
    %1963 = vrot.lane.b32.xlu0 %v1940, 8
    %v1964 = vpop.permute.xlu0 %1963
    %v1969 = vsel %vm406, %v1921, %v1942
    %v1970 = vsel %vm406, %v1922, %v1944
    %v1971 = vsel %vm406, %v1923, %v1946
    %v1972 = vsel %vm406, %v1924, %v1948
    %v1973 = vsel %vm411, %v1969, %v1958
    %v1974 = vsel %vm411, %v1970, %v1960
    %v1975 = vsel %vm411, %v1971, %v1962
    %v1976 = vsel %vm411, %v1972, %v1964
    %s1977 = scalar_lea.vmem %s5, 96
    %v1978 = vld [vmem:[%s1977] sm:$0xff]
    %v1979 = vld [vmem:[%s1977 + $0x8] sm:$0xf]
    %v1980 = vld [vmem:[%s6 + $0x6] sm:$0x1]
    %v1981 = vlaneseq
    %v1982 = vshrl.u32 %v1981, 7
    %v1983 = vsub.s32 0, %v1982
    %v1984 = vrot.slane %v1980, %v1983
    %v1986 = vsel %vm423, %v1973, 0
    %v1989 = vsel %vm423, %v1974, 0
    %v1992 = vsel %vm423, %v1975, 0
    %v1995 = vsel %vm423, %v1976, 0
    %v1998 = vsel %vm436, %v1979, 0
    %2000 = vmatprep.subr.mxu0 0.0
    %2001 = vmatpush1.msra.mxu0 0.0
    %2002 = vmatprep.subr.mxu0 0.0
    %2003 = vmatpush1.msra.mxu0 0.0
    %2004 = vmatprep.subr.mxu0 0.0
    %2005 = vmatpush1.msra.mxu0 0.0
    %2006 = vmatprep.subr.mxu0 0.0
    %2007 = vmatpush1.msra.mxu0 0.0
    %2008 = vmatprep.subr.mxu0 0.0
    %2009 = vmatpush1.msra.mxu0 0.0
    %2010 = vmatprep.subr.mxu0 0.0
    %2011 = vmatpush1.msra.mxu0 0.0
    %2012 = vmatprep.subr.mxu0 0.0
    %2013 = vmatpush1.msra.mxu0 0.0
    %2014 = vmatprep.subr.mxu0 0.0
    %2015 = vmatpush1.msra.mxu0 0.0
    %2016 = vmatprep.subr.mxu0 0.0
    %2017 = vmatpush1.msra.mxu0 0.0
    %2018 = vmatprep.subr.mxu0 0.0
    %2019 = vmatpush1.msra.mxu0 0.0
    %2020 = vmatprep.subr.mxu0 0.0
    %2021 = vmatpush1.msra.mxu0 0.0
    %2022 = vmatprep.subr.mxu0 0.0
    %2023 = vmatpush1.msra.mxu0 0.0
    %2024 = vmatprep.subr.mxu0 0.0
    %2025 = vmatpush1.msra.mxu0 0.0
    %2026 = vmatprep.subr.mxu0 0.0
    %2027 = vmatpush1.msra.mxu0 0.0
    %2028 = vmatprep.subr.mxu0 0.0
    %2029 = vmatpush1.msra.mxu0 %v1998
    %2030 = vmatprep.subr.mxu0 0.0
    %2031 = vmatpush1.msra.mxu0 %v1978
    %2032 = vmatprep.subr.mxu0 0.0
    %2033 = vmatpush2.msra.mxu0 0.0
    %2034 = vmatprep.subr.mxu0 0.0
    %2035 = vmatpush2.msra.mxu0 0.0
    %2036 = vmatprep.subr.mxu0 0.0
    %2037 = vmatpush2.msra.mxu0 0.0
    %2038 = vmatprep.subr.mxu0 0.0
    %2039 = vmatpush2.msra.mxu0 0.0
    %2040 = vmatprep.subr.mxu0 0.0
    %2041 = vmatpush2.msra.mxu0 0.0
    %2042 = vmatprep.subr.mxu0 0.0
    %2043 = vmatpush2.msra.mxu0 0.0
    %2044 = vmatprep.subr.mxu0 0.0
    %2045 = vmatpush2.msra.mxu0 0.0
    %2046 = vmatprep.subr.mxu0 0.0
    %2047 = vmatpush2.msra.mxu0 0.0
    %2048 = vmatprep.subr.mxu0 0.0
    %2049 = vmatpush2.msra.mxu0 0.0
    %2050 = vmatprep.subr.mxu0 0.0
    %2051 = vmatpush2.msra.mxu0 0.0
    %2052 = vmatprep.subr.mxu0 0.0
    %2053 = vmatpush2.msra.mxu0 0.0
    %2054 = vmatprep.subr.mxu0 0.0
    %2055 = vmatpush2.msra.mxu0 0.0
    %2056 = vmatprep.subr.mxu0 0.0
    %2057 = vmatpush2.msra.mxu0 0.0
    %2058 = vmatprep.subr.mxu0 0.0
    %2059 = vmatpush2.msra.mxu0 0.0
    %2060 = vmatprep.subr.mxu0 0.0
    %2061 = vmatpush2.msra.mxu0 0.0
    %2062 = vmatprep.subr.mxu0 0.0
    %2063 = vmatpush2.msra.mxu0 0.0
    %2064 = vmatprep.mubr.f32.mxu0 0.0
    %2065 = vmatmul.mubr.f32.gmra.mxu0 %v1986
    %v2066 = vpop.f32.mrf.mxu0
    %v2067 = vadd.f32 %v1984, %v2066
    %v2068 = vpop.f32.mrf.mxu0
    %2069 = vmatprep.mubr.f32.mxu0 0.0
    %2070 = vmatmul.mubr.f32.gmra.mxu0 %v1989
    %v2071 = vpop.f32.mrf.mxu0
    %v2072 = vadd.f32 %v1984, %v2071
    %v2073 = vpop.f32.mrf.mxu0
    %2074 = vmatprep.mubr.f32.mxu0 0.0
    %2075 = vmatmul.mubr.f32.gmra.mxu0 %v1992
    %v2076 = vpop.f32.mrf.mxu0
    %v2077 = vadd.f32 %v1984, %v2076
    %v2078 = vpop.f32.mrf.mxu0
    %2079 = vmatprep.mubr.f32.mxu0 0.0
    %2080 = vmatmul.mubr.f32.gmra.mxu0 %v1995
    %v2081 = vpop.f32.mrf.mxu0
    %v2082 = vadd.f32 %v1984, %v2081
    %v2083 = vpop.f32.mrf.mxu0
    %2084 = vdwg.mxu0
    %v2085 = vmax.f32 %v2067, 0.0
    %v2086 = vmax.f32 %v2072, 0.0
    %v2087 = vmax.f32 %v2077, 0.0
    %v2088 = vmax.f32 %v2082, 0.0
    %v2089 = vld [vmem:[%s7 + $0x6] sm:$0x1]
    %v2090 = vld [vmem:[%s8 + $0x6] sm:$0x1]
    %v2091 = vsel %vm406, %v2085, 0.0
    %v2092 = vsel %vm406, %v2086, 0.0
    %v2093 = vadd.f32 %v2091, %v2092
    %v2094 = vsel %vm406, %v2087, 0.0
    %v2095 = vadd.f32 %v2093, %v2094
    %v2096 = vsel %vm406, %v2088, 0.0
    %v2097 = vadd.f32 %v2095, %v2096
    %v2098 = vrot.slane %v2097, 4
    %v2099 = vadd.f32 %v2097, %v2098
    %v2100 = vrot.slane %v2099, 2
    %v2101 = vadd.f32 %v2099, %v2100
    %v2102 = vrot.slane %v2101, 1
    %v2103 = vadd.f32 %v2101, %v2102
    %v2104 = vmul.f32 %v2103, %v290
    %v2105 = vsub.f32 %v2085, %v2104
    %v2106 = vsub.f32 %v2086, %v2104
    %v2107 = vsub.f32 %v2087, %v2104
    %v2108 = vsub.f32 %v2088, %v2104
    %v2109 = vmul.f32 %v2105, %v2105
    %v2110 = vmul.f32 %v2106, %v2106
    %v2111 = vmul.f32 %v2107, %v2107
    %v2112 = vmul.f32 %v2108, %v2108
    %v2113 = vsel %vm406, %v2109, 0.0
    %v2114 = vsel %vm406, %v2110, 0.0
    %v2115 = vadd.f32 %v2113, %v2114
    %v2116 = vsel %vm406, %v2111, 0.0
    %v2117 = vadd.f32 %v2115, %v2116
    %v2118 = vsel %vm406, %v2112, 0.0
    %v2119 = vadd.f32 %v2117, %v2118
    %v2120 = vrot.slane %v2119, 4
    %v2121 = vadd.f32 %v2119, %v2120
    %v2122 = vrot.slane %v2121, 2
    %v2123 = vadd.f32 %v2121, %v2122
    %v2124 = vrot.slane %v2123, 1
    %v2125 = vadd.f32 %v2123, %v2124
    %v2126 = vmul.f32 %v2125, %v290
    %v2127 = vadd.f32 %v2126, 1e-05
    %v2128 = vrsqrt.pop %v2127
    %v2129 = vmul.f32 %v2105, %v2128
    %v2130 = vmul.f32 %v2106, %v2128
    %v2131 = vmul.f32 %v2107, %v2128
    %v2132 = vmul.f32 %v2108, %v2128
    %v2133 = vlaneseq
    %v2134 = vshrl.u32 %v2133, 7
    %v2135 = vsub.s32 0, %v2134
    %v2136 = vrot.slane %v2089, %v2135
    %v2137 = vmul.f32 %v2129, %v2136
    %v2138 = vmul.f32 %v2130, %v2136
    %v2139 = vmul.f32 %v2131, %v2136
    %v2140 = vmul.f32 %v2132, %v2136
    %v2141 = vlaneseq
    %v2142 = vshrl.u32 %v2141, 7
    %v2143 = vsub.s32 0, %v2142
    %v2144 = vrot.slane %v2090, %v2143
    %v2145 = vadd.f32 %v2137, %v2144
    %v2146 = vadd.f32 %v2138, %v2144
    %v2147 = vadd.f32 %v2139, %v2144
    %v2148 = vadd.f32 %v2140, %v2144
    %2153 = vrot.lane.b32.xlu0 %v845, 4
    %v2154 = vpop.permute.xlu0 %2153
    %2155 = vrot.lane.b32.xlu0 %v846, 4
    %v2156 = vpop.permute.xlu0 %2155
    %2157 = vrot.lane.b32.xlu0 %v847, 4
    %v2158 = vpop.permute.xlu0 %2157
    %2159 = vrot.lane.b32.xlu0 %v848, 4
    %v2160 = vpop.permute.xlu0 %2159
    %2169 = vrot.lane.b32.xlu0 %v1105, 8
    %v2170 = vpop.permute.xlu0 %2169
    %2171 = vrot.lane.b32.xlu0 %v1106, 8
    %v2172 = vpop.permute.xlu0 %2171
    %2173 = vrot.lane.b32.xlu0 %v1107, 8
    %v2174 = vpop.permute.xlu0 %2173
    %2175 = vrot.lane.b32.xlu0 %v1108, 8
    %v2176 = vpop.permute.xlu0 %2175
    %2185 = vrot.lane.b32.xlu0 %v1365, 12
    %v2186 = vpop.permute.xlu0 %2185
    %2187 = vrot.lane.b32.xlu0 %v1366, 12
    %v2188 = vpop.permute.xlu0 %2187
    %2189 = vrot.lane.b32.xlu0 %v1367, 12
    %v2190 = vpop.permute.xlu0 %2189
    %2191 = vrot.lane.b32.xlu0 %v1368, 12
    %v2192 = vpop.permute.xlu0 %2191
    %2201 = vrot.lane.b32.xlu0 %v1625, 16
    %v2202 = vpop.permute.xlu0 %2201
    %2203 = vrot.lane.b32.xlu0 %v1626, 16
    %v2204 = vpop.permute.xlu0 %2203
    %2205 = vrot.lane.b32.xlu0 %v1627, 16
    %v2206 = vpop.permute.xlu0 %2205
    %2207 = vrot.lane.b32.xlu0 %v1628, 16
    %v2208 = vpop.permute.xlu0 %2207
    %2217 = vrot.lane.b32.xlu0 %v1885, 20
    %v2218 = vpop.permute.xlu0 %2217
    %2219 = vrot.lane.b32.xlu0 %v1886, 20
    %v2220 = vpop.permute.xlu0 %2219
    %2221 = vrot.lane.b32.xlu0 %v1887, 20
    %v2222 = vpop.permute.xlu0 %2221
    %2223 = vrot.lane.b32.xlu0 %v1888, 20
    %v2224 = vpop.permute.xlu0 %2223
    %2233 = vrot.lane.b32.xlu0 %v2145, 24
    %v2234 = vpop.permute.xlu0 %2233
    %2235 = vrot.lane.b32.xlu0 %v2146, 24
    %v2236 = vpop.permute.xlu0 %2235
    %2237 = vrot.lane.b32.xlu0 %v2147, 24
    %v2238 = vpop.permute.xlu0 %2237
    %2239 = vrot.lane.b32.xlu0 %v2148, 24
    %v2240 = vpop.permute.xlu0 %2239
    %v2245 = vsel %vm406, %v585, %v2154
    %v2246 = vsel %vm406, %v586, %v2156
    %v2247 = vsel %vm406, %v587, %v2158
    %v2248 = vsel %vm406, %v588, %v2160
    %v2249 = vsel %vm411, %v2245, %v2170
    %v2250 = vsel %vm411, %v2246, %v2172
    %v2251 = vsel %vm411, %v2247, %v2174
    %v2252 = vsel %vm411, %v2248, %v2176
    %v2253 = vsel %vm423, %v2249, %v2186
    %v2254 = vsel %vm423, %v2250, %v2188
    %v2255 = vsel %vm423, %v2251, %v2190
    %v2256 = vsel %vm423, %v2252, %v2192
    %vm2257 = vcmask 130048
    %v2258 = vsel %vm2257, %v2253, %v2202
    %v2259 = vsel %vm2257, %v2254, %v2204
    %v2260 = vsel %vm2257, %v2255, %v2206
    %v2261 = vsel %vm2257, %v2256, %v2208
    %vm2262 = vcmask 162816
    %v2263 = vsel %vm2262, %v2258, %v2218
    %v2264 = vsel %vm2262, %v2259, %v2220
    %v2265 = vsel %vm2262, %v2260, %v2222
    %v2266 = vsel %vm2262, %v2261, %v2224
    %vm2267 = vcmask 195584
    %v2268 = vsel %vm2267, %v2263, %v2234
    %v2269 = vsel %vm2267, %v2264, %v2236
    %v2270 = vsel %vm2267, %v2265, %v2238
    %v2271 = vsel %vm2267, %v2266, %v2240
    %vm2272 = vcmask 228352
    %v2273 = vsel %vm2272, %v2268, %v336
    %v2274 = vsel %vm2272, %v2269, %v337
    %v2275 = vsel %vm2272, %v2270, %v338
    %v2276 = vsel %vm2272, %v2271, %v339
    %v2277 = vld [vmem:[%s9] sm:$0xff]
    %v2278 = vld [vmem:[%s9 + $0x8] sm:$0xff]
    %v2279 = vld [vmem:[%s9 + $0x10] sm:$0xff]
    %v2280 = vld [vmem:[%s9 + $0x18] sm:$0xff]
    %v2281 = vld [vmem:[%s10] sm:$0x1]
    %v2283 = vlaneseq
    %v2284 = vshrl.u32 %v2283, 7
    %v2285 = vsub.s32 0, %v2284
    %v2286 = vrot.slane %v2281, %v2285
    %v2289 = vsel %vm173, %v2273, 0
    %v2292 = vsel %vm173, %v2274, 0
    %v2295 = vsel %vm173, %v2275, 0
    %v2298 = vsel %vm173, %v2276, 0
    %2300 = vmatprep.subr.mxu0 0.0
    %2301 = vmatpush1.msra.mxu0 0.0
    %2302 = vmatprep.subr.mxu0 0.0
    %2303 = vmatpush1.msra.mxu0 0.0
    %2304 = vmatprep.subr.mxu0 0.0
    %2305 = vmatpush1.msra.mxu0 0.0
    %2306 = vmatprep.subr.mxu0 0.0
    %2307 = vmatpush1.msra.mxu0 0.0
    %2308 = vmatprep.subr.mxu0 0.0
    %2309 = vmatpush1.msra.mxu0 0.0
    %2310 = vmatprep.subr.mxu0 0.0
    %2311 = vmatpush1.msra.mxu0 0.0
    %2312 = vmatprep.subr.mxu0 0.0
    %2313 = vmatpush1.msra.mxu0 0.0
    %2314 = vmatprep.subr.mxu0 0.0
    %2315 = vmatpush1.msra.mxu0 0.0
    %2316 = vmatprep.subr.mxu0 0.0
    %2317 = vmatpush1.msra.mxu0 0.0
    %2318 = vmatprep.subr.mxu0 0.0
    %2319 = vmatpush1.msra.mxu0 0.0
    %2320 = vmatprep.subr.mxu0 0.0
    %2321 = vmatpush1.msra.mxu0 0.0
    %2322 = vmatprep.subr.mxu0 0.0
    %2323 = vmatpush1.msra.mxu0 0.0
    %2324 = vmatprep.subr.mxu0 0.0
    %2325 = vmatpush1.msra.mxu0 %v2280
    %2326 = vmatprep.subr.mxu0 0.0
    %2327 = vmatpush1.msra.mxu0 %v2279
    %2328 = vmatprep.subr.mxu0 0.0
    %2329 = vmatpush1.msra.mxu0 %v2278
    %2330 = vmatprep.subr.mxu0 0.0
    %2331 = vmatpush1.msra.mxu0 %v2277
    %2332 = vmatprep.subr.mxu0 0.0
    %2333 = vmatpush2.msra.mxu0 0.0
    %2334 = vmatprep.subr.mxu0 0.0
    %2335 = vmatpush2.msra.mxu0 0.0
    %2336 = vmatprep.subr.mxu0 0.0
    %2337 = vmatpush2.msra.mxu0 0.0
    %2338 = vmatprep.subr.mxu0 0.0
    %2339 = vmatpush2.msra.mxu0 0.0
    %2340 = vmatprep.subr.mxu0 0.0
    %2341 = vmatpush2.msra.mxu0 0.0
    %2342 = vmatprep.subr.mxu0 0.0
    %2343 = vmatpush2.msra.mxu0 0.0
    %2344 = vmatprep.subr.mxu0 0.0
    %2345 = vmatpush2.msra.mxu0 0.0
    %2346 = vmatprep.subr.mxu0 0.0
    %2347 = vmatpush2.msra.mxu0 0.0
    %2348 = vmatprep.subr.mxu0 0.0
    %2349 = vmatpush2.msra.mxu0 0.0
    %2350 = vmatprep.subr.mxu0 0.0
    %2351 = vmatpush2.msra.mxu0 0.0
    %2352 = vmatprep.subr.mxu0 0.0
    %2353 = vmatpush2.msra.mxu0 0.0
    %2354 = vmatprep.subr.mxu0 0.0
    %2355 = vmatpush2.msra.mxu0 0.0
    %2356 = vmatprep.subr.mxu0 0.0
    %2357 = vmatpush2.msra.mxu0 0.0
    %2358 = vmatprep.subr.mxu0 0.0
    %2359 = vmatpush2.msra.mxu0 0.0
    %2360 = vmatprep.subr.mxu0 0.0
    %2361 = vmatpush2.msra.mxu0 0.0
    %2362 = vmatprep.subr.mxu0 0.0
    %2363 = vmatpush2.msra.mxu0 0.0
    %2364 = vmatprep.mubr.f32.mxu0 0.0
    %2365 = vmatmul.mubr.f32.gmra.mxu0 %v2289
    %v2366 = vpop.f32.mrf.mxu0
    %v2367 = vadd.f32 %v2286, %v2366
    %v2368 = vpop.f32.mrf.mxu0
    %2369 = vmatprep.mubr.f32.mxu0 0.0
    %2370 = vmatmul.mubr.f32.gmra.mxu0 %v2292
    %v2371 = vpop.f32.mrf.mxu0
    %v2372 = vadd.f32 %v2286, %v2371
    %v2373 = vpop.f32.mrf.mxu0
    %2374 = vmatprep.mubr.f32.mxu0 0.0
    %2375 = vmatmul.mubr.f32.gmra.mxu0 %v2295
    %v2376 = vpop.f32.mrf.mxu0
    %v2377 = vadd.f32 %v2286, %v2376
    %v2378 = vpop.f32.mrf.mxu0
    %2379 = vmatprep.mubr.f32.mxu0 0.0
    %2380 = vmatmul.mubr.f32.gmra.mxu0 %v2298
    %v2381 = vpop.f32.mrf.mxu0
    %v2382 = vadd.f32 %v2286, %v2381
    %v2383 = vpop.f32.mrf.mxu0
    %2384 = vdwg.mxu0
    %v2385 = vmax.f32 %v2367, 0.0
    %v2386 = vmax.f32 %v2372, 0.0
    %v2387 = vmax.f32 %v2377, 0.0
    %v2388 = vmax.f32 %v2382, 0.0
    %v2389 = vld [vmem:[%s11] sm:$0x1]
    %v2390 = vld [vmem:[%s12] sm:$0x1]
    %v2391 = vsel %vm173, %v2385, 0.0
    %v2392 = vsel %vm173, %v2386, 0.0
    %v2393 = vadd.f32 %v2391, %v2392
    %v2394 = vsel %vm173, %v2387, 0.0
    %v2395 = vadd.f32 %v2393, %v2394
    %v2396 = vsel %vm173, %v2388, 0.0
    %v2397 = vadd.f32 %v2395, %v2396
    %v2398 = vrot.slane %v2397, 4
    %v2399 = vadd.f32 %v2397, %v2398
    %v2400 = vrot.slane %v2399, 2
    %v2401 = vadd.f32 %v2399, %v2400
    %v2402 = vrot.slane %v2401, 1
    %v2403 = vadd.f32 %v2401, %v2402
    %v2404 = vmul.f32 %v2403, %v290
    %v2405 = vsub.f32 %v2385, %v2404
    %v2406 = vsub.f32 %v2386, %v2404
    %v2407 = vsub.f32 %v2387, %v2404
    %v2408 = vsub.f32 %v2388, %v2404
    %v2409 = vmul.f32 %v2405, %v2405
    %v2410 = vmul.f32 %v2406, %v2406
    %v2411 = vmul.f32 %v2407, %v2407
    %v2412 = vmul.f32 %v2408, %v2408
    %v2413 = vsel %vm173, %v2409, 0.0
    %v2414 = vsel %vm173, %v2410, 0.0
    %v2415 = vadd.f32 %v2413, %v2414
    %v2416 = vsel %vm173, %v2411, 0.0
    %v2417 = vadd.f32 %v2415, %v2416
    %v2418 = vsel %vm173, %v2412, 0.0
    %v2419 = vadd.f32 %v2417, %v2418
    %v2420 = vrot.slane %v2419, 4
    %v2421 = vadd.f32 %v2419, %v2420
    %v2422 = vrot.slane %v2421, 2
    %v2423 = vadd.f32 %v2421, %v2422
    %v2424 = vrot.slane %v2423, 1
    %v2425 = vadd.f32 %v2423, %v2424
    %v2426 = vmul.f32 %v2425, %v290
    %v2427 = vadd.f32 %v2426, 1e-05
    %v2428 = vrsqrt.pop %v2427
    %v2429 = vmul.f32 %v2405, %v2428
    %v2430 = vmul.f32 %v2406, %v2428
    %v2431 = vmul.f32 %v2407, %v2428
    %v2432 = vmul.f32 %v2408, %v2428
    %v2434 = vlaneseq
    %v2435 = vshrl.u32 %v2434, 7
    %v2436 = vsub.s32 0, %v2435
    %v2437 = vrot.slane %v2389, %v2436
    %v2439 = vmul.f32 %v2429, %v2437
    %v2440 = vmul.f32 %v2430, %v2437
    %v2441 = vmul.f32 %v2431, %v2437
    %v2442 = vmul.f32 %v2432, %v2437
    %v2444 = vlaneseq
    %v2445 = vshrl.u32 %v2444, 7
    %v2446 = vsub.s32 0, %v2445
    %v2447 = vrot.slane %v2390, %v2446
    %v2449 = vadd.f32 %v2439, %v2447
    %v2450 = vadd.f32 %v2440, %v2447
    %v2451 = vadd.f32 %v2441, %v2447
    %v2452 = vadd.f32 %v2442, %v2447
    %v2453 = vsel %vm173, %v2449, 0.0
    %v2454 = vsel %vm173, %v2450, 0.0
    %v2455 = vadd.f32 %v2453, %v2454
    %v2456 = vrot.slane %v2455, 4
    %v2457 = vadd.f32 %v2455, %v2456
    %v2458 = vrot.slane %v2457, 2
    %v2459 = vadd.f32 %v2457, %v2458
    %v2460 = vrot.slane %v2459, 1
    %v2461 = vadd.f32 %v2459, %v2460
    %v2462 = vrcp.pop 16.0
    %v2463 = vmul.f32 %v2461, %v2462
    %v2464 = vsel %vm173, %v2451, 0.0
    %v2465 = vsel %vm173, %v2452, 0.0
    %v2466 = vadd.f32 %v2464, %v2465
    %v2467 = vrot.slane %v2466, 4
    %v2468 = vadd.f32 %v2466, %v2467
    %v2469 = vrot.slane %v2468, 2
    %v2470 = vadd.f32 %v2468, %v2469
    %v2471 = vrot.slane %v2470, 1
    %v2472 = vadd.f32 %v2470, %v2471
    %v2473 = vmul.f32 %v2472, %v2462
    %vm2474 = vcmask 1040384
    %v2475 = vsel %vm2474, %v2463, %v2473
    %v2476 = vld [vmem:[%s13] sm:$0xff]
    %v2477 = vld [vmem:[%s13 + $0x8] sm:$0xff]
    %v2478 = vld [vmem:[%s13 + $0x10] sm:$0xff]
    %v2479 = vld [vmem:[%s13 + $0x18] sm:$0xff]
    %v2480 = vld [vmem:[%s14] sm:$0x1]
    %v2482 = vlaneseq
    %v2483 = vshrl.u32 %v2482, 7
    %v2484 = vsub.s32 0, %v2483
    %v2485 = vrot.slane %v2480, %v2484
    %v2488 = vsel %vm173, %v2475, 0
    %2490 = vmatprep.subr.mxu0 0.0
    %2491 = vmatpush1.msra.mxu0 0.0
    %2492 = vmatprep.subr.mxu0 0.0
    %2493 = vmatpush1.msra.mxu0 0.0
    %2494 = vmatprep.subr.mxu0 0.0
    %2495 = vmatpush1.msra.mxu0 0.0
    %2496 = vmatprep.subr.mxu0 0.0
    %2497 = vmatpush1.msra.mxu0 0.0
    %2498 = vmatprep.subr.mxu0 0.0
    %2499 = vmatpush1.msra.mxu0 0.0
    %2500 = vmatprep.subr.mxu0 0.0
    %2501 = vmatpush1.msra.mxu0 0.0
    %2502 = vmatprep.subr.mxu0 0.0
    %2503 = vmatpush1.msra.mxu0 0.0
    %2504 = vmatprep.subr.mxu0 0.0
    %2505 = vmatpush1.msra.mxu0 0.0
    %2506 = vmatprep.subr.mxu0 0.0
    %2507 = vmatpush1.msra.mxu0 0.0
    %2508 = vmatprep.subr.mxu0 0.0
    %2509 = vmatpush1.msra.mxu0 0.0
    %2510 = vmatprep.subr.mxu0 0.0
    %2511 = vmatpush1.msra.mxu0 0.0
    %2512 = vmatprep.subr.mxu0 0.0
    %2513 = vmatpush1.msra.mxu0 0.0
    %2514 = vmatprep.subr.mxu0 0.0
    %2515 = vmatpush1.msra.mxu0 %v2479
    %2516 = vmatprep.subr.mxu0 0.0
    %2517 = vmatpush1.msra.mxu0 %v2478
    %2518 = vmatprep.subr.mxu0 0.0
    %2519 = vmatpush1.msra.mxu0 %v2477
    %2520 = vmatprep.subr.mxu0 0.0
    %2521 = vmatpush1.msra.mxu0 %v2476
    %2522 = vmatprep.subr.mxu0 0.0
    %2523 = vmatpush2.msra.mxu0 0.0
    %2524 = vmatprep.subr.mxu0 0.0
    %2525 = vmatpush2.msra.mxu0 0.0
    %2526 = vmatprep.subr.mxu0 0.0
    %2527 = vmatpush2.msra.mxu0 0.0
    %2528 = vmatprep.subr.mxu0 0.0
    %2529 = vmatpush2.msra.mxu0 0.0
    %2530 = vmatprep.subr.mxu0 0.0
    %2531 = vmatpush2.msra.mxu0 0.0
    %2532 = vmatprep.subr.mxu0 0.0
    %2533 = vmatpush2.msra.mxu0 0.0
    %2534 = vmatprep.subr.mxu0 0.0
    %2535 = vmatpush2.msra.mxu0 0.0
    %2536 = vmatprep.subr.mxu0 0.0
    %2537 = vmatpush2.msra.mxu0 0.0
    %2538 = vmatprep.subr.mxu0 0.0
    %2539 = vmatpush2.msra.mxu0 0.0
    %2540 = vmatprep.subr.mxu0 0.0
    %2541 = vmatpush2.msra.mxu0 0.0
    %2542 = vmatprep.subr.mxu0 0.0
    %2543 = vmatpush2.msra.mxu0 0.0
    %2544 = vmatprep.subr.mxu0 0.0
    %2545 = vmatpush2.msra.mxu0 0.0
    %2546 = vmatprep.subr.mxu0 0.0
    %2547 = vmatpush2.msra.mxu0 0.0
    %2548 = vmatprep.subr.mxu0 0.0
    %2549 = vmatpush2.msra.mxu0 0.0
    %2550 = vmatprep.subr.mxu0 0.0
    %2551 = vmatpush2.msra.mxu0 0.0
    %2552 = vmatprep.subr.mxu0 0.0
    %2553 = vmatpush2.msra.mxu0 0.0
    %2554 = vmatprep.mubr.f32.mxu0 0.0
    %2555 = vmatmul.mubr.f32.gmra.mxu0 %v2488
    %v2556 = vpop.f32.mrf.mxu0
    %v2557 = vadd.f32 %v2485, %v2556
    %v2558 = vpop.f32.mrf.mxu0
    %2559 = vdwg.mxu0
    %v2560 = vmax.f32 %v2557, 0.0
    %v2561 = vld [vmem:[%s15] sm:$0xff]
    %v2562 = vld [vmem:[%s15 + $0x8] sm:$0xff]
    %v2563 = vld [vmem:[%s15 + $0x10] sm:$0xff]
    %v2564 = vld [vmem:[%s15 + $0x18] sm:$0xff]
    %v2565 = vld [vmem:[%s15 + $0x20] sm:$0xff]
    %v2566 = vld [vmem:[%s15 + $0x28] sm:$0xff]
    %v2567 = vld [vmem:[%s15 + $0x30] sm:$0xff]
    %v2568 = vld [vmem:[%s15 + $0x38] sm:$0xff]
    %v2569 = vld [vmem:[%s15 + $0x40] sm:$0xff]
    %v2570 = vld [vmem:[%s15 + $0x48] sm:$0xff]
    %v2571 = vld [vmem:[%s15 + $0x50] sm:$0xff]
    %v2572 = vld [vmem:[%s15 + $0x58] sm:$0xff]
    %v2573 = vld [vmem:[%s15 + $0x60] sm:$0xff]
    %v2574 = vld [vmem:[%s15 + $0x68] sm:$0xff]
    %v2575 = vld [vmem:[%s15 + $0x70] sm:$0xff]
    %v2576 = vld [vmem:[%s15 + $0x78] sm:$0xff]
    %v2577 = vld [vmem:[%s16] sm:$0x1]
    %v2579 = vlaneseq
    %v2580 = vshrl.u32 %v2579, 7
    %v2581 = vsub.s32 0, %v2580
    %v2582 = vrot.slane %v2577, %v2581
    %2584 = vmatprep.subr.mxu0 0.0
    %2585 = vmatpush1.msra.mxu0 %v2576
    %2586 = vmatprep.subr.mxu0 0.0
    %2587 = vmatpush1.msra.mxu0 %v2575
    %2588 = vmatprep.subr.mxu0 0.0
    %2589 = vmatpush1.msra.mxu0 %v2574
    %2590 = vmatprep.subr.mxu0 0.0
    %2591 = vmatpush1.msra.mxu0 %v2573
    %2592 = vmatprep.subr.mxu0 0.0
    %2593 = vmatpush1.msra.mxu0 %v2572
    %2594 = vmatprep.subr.mxu0 0.0
    %2595 = vmatpush1.msra.mxu0 %v2571
    %2596 = vmatprep.subr.mxu0 0.0
    %2597 = vmatpush1.msra.mxu0 %v2570
    %2598 = vmatprep.subr.mxu0 0.0
    %2599 = vmatpush1.msra.mxu0 %v2569
    %2600 = vmatprep.subr.mxu0 0.0
    %2601 = vmatpush1.msra.mxu0 %v2568
    %2602 = vmatprep.subr.mxu0 0.0
    %2603 = vmatpush1.msra.mxu0 %v2567
    %2604 = vmatprep.subr.mxu0 0.0
    %2605 = vmatpush1.msra.mxu0 %v2566
    %2606 = vmatprep.subr.mxu0 0.0
    %2607 = vmatpush1.msra.mxu0 %v2565
    %2608 = vmatprep.subr.mxu0 0.0
    %2609 = vmatpush1.msra.mxu0 %v2564
    %2610 = vmatprep.subr.mxu0 0.0
    %2611 = vmatpush1.msra.mxu0 %v2563
    %2612 = vmatprep.subr.mxu0 0.0
    %2613 = vmatpush1.msra.mxu0 %v2562
    %2614 = vmatprep.subr.mxu0 0.0
    %2615 = vmatpush1.msra.mxu0 %v2561
    %2616 = vmatprep.subr.mxu0 0.0
    %2617 = vmatpush2.msra.mxu0 0.0
    %2618 = vmatprep.subr.mxu0 0.0
    %2619 = vmatpush2.msra.mxu0 0.0
    %2620 = vmatprep.subr.mxu0 0.0
    %2621 = vmatpush2.msra.mxu0 0.0
    %2622 = vmatprep.subr.mxu0 0.0
    %2623 = vmatpush2.msra.mxu0 0.0
    %2624 = vmatprep.subr.mxu0 0.0
    %2625 = vmatpush2.msra.mxu0 0.0
    %2626 = vmatprep.subr.mxu0 0.0
    %2627 = vmatpush2.msra.mxu0 0.0
    %2628 = vmatprep.subr.mxu0 0.0
    %2629 = vmatpush2.msra.mxu0 0.0
    %2630 = vmatprep.subr.mxu0 0.0
    %2631 = vmatpush2.msra.mxu0 0.0
    %2632 = vmatprep.subr.mxu0 0.0
    %2633 = vmatpush2.msra.mxu0 0.0
    %2634 = vmatprep.subr.mxu0 0.0
    %2635 = vmatpush2.msra.mxu0 0.0
    %2636 = vmatprep.subr.mxu0 0.0
    %2637 = vmatpush2.msra.mxu0 0.0
    %2638 = vmatprep.subr.mxu0 0.0
    %2639 = vmatpush2.msra.mxu0 0.0
    %2640 = vmatprep.subr.mxu0 0.0
    %2641 = vmatpush2.msra.mxu0 0.0
    %2642 = vmatprep.subr.mxu0 0.0
    %2643 = vmatpush2.msra.mxu0 0.0
    %2644 = vmatprep.subr.mxu0 0.0
    %2645 = vmatpush2.msra.mxu0 0.0
    %2646 = vmatprep.subr.mxu0 0.0
    %2647 = vmatpush2.msra.mxu0 0.0
    %2648 = vmatprep.mubr.f32.mxu0 0.0
    %2649 = vmatmul.mubr.f32.gmra.mxu0 %v2560
    %v2650 = vpop.f32.mrf.mxu0
    %v2651 = vadd.f32 %v2582, %v2650
    %v2652 = vpop.f32.mrf.mxu0
    %2653 = vdwg.mxu0
    %v2654 = vxor.u32 %v2651, 2147483648
    %v2655 = vmul.f32 %v2654, 1.442695
    %v2656 = vpow.pop %v2655
    %v2657 = vadd.f32 %v2656, 1.0
    %v2658 = vrcp.pop %v2657
    %v2659 = vmul.f32 1.0, %v2658
    %v2660 = vlaneseq
    %v2661 = vshrl.u32 %v2660, 7
    %v2662 = vsub.s32 0, %v2661
    %v2663 = vrot.slane %v2659, %v2662
    %v2664 = vlaneseq
    %v2665 = vshrl.u32 %v2664, 7
    %v2666 = vsub.s32 1, %v2665
    %v2667 = vrot.slane %v2659, %v2666
    %v2668 = vmul.f32 %v2449, %v2663
    %v2669 = vmul.f32 %v2450, %v2663
    %v2670 = vmul.f32 %v2451, %v2667
    %v2671 = vmul.f32 %v2452, %v2667
    %v2672 = vadd.f32 %v2668, %v57
    %v2673 = vadd.f32 %v2669, %v58
    %v2674 = vadd.f32 %v2670, %v59
    %v2675 = vadd.f32 %v2671, %v60
    %v2676 = vsel %vm173, %v2672, 0.0
    %v2677 = vsel %vm173, %v2673, 0.0
    %v2678 = vsel %vm173, %v2674, 0.0
    %v2679 = vsel %vm173, %v2675, 0.0
    %2680 = vst [vmem:[#allocation2] sm:$0xff] %v2676
    %2681 = vst [vmem:[#allocation2 + $0x8] sm:$0xff] %v2677
    %2682 = vst [vmem:[#allocation2 + $0x10] sm:$0xff] %v2678
    %2683 = vst [vmem:[#allocation2 + $0x18] sm:$0xff] %v2679
    // Predicated region
    $region70: #{tpu_custom_call.1} parent=1 // pred_check
      _
    $region71: #{tpu_custom_call.1} parent=1 // pred_check_branch
      %2685 = sbr.rel (0) target = $region73
    $region72: #{tpu_custom_call.1} parent=1 // pred_region
      %s2687 = ssub.s32 512, 512
      %2688 = vsyncadd [#allocation3], %s2687
      %s2689 = sshll.u32 [#allocation2], 4
      %s2690 = int_to_ptr.vmem [resolvable:$true] %s2689
      %2695 = dma.vmem_to_hbm [thread:$0]  %s2690, 512, %s17, [#allocation3], 128, 128, 8
    $region73: #{tpu_custom_call.1} parent=1 // pred_fallthru
      _
    // Predicated region
    $region74: #{tpu_custom_call.1} parent=1 // pred_check
      _
    $region75: #{tpu_custom_call.1} parent=1 // pred_check_branch
      %2697 = sbr.rel (0) target = $region77
    $region76: #{tpu_custom_call.1} parent=1 // pred_region
      %2698 = dma.done [#allocation3], 512
    $region77: #{tpu_custom_call.1} parent=1 // pred_fallthru
      _
    %2699 = vsyncpa [#allocation3], 1

</llo_original>
